<compile_context>
chip_gen: v5e
topology: v5e:2x2
jax: 0.10.0
libtpu: 0.0.40
codegen_flags: <defaults>
</compile_context>

<pallas_src>
import math

import jax
import jax.numpy as jnp
from jax import lax
from jax.experimental import pallas as pl
from jax.experimental.pallas import tpu as pltpu


_NEG_LARGE = -1e30          # finite "-inf" (avoids inf-inf NaNs in online softmax)
_VMEM_LIMIT = 48 * 1024 * 1024   # ceiling only; fits v5e/v6e (128 MiB) and v7x (64 MiB)


def _round_up(x, m):
    return ((x + m - 1) // m) * m


# ---------------------------------------------------------------------------
# Kernel 1: fused Q / K / V 1x1x1-conv projections.
#   Token blocks are (1, T, Cp) channels-last; weights come in pre-transposed
#   (Cp_in, Cp_out) so no transpose runs inside the kernel.  K and V share a
#   single concatenated (Cp, 2Cp) weight -> one MXU dot for both.  The
#   attention scale is already folded into wq/bq by the wrapper.  Math in f32,
#   outputs stored bf16 (halves HBM traffic into the attention kernel).
# ---------------------------------------------------------------------------
def _make_proj_kernel(cp):
    def kernel(src_ref, tgt_ref, wq_ref, bq_ref, wkv_ref, bkv_ref,
               q_ref, k_ref, v_ref):
        xs = src_ref[0]          # (T, Cp) f32
        xt = tgt_ref[0]          # (T, Cp) f32
        q = jnp.dot(xs, wq_ref[...], preferred_element_type=jnp.float32) + bq_ref[...]
        kv = jnp.dot(xt, wkv_ref[...], preferred_element_type=jnp.float32) + bkv_ref[...]
        q_ref[0] = q.astype(q_ref.dtype)
        k_ref[0] = kv[:, :cp].astype(k_ref.dtype)     # lane-aligned split (cp % 128 == 0)
        v_ref[0] = kv[:, cp:].astype(v_ref.dtype)
    return kernel


# ---------------------------------------------------------------------------
# Kernel 2: flash-style cross attention + output 1x1x1-conv projection.
#   grid = (B, num_q_tiles, num_kv_tiles); kv innermost / 'arbitrary'.
#   Running max/sum and a (tq, Cp) accumulator live in VMEM scratch.
# ---------------------------------------------------------------------------
def _make_attn_kernel(n_tokens, tk, mask_kv):
    def kernel(q_ref, k_ref, v_ref, wo_ref, bo_ref, out_ref,
               m_sc, l_sc, acc_sc):
        ki = pl.program_id(2)

        @pl.when(ki == 0)
        def _init():
            m_sc[...] = jnp.full_like(m_sc, _NEG_LARGE)
            l_sc[...] = jnp.zeros_like(l_sc)
            acc_sc[...] = jnp.zeros_like(acc_sc)

        q = q_ref[0]                           # (tq, Cp) bf16 (already scaled)
        k = k_ref[0]                           # (tk, Cp) bf16
        v = v_ref[0]                           # (tk, Cp) bf16

        # scores: contract the channel dim of both operands (no in-kernel transpose)
        s = lax.dot_general(q, k, (((1,), (1,)), ((), ())),
                            preferred_element_type=jnp.float32)    # (tq, tk) f32
        if mask_kv:   # static flag: only traced when kv tokens were padded
            col = ki * tk + lax.broadcasted_iota(jnp.int32, s.shape, 1)
            s = jnp.where(col < n_tokens, s, _NEG_LARGE)

        # online softmax (f32 math)
        m_prev = m_sc[...]
        m_new = jnp.maximum(m_prev, jnp.max(s, axis=-1, keepdims=True))
        alpha = jnp.exp(m_prev - m_new)                             # EUP
        p = jnp.exp(s - m_new)                                      # EUP
        l_sc[...] = alpha * l_sc[...] + jnp.sum(p, axis=-1, keepdims=True)
        acc_sc[...] = alpha * acc_sc[...] + jnp.dot(
            p.astype(v.dtype), v, preferred_element_type=jnp.float32)
        m_sc[...] = m_new

        @pl.when(ki == pl.num_programs(2) - 1)
        def _finalize():
            inv = pl.reciprocal(l_sc[...], approx=True)             # EUP slot, not VALU
            w = acc_sc[...] * inv                                   # (tq, Cp) f32
            out = jnp.dot(w, wo_ref[...],
                          preferred_element_type=jnp.float32) + bo_ref[...]
            out_ref[0] = out.astype(out_ref.dtype)

    return kernel


def cross_attention_3d(source, target, params, *, token_tile=256):
    """source, target: (B, C, D, H, W) float32. Returns (B, C, D, H, W) float32."""
    B, C, D, H, W = source.shape
    N = D * H * W

    # ---- layout glue: NCDHW -> channels-last tokens, lane/sublane-dense padding
    Cp = _round_up(max(C, 128), 128)              # lane-dense channel dim
    T = min(token_tile, _round_up(N, 16))         # token tile (bf16 sublane aligned)
    Np = _round_up(N, T)
    n_tiles = Np // T

    def to_tokens(x):
        t = jnp.transpose(x.reshape(B, C, N), (0, 2, 1))            # (B, N, C)
        return jnp.pad(t, ((0, 0), (0, Np - N), (0, Cp - C)))

    src = to_tokens(source)
    tgt = to_tokens(target)

    wq, bq, wk, bk, wv, bv, wo, bo = params
    scale = 1.0 / math.sqrt(C)                    # scaling_factor = key.size(1) ** 0.5

    def pad_w(w):                                 # (out, in) -> transposed (Cp_in, Cp_out)
        return jnp.pad(w.T, ((0, Cp - C), (0, Cp - C)))

    def pad_b(b):                                 # (1, C) -> (1, Cp)
        return jnp.pad(b, ((0, 0), (0, Cp - C)))

    wq_t = pad_w(wq) * scale                      # fold 1/sqrt(C) into Q projection
    bq_p = pad_b(bq) * scale
    wkv_t = jnp.concatenate([pad_w(wk), pad_w(wv)], axis=1)   # (Cp, 2Cp)
    bkv_p = jnp.concatenate([pad_b(bk), pad_b(bv)], axis=1)   # (1, 2Cp)
    wo_t, bo_p = pad_w(wo), pad_b(bo)

    # ---------------- projection kernel ----------------
    tok_spec2 = pl.BlockSpec((1, T, Cp), lambda b, t: (b, t, 0))
    wq_spec = pl.BlockSpec((Cp, Cp), lambda b, t: (0, 0))
    bq_spec = pl.BlockSpec((1, Cp), lambda b, t: (0, 0))
    wkv_spec = pl.BlockSpec((Cp, 2 * Cp), lambda b, t: (0, 0))
    bkv_spec = pl.BlockSpec((1, 2 * Cp), lambda b, t: (0, 0))

    q, k, v = pl.pallas_call(
        _make_proj_kernel(Cp),
        out_shape=tuple(jax.ShapeDtypeStruct((B, Np, Cp), jnp.bfloat16)
                        for _ in range(3)),
        grid_spec=pltpu.PrefetchScalarGridSpec(
            num_scalar_prefetch=0,
            grid=(B, n_tiles),
            in_specs=[tok_spec2, tok_spec2, wq_spec, bq_spec, wkv_spec, bkv_spec],
            out_specs=(tok_spec2, tok_spec2, tok_spec2),
        ),
        compiler_params=pltpu.CompilerParams(
            dimension_semantics=("parallel", "parallel"),
            vmem_limit_bytes=_VMEM_LIMIT),
    )(src, tgt, wq_t, bq_p, wkv_t, bkv_p)

    # ---------------- flash attention + output projection ----------------
    attn_kernel = _make_attn_kernel(N, T, mask_kv=(Np != N))

    q_spec = pl.BlockSpec((1, T, Cp), lambda b, qi, ki: (b, qi, 0))
    kv_spec = pl.BlockSpec((1, T, Cp), lambda b, qi, ki: (b, ki, 0))
    wo_spec = pl.BlockSpec((Cp, Cp), lambda b, qi, ki: (0, 0))
    bo_spec = pl.BlockSpec((1, Cp), lambda b, qi, ki: (0, 0))
    out_spec = pl.BlockSpec((1, T, Cp), lambda b, qi, ki: (b, qi, 0))

    out_tok = pl.pallas_call(
        attn_kernel,
        out_shape=jax.ShapeDtypeStruct((B, Np, Cp), jnp.float32),
        grid_spec=pltpu.PrefetchScalarGridSpec(
            num_scalar_prefetch=0,
            grid=(B, n_tiles, n_tiles),
            in_specs=[q_spec, kv_spec, kv_spec, wo_spec, bo_spec],
            out_specs=out_spec,
            scratch_shapes=[pltpu.VMEM((T, 1), jnp.float32),    # running max
                            pltpu.VMEM((T, 1), jnp.float32),    # running sum
                            pltpu.VMEM((T, Cp), jnp.float32)],  # output accumulator
        ),
        compiler_params=pltpu.CompilerParams(
            dimension_semantics=("parallel", "parallel", "arbitrary"),
            vmem_limit_bytes=_VMEM_LIMIT),
    )(q, k, v, wo_t, bo_p)

    # ---- glue back: strip padding, (B, N, C) -> NCDHW
    out = out_tok[:, :N, :C]
    return jnp.transpose(out, (0, 2, 1)).reshape(B, C, D, H, W)


def init_params(key, channels):
    """Deterministic init mimicking nn.Conv3d(k=1) defaults (uniform ±1/sqrt(fan_in))."""
    bound = 1.0 / math.sqrt(channels)  # fan_in = C * 1 * 1 * 1
    keys = jax.random.split(key, 8)
    params = []
    for i in range(4):
        w = jax.random.uniform(keys[2 * i], (channels, channels),
                               jnp.float32, -bound, bound)
        b = jax.random.uniform(keys[2 * i + 1], (1, channels),
                               jnp.float32, -bound, bound)
        params += [w, b]
    return tuple(params)


def _reference(source, target, params):
    """Pure-JAX f32 reference of the PyTorch forward, for validation."""
    wq, bq, wk, bk, wv, bv, wo, bo = params
    B, C, D, H, W = source.shape
    N = D * H * W
    xs = source.reshape(B, C, N)   # (B, C, N)
    xt = target.reshape(B, C, N)

    def proj(x, w, b):  # 1x1x1 conv: (B,C,N) channel mixing
        return jnp.einsum('oc,bcn->bon', w, x) + b.reshape(1, C, 1)

    q = proj(xs, wq, bq)
    k = proj(xt, wk, bk)
    v = proj(xt, wv, bv)
    scores = jnp.einsum('bcn,bcm->bnm', q, k) / (C ** 0.5)
    attn = jax.nn.softmax(scores, axis=-1)
    ws = jnp.einsum('bnm,bcm->bcn', attn, v)       # (B, C, N)
    out = proj(ws, wo, bo)
    return out.reshape(B, C, D, H, W)


if __name__ == "__main__":
    # NOTE: num_heads in the original module is never used in forward(); the
    # attention is single-head over all channels, which is what we implement.
    B, C, D, H, W = 2, 4, 8, 8, 8        # N = 512 tokens -> 2x2 q/kv tile grid
    key = jax.random.PRNGKey(0)
    k_src, k_tgt, k_par = jax.random.split(key, 3)

    source = jax.random.normal(k_src, (B, C, D, H, W), jnp.float32)
    target = jax.random.normal(k_tgt, (B, C, D, H, W), jnp.float32)
    params = init_params(k_par, C)

    fn = jax.jit(cross_attention_3d)
    out = jax.block_until_ready(fn(source, target, params))

    ref = _reference(source, target, params)
    assert out.shape == (B, C, D, H, W)
    # bf16 MXU feeds (scores / PV matmuls) + approx reciprocal => relaxed tolerance
    # against the pure-f32 reference.
    assert jnp.allclose(out, ref, atol=5e-2, rtol=5e-2), "mismatch vs reference"

    print("KERNEL_OK")
</pallas_src>

<mosaic_0001>
module attributes {stable_mosaic.version = 11 : i64} {
  func.func @kernel(%arg0: i32, %arg1: i32, %arg2: memref<1x256x128xf32, #tpu.memory_space<vmem>>, %arg3: memref<1x256x128xf32, #tpu.memory_space<vmem>>, %arg4: memref<128x128xf32, #tpu.memory_space<vmem>>, %arg5: memref<1x128xf32, #tpu.memory_space<vmem>>, %arg6: memref<128x256xf32, #tpu.memory_space<vmem>>, %arg7: memref<1x256xf32, #tpu.memory_space<vmem>>, %arg8: memref<1x256x128xbf16, #tpu.memory_space<vmem>>, %arg9: memref<1x256x128xbf16, #tpu.memory_space<vmem>>, %arg10: memref<1x256x128xbf16, #tpu.memory_space<vmem>>) attributes {dimension_semantics = [#tpu.dimension_semantics<parallel>, #tpu.dimension_semantics<parallel>], iteration_bounds = array<i64: 2, 2>, scalar_prefetch = 0 : i64, scratch_operands = 0 : i64, tpu.core_type = #tpu.core_type<tc>, window_params = [{transform_indices = @transform_0, window_bounds = array<i64: 1, 256, 128>}, {transform_indices = @transform_1, window_bounds = array<i64: 1, 256, 128>}, {pipeline_mode = #tpu.pipeline_mode<synchronous>, transform_indices = @transform_2, window_bounds = array<i64: 128, 128>}, {pipeline_mode = #tpu.pipeline_mode<synchronous>, transform_indices = @transform_3, window_bounds = array<i64: 1, 128>}, {pipeline_mode = #tpu.pipeline_mode<synchronous>, transform_indices = @transform_4, window_bounds = array<i64: 128, 256>}, {pipeline_mode = #tpu.pipeline_mode<synchronous>, transform_indices = @transform_5, window_bounds = array<i64: 1, 256>}, {transform_indices = @transform_6, window_bounds = array<i64: 1, 256, 128>}, {transform_indices = @transform_7, window_bounds = array<i64: 1, 256, 128>}, {transform_indices = @transform_8, window_bounds = array<i64: 1, 256, 128>}]} {
    %c0 = arith.constant 0 : index
    %c0_0 = arith.constant 0 : index
    %c0_1 = arith.constant 0 : index
    %0 = vector.load %arg2[%c0, %c0_0, %c0_1] : memref<1x256x128xf32, #tpu.memory_space<vmem>>, vector<1x256x128xf32>
    %1 = vector.shape_cast %0 : vector<1x256x128xf32> to vector<256x128xf32>
    %c0_2 = arith.constant 0 : index
    %c0_3 = arith.constant 0 : index
    %c0_4 = arith.constant 0 : index
    %2 = vector.load %arg3[%c0_2, %c0_3, %c0_4] : memref<1x256x128xf32, #tpu.memory_space<vmem>>, vector<1x256x128xf32>
    %3 = vector.shape_cast %2 : vector<1x256x128xf32> to vector<256x128xf32>
    %c0_5 = arith.constant 0 : index
    %c0_6 = arith.constant 0 : index
    %4 = vector.load %arg4[%c0_5, %c0_6] : memref<128x128xf32, #tpu.memory_space<vmem>>, vector<128x128xf32>
    %cst = arith.constant dense<0.000000e+00> : vector<256x128xf32>
    %5 = tpu.matmul %1, %4, %cst {dimension_numbers = #tpu.dot_dimension_numbers<[1], [0], [0], [1], [0, 0, 1, 1], [], []>} : vector<256x128xf32>, vector<128x128xf32>, vector<256x128xf32> -> vector<256x128xf32>
    %c0_7 = arith.constant 0 : index
    %c0_8 = arith.constant 0 : index
    %6 = vector.load %arg5[%c0_7, %c0_8] : memref<1x128xf32, #tpu.memory_space<vmem>>, vector<1x128xf32>
    %7 = vector.broadcast %6 : vector<1x128xf32> to vector<256x128xf32>
    %8 = arith.addf %5, %7 : vector<256x128xf32>
    %c0_9 = arith.constant 0 : index
    %c0_10 = arith.constant 0 : index
    %9 = vector.load %arg6[%c0_9, %c0_10] : memref<128x256xf32, #tpu.memory_space<vmem>>, vector<128x256xf32>
    %cst_11 = arith.constant dense<0.000000e+00> : vector<256x256xf32>
    %10 = tpu.matmul %3, %9, %cst_11 {dimension_numbers = #tpu.dot_dimension_numbers<[1], [0], [0], [1], [0, 0, 1, 1], [], []>} : vector<256x128xf32>, vector<128x256xf32>, vector<256x256xf32> -> vector<256x256xf32>
    %c0_12 = arith.constant 0 : index
    %c0_13 = arith.constant 0 : index
    %11 = vector.load %arg7[%c0_12, %c0_13] : memref<1x256xf32, #tpu.memory_space<vmem>>, vector<1x256xf32>
    %12 = vector.broadcast %11 : vector<1x256xf32> to vector<256x256xf32>
    %13 = arith.addf %10, %12 : vector<256x256xf32>
    %14 = arith.truncf %8 : vector<256x128xf32> to vector<256x128xbf16>
    %c0_14 = arith.constant 0 : index
    %c0_15 = arith.constant 0 : index
    %c0_16 = arith.constant 0 : index
    %15 = vector.load %arg8[%c0_14, %c0_15, %c0_16] : memref<1x256x128xbf16, #tpu.memory_space<vmem>>, vector<1x256x128xbf16>
    %16 = vector.shape_cast %15 : vector<1x256x128xbf16> to vector<256x128xbf16>
    %17 = vector.shape_cast %14 : vector<256x128xbf16> to vector<1x256x128xbf16>
    tpu.vector_store %arg8[%c0_14, %c0_15, %c0_16], %17 {strides = array<i32>} : memref<1x256x128xbf16, #tpu.memory_space<vmem>>, vector<1x256x128xbf16>,
    %18 = vector.extract_strided_slice %13 {offsets = [0, 0], sizes = [256, 128], strides = [1, 1]} : vector<256x256xf32> to vector<256x128xf32>
    %19 = arith.truncf %18 : vector<256x128xf32> to vector<256x128xbf16>
    %c0_17 = arith.constant 0 : index
    %c0_18 = arith.constant 0 : index
    %c0_19 = arith.constant 0 : index
    %20 = vector.load %arg9[%c0_17, %c0_18, %c0_19] : memref<1x256x128xbf16, #tpu.memory_space<vmem>>, vector<1x256x128xbf16>
    %21 = vector.shape_cast %20 : vector<1x256x128xbf16> to vector<256x128xbf16>
    %22 = vector.shape_cast %19 : vector<256x128xbf16> to vector<1x256x128xbf16>
    tpu.vector_store %arg9[%c0_17, %c0_18, %c0_19], %22 {strides = array<i32>} : memref<1x256x128xbf16, #tpu.memory_space<vmem>>, vector<1x256x128xbf16>,
    %23 = vector.extract_strided_slice %13 {offsets = [0, 128], sizes = [256, 128], strides = [1, 1]} : vector<256x256xf32> to vector<256x128xf32>
    %24 = arith.truncf %23 : vector<256x128xf32> to vector<256x128xbf16>
    %c0_20 = arith.constant 0 : index
    %c0_21 = arith.constant 0 : index
    %c0_22 = arith.constant 0 : index
    %25 = vector.load %arg10[%c0_20, %c0_21, %c0_22] : memref<1x256x128xbf16, #tpu.memory_space<vmem>>, vector<1x256x128xbf16>
    %26 = vector.shape_cast %25 : vector<1x256x128xbf16> to vector<256x128xbf16>
    %27 = vector.shape_cast %24 : vector<256x128xbf16> to vector<1x256x128xbf16>
    tpu.vector_store %arg10[%c0_20, %c0_21, %c0_22], %27 {strides = array<i32>} : memref<1x256x128xbf16, #tpu.memory_space<vmem>>, vector<1x256x128xbf16>,
    return
  }
  func.func @transform_0(%arg0: i32, %arg1: i32) -> (i32, i32, i32) {
    %c0_i32 = arith.constant 0 : i32
    %c0_i32_0 = arith.constant 0 : i32
    return %arg0, %arg1, %c0_i32 : i32, i32, i32
  }
  func.func @transform_1(%arg0: i32, %arg1: i32) -> (i32, i32, i32) {
    %c0_i32 = arith.constant 0 : i32
    %c0_i32_0 = arith.constant 0 : i32
    return %arg0, %arg1, %c0_i32 : i32, i32, i32
  }
  func.func @transform_2(%arg0: i32, %arg1: i32) -> (i32, i32) {
    %c0_i32 = arith.constant 0 : i32
    %c0_i32_0 = arith.constant 0 : i32
    %c0_i32_1 = arith.constant 0 : i32
    return %c0_i32, %c0_i32_0 : i32, i32
  }
  func.func @transform_3(%arg0: i32, %arg1: i32) -> (i32, i32) {
    %c0_i32 = arith.constant 0 : i32
    %c0_i32_0 = arith.constant 0 : i32
    %c0_i32_1 = arith.constant 0 : i32
    return %c0_i32, %c0_i32_0 : i32, i32
  }
  func.func @transform_4(%arg0: i32, %arg1: i32) -> (i32, i32) {
    %c0_i32 = arith.constant 0 : i32
    %c0_i32_0 = arith.constant 0 : i32
    %c0_i32_1 = arith.constant 0 : i32
    return %c0_i32, %c0_i32_0 : i32, i32
  }
  func.func @transform_5(%arg0: i32, %arg1: i32) -> (i32, i32) {
    %c0_i32 = arith.constant 0 : i32
    %c0_i32_0 = arith.constant 0 : i32
    %c0_i32_1 = arith.constant 0 : i32
    return %c0_i32, %c0_i32_0 : i32, i32
  }
  func.func @transform_6(%arg0: i32, %arg1: i32) -> (i32, i32, i32) {
    %c0_i32 = arith.constant 0 : i32
    %c0_i32_0 = arith.constant 0 : i32
    return %arg0, %arg1, %c0_i32 : i32, i32, i32
  }
  func.func @transform_7(%arg0: i32, %arg1: i32) -> (i32, i32, i32) {
    %c0_i32 = arith.constant 0 : i32
    %c0_i32_0 = arith.constant 0 : i32
    return %arg0, %arg1, %c0_i32 : i32, i32, i32
  }
  func.func @transform_8(%arg0: i32, %arg1: i32) -> (i32, i32, i32) {
    %c0_i32 = arith.constant 0 : i32
    %c0_i32_0 = arith.constant 0 : i32
    return %arg0, %arg1, %c0_i32 : i32, i32, i32
  }
}

module attributes {stable_mosaic.version = 11 : i64} {
  func.func @kernel(%arg0: i32, %arg1: i32, %arg2: i32, %arg3: memref<1x256x128xbf16, #tpu.memory_space<vmem>>, %arg4: memref<1x256x128xbf16, #tpu.memory_space<vmem>>, %arg5: memref<1x256x128xbf16, #tpu.memory_space<vmem>>, %arg6: memref<128x128xf32, #tpu.memory_space<vmem>>, %arg7: memref<1x128xf32, #tpu.memory_space<vmem>>, %arg8: memref<1x256x128xf32, #tpu.memory_space<vmem>>, %arg9: memref<256x1xf32, #tpu.memory_space<vmem>>, %arg10: memref<256x1xf32, #tpu.memory_space<vmem>>, %arg11: memref<256x128xf32, #tpu.memory_space<vmem>>) attributes {dimension_semantics = [#tpu.dimension_semantics<parallel>, #tpu.dimension_semantics<parallel>, #tpu.dimension_semantics<arbitrary>], iteration_bounds = array<i64: 2, 2, 2>, scalar_prefetch = 0 : i64, scratch_operands = 3 : i64, tpu.core_type = #tpu.core_type<tc>, window_params = [{transform_indices = @transform_0, window_bounds = array<i64: 1, 256, 128>}, {transform_indices = @transform_1, window_bounds = array<i64: 1, 256, 128>}, {transform_indices = @transform_2, window_bounds = array<i64: 1, 256, 128>}, {pipeline_mode = #tpu.pipeline_mode<synchronous>, transform_indices = @transform_3, window_bounds = array<i64: 128, 128>}, {pipeline_mode = #tpu.pipeline_mode<synchronous>, transform_indices = @transform_4, window_bounds = array<i64: 1, 128>}, {transform_indices = @transform_5, window_bounds = array<i64: 1, 256, 128>}]} {
    %c0_i32 = arith.constant 0 : i32
    %0 = arith.cmpi eq, %arg2, %c0_i32 : i32
    %1 = arith.extui %0 : i1 to i32
    %c0_i32_0 = arith.constant 0 : i32
    %2 = arith.cmpi ne, %1, %c0_i32_0 : i32
    scf.if %2 {
      %cst_25 = arith.constant -1.000000e+30 : f32
      %36 = vector.broadcast %cst_25 : f32 to vector<256x1xf32>
      %c0_26 = arith.constant 0 : index
      %c0_27 = arith.constant 0 : index
      %37 = vector.load %arg9[%c0_26, %c0_27] : memref<256x1xf32, #tpu.memory_space<vmem>>, vector<256x1xf32>
      tpu.vector_store %arg9[%c0_26, %c0_27], %36 {strides = array<i32>} : memref<256x1xf32, #tpu.memory_space<vmem>>, vector<256x1xf32>,
      %cst_28 = arith.constant 0.000000e+00 : f32
      %38 = vector.broadcast %cst_28 : f32 to vector<256x1xf32>
      %c0_29 = arith.constant 0 : index
      %c0_30 = arith.constant 0 : index
      %39 = vector.load %arg10[%c0_29, %c0_30] : memref<256x1xf32, #tpu.memory_space<vmem>>, vector<256x1xf32>
      tpu.vector_store %arg10[%c0_29, %c0_30], %38 {strides = array<i32>} : memref<256x1xf32, #tpu.memory_space<vmem>>, vector<256x1xf32>,
      %cst_31 = arith.constant 0.000000e+00 : f32
      %40 = vector.broadcast %cst_31 : f32 to vector<256x128xf32>
      %c0_32 = arith.constant 0 : index
      %c0_33 = arith.constant 0 : index
      %41 = vector.load %arg11[%c0_32, %c0_33] : memref<256x128xf32, #tpu.memory_space<vmem>>, vector<256x128xf32>
      tpu.vector_store %arg11[%c0_32, %c0_33], %40 {strides = array<i32>} : memref<256x128xf32, #tpu.memory_space<vmem>>, vector<256x128xf32>,
    } else {
    }
    %c0 = arith.constant 0 : index
    %c0_1 = arith.constant 0 : index
    %c0_2 = arith.constant 0 : index
    %3 = vector.load %arg3[%c0, %c0_1, %c0_2] : memref<1x256x128xbf16, #tpu.memory_space<vmem>>, vector<1x256x128xbf16>
    %4 = vector.shape_cast %3 : vector<1x256x128xbf16> to vector<256x128xbf16>
    %c0_3 = arith.constant 0 : index
    %c0_4 = arith.constant 0 : index
    %c0_5 = arith.constant 0 : index
    %5 = vector.load %arg4[%c0_3, %c0_4, %c0_5] : memref<1x256x128xbf16, #tpu.memory_space<vmem>>, vector<1x256x128xbf16>
    %6 = vector.shape_cast %5 : vector<1x256x128xbf16> to vector<256x128xbf16>
    %c0_6 = arith.constant 0 : index
    %c0_7 = arith.constant 0 : index
    %c0_8 = arith.constant 0 : index
    %7 = vector.load %arg5[%c0_6, %c0_7, %c0_8] : memref<1x256x128xbf16, #tpu.memory_space<vmem>>, vector<1x256x128xbf16>
    %8 = vector.shape_cast %7 : vector<1x256x128xbf16> to vector<256x128xbf16>
    %cst = arith.constant dense<0.000000e+00> : vector<256x256xf32>
    %9 = tpu.matmul %4, %6, %cst {dimension_numbers = #tpu.dot_dimension_numbers<[1], [1], [0], [0], [0, 0, 1, 0], [], []>} : vector<256x128xbf16>, vector<256x128xbf16>, vector<256x256xf32> -> vector<256x256xf32>
    %c0_9 = arith.constant 0 : index
    %c0_10 = arith.constant 0 : index
    %10 = vector.load %arg9[%c0_9, %c0_10] : memref<256x1xf32, #tpu.memory_space<vmem>>, vector<256x1xf32>
    %cst_11 = arith.constant dense<0xFF800000> : vector<256xf32>
    %11 = vector.multi_reduction <maximumf>, %9, %cst_11 [1] : vector<256x256xf32> to vector<256xf32>
    %12 = vector.shape_cast %11 : vector<256xf32> to vector<256x1xf32>
    %13 = arith.maximumf %10, %12 : vector<256x1xf32>
    %14 = arith.subf %10, %13 : vector<256x1xf32>
    %15 = math.exp %14 : vector<256x1xf32>
    %16 = vector.broadcast %13 : vector<256x1xf32> to vector<256x256xf32>
    %17 = arith.subf %9, %16 : vector<256x256xf32>
    %18 = math.exp %17 : vector<256x256xf32>
    %c0_12 = arith.constant 0 : index
    %c0_13 = arith.constant 0 : index
    %19 = vector.load %arg10[%c0_12, %c0_13] : memref<256x1xf32, #tpu.memory_space<vmem>>, vector<256x1xf32>
    %20 = arith.mulf %15, %19 : vector<256x1xf32>
    %cst_14 = arith.constant dense<0.000000e+00> : vector<256xf32>
    %21 = vector.multi_reduction <add>, %18, %cst_14 [1] : vector<256x256xf32> to vector<256xf32>
    %22 = vector.shape_cast %21 : vector<256xf32> to vector<256x1xf32>
    %23 = arith.addf %20, %22 : vector<256x1xf32>
    %c0_15 = arith.constant 0 : index
    %c0_16 = arith.constant 0 : index
    %24 = vector.load %arg10[%c0_15, %c0_16] : memref<256x1xf32, #tpu.memory_space<vmem>>, vector<256x1xf32>
    tpu.vector_store %arg10[%c0_15, %c0_16], %23 {strides = array<i32>} : memref<256x1xf32, #tpu.memory_space<vmem>>, vector<256x1xf32>,
    %c0_17 = arith.constant 0 : index
    %c0_18 = arith.constant 0 : index
    %25 = vector.load %arg11[%c0_17, %c0_18] : memref<256x128xf32, #tpu.memory_space<vmem>>, vector<256x128xf32>
    %26 = vector.broadcast %15 : vector<256x1xf32> to vector<256x128xf32>
    %27 = arith.mulf %26, %25 : vector<256x128xf32>
    %28 = arith.truncf %18 : vector<256x256xf32> to vector<256x256xbf16>
    %cst_19 = arith.constant dense<0.000000e+00> : vector<256x128xf32>
    %29 = tpu.matmul %28, %8, %cst_19 {dimension_numbers = #tpu.dot_dimension_numbers<[1], [0], [0], [1], [0, 0, 1, 1], [], []>} : vector<256x256xbf16>, vector<256x128xbf16>, vector<256x128xf32> -> vector<256x128xf32>
    %30 = arith.addf %27, %29 : vector<256x128xf32>
    %c0_20 = arith.constant 0 : index
    %c0_21 = arith.constant 0 : index
    %31 = vector.load %arg11[%c0_20, %c0_21] : memref<256x128xf32, #tpu.memory_space<vmem>>, vector<256x128xf32>
    tpu.vector_store %arg11[%c0_20, %c0_21], %30 {strides = array<i32>} : memref<256x128xf32, #tpu.memory_space<vmem>>, vector<256x128xf32>,
    %c0_22 = arith.constant 0 : index
    %c0_23 = arith.constant 0 : index
    %32 = vector.load %arg9[%c0_22, %c0_23] : memref<256x1xf32, #tpu.memory_space<vmem>>, vector<256x1xf32>
    tpu.vector_store %arg9[%c0_22, %c0_23], %13 {strides = array<i32>} : memref<256x1xf32, #tpu.memory_space<vmem>>, vector<256x1xf32>,
    %c1_i32 = arith.constant 1 : i32
    %33 = arith.cmpi eq, %arg2, %c1_i32 : i32
    %34 = arith.extui %33 : i1 to i32
    %c0_i32_24 = arith.constant 0 : i32
    %35 = arith.cmpi ne, %34, %c0_i32_24 : i32
    scf.if %35 {
      %c0_25 = arith.constant 0 : index
      %c0_26 = arith.constant 0 : index
      %36 = vector.load %arg10[%c0_25, %c0_26] : memref<256x1xf32, #tpu.memory_space<vmem>>, vector<256x1xf32>
      %37 = tpu.reciprocal %36 {approx = true} : vector<256x1xf32> -> vector<256x1xf32>
      %c0_27 = arith.constant 0 : index
      %c0_28 = arith.constant 0 : index
      %38 = vector.load %arg11[%c0_27, %c0_28] : memref<256x128xf32, #tpu.memory_space<vmem>>, vector<256x128xf32>
      %39 = vector.broadcast %37 : vector<256x1xf32> to vector<256x128xf32>
      %40 = arith.mulf %38, %39 : vector<256x128xf32>
      %c0_29 = arith.constant 0 : index
      %c0_30 = arith.constant 0 : index
      %41 = vector.load %arg6[%c0_29, %c0_30] : memref<128x128xf32, #tpu.memory_space<vmem>>, vector<128x128xf32>
      %cst_31 = arith.constant dense<0.000000e+00> : vector<256x128xf32>
      %42 = tpu.matmul %40, %41, %cst_31 {dimension_numbers = #tpu.dot_dimension_numbers<[1], [0], [0], [1], [0, 0, 1, 1], [], []>} : vector<256x128xf32>, vector<128x128xf32>, vector<256x128xf32> -> vector<256x128xf32>
      %c0_32 = arith.constant 0 : index
      %c0_33 = arith.constant 0 : index
      %43 = vector.load %arg7[%c0_32, %c0_33] : memref<1x128xf32, #tpu.memory_space<vmem>>, vector<1x128xf32>
      %44 = vector.broadcast %43 : vector<1x128xf32> to vector<256x128xf32>
      %45 = arith.addf %42, %44 : vector<256x128xf32>
      %c0_34 = arith.constant 0 : index
      %c0_35 = arith.constant 0 : index
      %c0_36 = arith.constant 0 : index
      %46 = vector.load %arg8[%c0_34, %c0_35, %c0_36] : memref<1x256x128xf32, #tpu.memory_space<vmem>>, vector<1x256x128xf32>
      %47 = vector.shape_cast %46 : vector<1x256x128xf32> to vector<256x128xf32>
      %48 = vector.shape_cast %45 : vector<256x128xf32> to vector<1x256x128xf32>
      tpu.vector_store %arg8[%c0_34, %c0_35, %c0_36], %48 {strides = array<i32>} : memref<1x256x128xf32, #tpu.memory_space<vmem>>, vector<1x256x128xf32>,
    } else {
    }
    return
  }
  func.func @transform_0(%arg0: i32, %arg1: i32, %arg2: i32) -> (i32, i32, i32) {
    %c0_i32 = arith.constant 0 : i32
    %c0_i32_0 = arith.constant 0 : i32
    return %arg0, %arg1, %c0_i32 : i32, i32, i32
  }
  func.func @transform_1(%arg0: i32, %arg1: i32, %arg2: i32) -> (i32, i32, i32) {
    %c0_i32 = arith.constant 0 : i32
    %c0_i32_0 = arith.constant 0 : i32
    return %arg0, %arg2, %c0_i32 : i32, i32, i32
  }
  func.func @transform_2(%arg0: i32, %arg1: i32, %arg2: i32) -> (i32, i32, i32) {
    %c0_i32 = arith.constant 0 : i32
    %c0_i32_0 = arith.constant 0 : i32
    return %arg0, %arg2, %c0_i32 : i32, i32, i32
  }
  func.func @transform_3(%arg0: i32, %arg1: i32, %arg2: i32) -> (i32, i32) {
    %c0_i32 = arith.constant 0 : i32
    %c0_i32_0 = arith.constant 0 : i32
    %c0_i32_1 = arith.constant 0 : i32
    return %c0_i32, %c0_i32_0 : i32, i32
  }
  func.func @transform_4(%arg0: i32, %arg1: i32, %arg2: i32) -> (i32, i32) {
    %c0_i32 = arith.constant 0 : i32
    %c0_i32_0 = arith.constant 0 : i32
    %c0_i32_1 = arith.constant 0 : i32
    return %c0_i32, %c0_i32_0 : i32, i32
  }
  func.func @transform_5(%arg0: i32, %arg1: i32, %arg2: i32) -> (i32, i32, i32) {
    %c0_i32 = arith.constant 0 : i32
    %c0_i32_0 = arith.constant 0 : i32
    return %arg0, %arg1, %c0_i32 : i32, i32, i32
  }
}

</mosaic_0001>

<llo_original>
// kernel: cross_attention_3d.2
$region0: #{cross_attention_3d.2}
  #allocation0 [shape = 'u32[]', space=smem, size = 0x4, offset = 0x4, fixed_abs, tag = 'smem constant byte address 0x4 - core index']
  #allocation1 [shape = 'u32[72,128]{1,0:T(1,128)}', space=vmem, size = 0x9000, scoped, tag = 'internal scratch']
  %s0 = inlined_call_operand.vmem [shape: f32[2,512,128], index: 0, kind: input, shape index: {}]
  %s1 = inlined_call_operand.vmem [shape: f32[2,512,128], index: 1, kind: input, shape index: {}]
  %s2 = inlined_call_operand.vmem [shape: f32[128,128], index: 2, kind: input, shape index: {}]
  %s3 = inlined_call_operand.vmem [shape: f32[1,128], index: 3, kind: input, shape index: {}]
  %s4 = inlined_call_operand.vmem [shape: f32[128,256], index: 4, kind: input, shape index: {}]
  %s5 = inlined_call_operand.vmem [shape: f32[1,256], index: 5, kind: input, shape index: {}]
  %s6 = inlined_call_operand.vmem [shape: bf16[2,512,128], index: 6, kind: output, shape index: {0}]
  %s7 = inlined_call_operand.vmem [shape: bf16[2,512,128], index: 7, kind: output, shape index: {1}]
  %s8 = inlined_call_operand.vmem [shape: bf16[2,512,128], index: 8, kind: output, shape index: {2}]
  %9 = xla_tuple %s6, %s7, %s8
  %s10 = sld [smem:[#allocation0]]
  $region73: #{cross_attention_3d.2} parent=0
    _
  %s12 = ssub.s32 1, %s10
  %s13 = scalar_select 0, %s12, %s10
  loop: start=0, step=1, limit=6
  $region2: #{cross_attention_3d.2} parent=0 // loop_pre_header
    _
  $region3: #{cross_attention_3d.2} parent=0 // loop_header
    %s15 = sphi 0, %s19
    %p16 = scmp.ge.s32.totalorder %s15, 6
    %s22 = sphi 0, %s34
    %s23 = sphi 0, %s30
    %s24 = sphi 0, %s22
    %s25 = sphi 0, %s23
    %s26 = sphi 0, %s24
    %s27 = sphi 0, %s25
    %s39 = sphi 0, %s41
    %s42 = sphi 0, %s39
    %s43 = sphi 0, %s42
    %s59 = sphi 0, %s43
    %s67 = sphi 0, %s69
    %s70 = sphi 0, %s67
    %s71 = sphi 0, %s70
    %s87 = sphi 0, %s71
    %s91 = sphi 0, %s91
    %s93 = sphi 0, %s91
    %s94 = sphi 0, %s93
    %s108 = sphi 0, %s94
    %s112 = sphi 0, %s112
    %s114 = sphi 0, %s112
    %s115 = sphi 0, %s114
    %s129 = sphi 0, %s115
    %s133 = sphi 0, %s133
    %s135 = sphi 0, %s133
    %s136 = sphi 0, %s135
    %s150 = sphi 0, %s136
    %s154 = sphi 0, %s154
    %s156 = sphi 0, %s154
    %s157 = sphi 0, %s156
    %s171 = sphi 0, %s157
    %s179 = sphi 0, %s181
    %s182 = sphi 0, %s179
    %s183 = sphi 0, %s182
    %s199 = sphi 0, %s183
    %s207 = sphi 0, %s209
    %s210 = sphi 0, %s207
    %s211 = sphi 0, %s210
    %s227 = sphi 0, %s211
    %s235 = sphi 0, %s237
    %s238 = sphi 0, %s235
    %s239 = sphi 0, %s238
    %s255 = sphi 0, %s239
  $region4: #{cross_attention_3d.2} parent=0 // loop_header_branch
    %18 = sbr.rel (%p16) target = $region8
  $region5: #{cross_attention_3d.2} parent=0 // loop_body
    %s20 = ssub.s32 %s15, 1
    %s21 = ssub.s32 %s15, 2
    %s28 = sadd.s32 1, %s23
    %p29 = scmp.ge.s32.totalorder %s28, 2
    %s30 = scalar_select %p29, 0, %s28
    %s31 = sadd.s32 1, %s22
    %s32 = scalar_select %p29, %s31, %s22
    %p33 = scmp.ge.s32.totalorder %s32, 2
    %s34 = scalar_select %p33, 0, %s32
    %s35 = ssub.s32 %s22, %s34
    %s36 = ssub.s32 %s23, %s30
    %s37 = sor.u32 %s35, %s36
    %p38 = scmp.eq.s32.totalorder %s37, 0
    %s40 = sadd.s32 %s39, 1
    %s41 = scalar_select %p38, %s39, %s40
    %p44 = pneg %p38
    %p45 = scmp.eq.s32.totalorder %s15, 3
    %p46 = por %p44, %p45
    %p47 = scmp.ne.s32.totalorder %s39, %s42
    %p48 = scmp.eq.s32.totalorder %s15, 0
    %p49 = por %p47, %p48
    %p50 = scmp.ne.s32.totalorder %s39, %s42
    %p51 = scmp.eq.s32.totalorder %s20, 3
    %p52 = por %p50, %p51
    %p53 = scmp.ne.s32.totalorder %s42, %s43
    %p54 = scmp.eq.s32.totalorder %s20, 0
    %p55 = por %p53, %p54
    %p56 = scmp.ne.s32.totalorder %s42, %s43
    %p57 = scmp.eq.s32.totalorder %s21, 3
    %p58 = por %p56, %p57
    %p60 = scmp.ne.s32.totalorder %s43, %s59
    %p61 = scmp.eq.s32.totalorder %s21, 0
    %p62 = por %p60, %p61
    %s63 = ssub.s32 %s22, %s34
    %s64 = ssub.s32 %s23, %s30
    %s65 = sor.u32 %s63, %s64
    %p66 = scmp.eq.s32.totalorder %s65, 0
    %s68 = sadd.s32 %s67, 1
    %s69 = scalar_select %p66, %s67, %s68
    %p72 = pneg %p66
    %p73 = scmp.eq.s32.totalorder %s15, 3
    %p74 = por %p72, %p73
    %p75 = scmp.ne.s32.totalorder %s67, %s70
    %p76 = scmp.eq.s32.totalorder %s15, 0
    %p77 = por %p75, %p76
    %p78 = scmp.ne.s32.totalorder %s67, %s70
    %p79 = scmp.eq.s32.totalorder %s20, 3
    %p80 = por %p78, %p79
    %p81 = scmp.ne.s32.totalorder %s70, %s71
    %p82 = scmp.eq.s32.totalorder %s20, 0
    %p83 = por %p81, %p82
    %p84 = scmp.ne.s32.totalorder %s70, %s71
    %p85 = scmp.eq.s32.totalorder %s21, 3
    %p86 = por %p84, %p85
    %p88 = scmp.ne.s32.totalorder %s71, %s87
    %p89 = scmp.eq.s32.totalorder %s21, 0
    %p90 = por %p88, %p89
    %s92 = sadd.s32 %s91, 1
    %p95 = scmp.eq.s32.totalorder %s15, 3
    %p96 = scmp.ne.s32.totalorder %s91, %s93
    %p97 = scmp.eq.s32.totalorder %s15, 0
    %p98 = por %p96, %p97
    %p99 = scmp.ne.s32.totalorder %s91, %s93
    %p100 = scmp.eq.s32.totalorder %s20, 3
    %p101 = por %p99, %p100
    %p102 = scmp.ne.s32.totalorder %s93, %s94
    %p103 = scmp.eq.s32.totalorder %s20, 0
    %p104 = por %p102, %p103
    %p105 = scmp.ne.s32.totalorder %s93, %s94
    %p106 = scmp.eq.s32.totalorder %s21, 3
    %p107 = por %p105, %p106
    %p109 = scmp.ne.s32.totalorder %s94, %s108
    %p110 = scmp.eq.s32.totalorder %s21, 0
    %p111 = por %p109, %p110
    %s113 = sadd.s32 %s112, 1
    %p116 = scmp.eq.s32.totalorder %s15, 3
    %p117 = scmp.ne.s32.totalorder %s112, %s114
    %p118 = scmp.eq.s32.totalorder %s15, 0
    %p119 = por %p117, %p118
    %p120 = scmp.ne.s32.totalorder %s112, %s114
    %p121 = scmp.eq.s32.totalorder %s20, 3
    %p122 = por %p120, %p121
    %p123 = scmp.ne.s32.totalorder %s114, %s115
    %p124 = scmp.eq.s32.totalorder %s20, 0
    %p125 = por %p123, %p124
    %p126 = scmp.ne.s32.totalorder %s114, %s115
    %p127 = scmp.eq.s32.totalorder %s21, 3
    %p128 = por %p126, %p127
    %p130 = scmp.ne.s32.totalorder %s115, %s129
    %p131 = scmp.eq.s32.totalorder %s21, 0
    %p132 = por %p130, %p131
    %s134 = sadd.s32 %s133, 1
    %p137 = scmp.eq.s32.totalorder %s15, 3
    %p138 = scmp.ne.s32.totalorder %s133, %s135
    %p139 = scmp.eq.s32.totalorder %s15, 0
    %p140 = por %p138, %p139
    %p141 = scmp.ne.s32.totalorder %s133, %s135
    %p142 = scmp.eq.s32.totalorder %s20, 3
    %p143 = por %p141, %p142
    %p144 = scmp.ne.s32.totalorder %s135, %s136
    %p145 = scmp.eq.s32.totalorder %s20, 0
    %p146 = por %p144, %p145
    %p147 = scmp.ne.s32.totalorder %s135, %s136
    %p148 = scmp.eq.s32.totalorder %s21, 3
    %p149 = por %p147, %p148
    %p151 = scmp.ne.s32.totalorder %s136, %s150
    %p152 = scmp.eq.s32.totalorder %s21, 0
    %p153 = por %p151, %p152
    %s155 = sadd.s32 %s154, 1
    %p158 = scmp.eq.s32.totalorder %s15, 3
    %p159 = scmp.ne.s32.totalorder %s154, %s156
    %p160 = scmp.eq.s32.totalorder %s15, 0
    %p161 = por %p159, %p160
    %p162 = scmp.ne.s32.totalorder %s154, %s156
    %p163 = scmp.eq.s32.totalorder %s20, 3
    %p164 = por %p162, %p163
    %p165 = scmp.ne.s32.totalorder %s156, %s157
    %p166 = scmp.eq.s32.totalorder %s20, 0
    %p167 = por %p165, %p166
    %p168 = scmp.ne.s32.totalorder %s156, %s157
    %p169 = scmp.eq.s32.totalorder %s21, 3
    %p170 = por %p168, %p169
    %p172 = scmp.ne.s32.totalorder %s157, %s171
    %p173 = scmp.eq.s32.totalorder %s21, 0
    %p174 = por %p172, %p173
    %s175 = ssub.s32 %s22, %s34
    %s176 = ssub.s32 %s23, %s30
    %s177 = sor.u32 %s175, %s176
    %p178 = scmp.eq.s32.totalorder %s177, 0
    %s180 = sadd.s32 %s179, 1
    %s181 = scalar_select %p178, %s179, %s180
    %p184 = pneg %p178
    %p185 = scmp.eq.s32.totalorder %s15, 3
    %p186 = por %p184, %p185
    %p187 = scmp.ne.s32.totalorder %s179, %s182
    %p188 = scmp.eq.s32.totalorder %s15, 0
    %p189 = por %p187, %p188
    %p190 = scmp.ne.s32.totalorder %s179, %s182
    %p191 = scmp.eq.s32.totalorder %s20, 3
    %p192 = por %p190, %p191
    %p193 = scmp.ne.s32.totalorder %s182, %s183
    %p194 = scmp.eq.s32.totalorder %s20, 0
    %p195 = por %p193, %p194
    %p196 = scmp.ne.s32.totalorder %s182, %s183
    %p197 = scmp.eq.s32.totalorder %s21, 3
    %p198 = por %p196, %p197
    %p200 = scmp.ne.s32.totalorder %s183, %s199
    %p201 = scmp.eq.s32.totalorder %s21, 0
    %p202 = por %p200, %p201
    %s203 = ssub.s32 %s22, %s34
    %s204 = ssub.s32 %s23, %s30
    %s205 = sor.u32 %s203, %s204
    %p206 = scmp.eq.s32.totalorder %s205, 0
    %s208 = sadd.s32 %s207, 1
    %s209 = scalar_select %p206, %s207, %s208
    %p212 = pneg %p206
    %p213 = scmp.eq.s32.totalorder %s15, 3
    %p214 = por %p212, %p213
    %p215 = scmp.ne.s32.totalorder %s207, %s210
    %p216 = scmp.eq.s32.totalorder %s15, 0
    %p217 = por %p215, %p216
    %p218 = scmp.ne.s32.totalorder %s207, %s210
    %p219 = scmp.eq.s32.totalorder %s20, 3
    %p220 = por %p218, %p219
    %p221 = scmp.ne.s32.totalorder %s210, %s211
    %p222 = scmp.eq.s32.totalorder %s20, 0
    %p223 = por %p221, %p222
    %p224 = scmp.ne.s32.totalorder %s210, %s211
    %p225 = scmp.eq.s32.totalorder %s21, 3
    %p226 = por %p224, %p225
    %p228 = scmp.ne.s32.totalorder %s211, %s227
    %p229 = scmp.eq.s32.totalorder %s21, 0
    %p230 = por %p228, %p229
    %s231 = ssub.s32 %s22, %s34
    %s232 = ssub.s32 %s23, %s30
    %s233 = sor.u32 %s231, %s232
    %p234 = scmp.eq.s32.totalorder %s233, 0
    %s236 = sadd.s32 %s235, 1
    %s237 = scalar_select %p234, %s235, %s236
    %p240 = pneg %p234
    %p241 = scmp.eq.s32.totalorder %s15, 3
    %p242 = por %p240, %p241
    %p243 = scmp.ne.s32.totalorder %s235, %s238
    %p244 = scmp.eq.s32.totalorder %s15, 0
    %p245 = por %p243, %p244
    %p246 = scmp.ne.s32.totalorder %s235, %s238
    %p247 = scmp.eq.s32.totalorder %s20, 3
    %p248 = por %p246, %p247
    %p249 = scmp.ne.s32.totalorder %s238, %s239
    %p250 = scmp.eq.s32.totalorder %s20, 0
    %p251 = por %p249, %p250
    %p252 = scmp.ne.s32.totalorder %s238, %s239
    %p253 = scmp.eq.s32.totalorder %s21, 3
    %p254 = por %p252, %p253
    %p256 = scmp.ne.s32.totalorder %s239, %s255
    %p257 = scmp.eq.s32.totalorder %s21, 0
    %p258 = por %p256, %p257
    %p259 = scmp.le.s32.totalorder 1, %s15
    %p260 = scmp.lt.s32.totalorder %s15, 5
    %p261 = pnand %p259, %p260
    %p262 = pneg %p261
    // Predicated region
    $region9: #{cross_attention_3d.2} parent=5 // pred_check
      _
    $region10: #{cross_attention_3d.2} parent=5 // pred_check_branch
      %264 = sbr.rel (%p261) target = $region12
    $region11: #{cross_attention_3d.2} parent=5 // pred_region
      %s265 = ssub.s32 %s15, 1
      // Predicated region
      $region13: #{cross_attention_3d.2} parent=11 // pred_check
        %p266 = pneg %p104
      $region14: #{cross_attention_3d.2} parent=11 // pred_check_branch
        %268 = sbr.rel (%p266) target = $region16
      $region15: #{cross_attention_3d.2} parent=11 // pred_region
        _
      $region16: #{cross_attention_3d.2} parent=11 // pred_fallthru
        _
      // Predicated region
      $region17: #{cross_attention_3d.2} parent=11 // pred_check
        %p269 = pneg %p125
      $region18: #{cross_attention_3d.2} parent=11 // pred_check_branch
        %271 = sbr.rel (%p269) target = $region20
      $region19: #{cross_attention_3d.2} parent=11 // pred_region
        _
      $region20: #{cross_attention_3d.2} parent=11 // pred_fallthru
        _
      // Predicated region
      $region21: #{cross_attention_3d.2} parent=11 // pred_check
        %p272 = pneg %p146
      $region22: #{cross_attention_3d.2} parent=11 // pred_check_branch
        %274 = sbr.rel (%p272) target = $region24
      $region23: #{cross_attention_3d.2} parent=11 // pred_region
        _
      $region24: #{cross_attention_3d.2} parent=11 // pred_fallthru
        _
      // Predicated region
      $region25: #{cross_attention_3d.2} parent=11 // pred_check
        %p275 = pneg %p167
      $region26: #{cross_attention_3d.2} parent=11 // pred_check_branch
        %277 = sbr.rel (%p275) target = $region28
      $region27: #{cross_attention_3d.2} parent=11 // pred_region
        _
      $region28: #{cross_attention_3d.2} parent=11 // pred_fallthru
        _
    $region12: #{cross_attention_3d.2} parent=5 // pred_fallthru
      _
    %p278 = scmp.lt.s32.totalorder %s15, 4
    // Predicated region
    $region29: #{cross_attention_3d.2} parent=5 // pred_check
      %p279 = pneg %p278
    $region30: #{cross_attention_3d.2} parent=5 // pred_check_branch
      %281 = sbr.rel (%p279) target = $region32
    $region31: #{cross_attention_3d.2} parent=5 // pred_region
      // Predicated region
      $region33: #{cross_attention_3d.2} parent=31 // pred_check
        %p282 = pneg %p49
      $region34: #{cross_attention_3d.2} parent=31 // pred_check_branch
        %284 = sbr.rel (%p282) target = $region36
      $region35: #{cross_attention_3d.2} parent=31 // pred_region
        %s285 = smul.u32 32, %s23
        %p286 = scmp.lt.s32.totalorder %s22, 1
        %s287 = scalar_select %p286, %s22, 1
        %p288 = scmp.lt.s32.totalorder %s285, 63
        %s289 = scalar_select %p288, %s285, 63
        %s290 = smul.addr %s287, 64
        %s291 = sadd.s32 %s289, %s290
        %s292 = smul.addr %s291, 8
        %s293 = scalar_lea.vmem %s0, %s292
        %s294 = smul.u32 32, %s23
      $region36: #{cross_attention_3d.2} parent=31 // pred_fallthru
        _
      // Predicated region
      $region37: #{cross_attention_3d.2} parent=31 // pred_check
        %p295 = pneg %p77
      $region38: #{cross_attention_3d.2} parent=31 // pred_check_branch
        %297 = sbr.rel (%p295) target = $region40
      $region39: #{cross_attention_3d.2} parent=31 // pred_region
        %s298 = smul.u32 32, %s23
        %p299 = scmp.lt.s32.totalorder %s22, 1
        %s300 = scalar_select %p299, %s22, 1
        %p301 = scmp.lt.s32.totalorder %s298, 63
        %s302 = scalar_select %p301, %s298, 63
        %s303 = smul.addr %s300, 64
        %s304 = sadd.s32 %s302, %s303
        %s305 = smul.addr %s304, 8
        %s306 = scalar_lea.vmem %s1, %s305
        %s307 = smul.u32 32, %s23
      $region40: #{cross_attention_3d.2} parent=31 // pred_fallthru
        _
    $region32: #{cross_attention_3d.2} parent=5 // pred_fallthru
      _
    %p308 = scmp.le.s32.totalorder 1, %s15
    %p309 = scmp.lt.s32.totalorder %s15, 5
    %p310 = pnand %p308, %p309
    %p311 = pneg %p310
    // Predicated region
    $region41: #{cross_attention_3d.2} parent=5 // pred_check
      _
    $region42: #{cross_attention_3d.2} parent=5 // pred_check_branch
      %313 = sbr.rel (%p310) target = $region44
    $region43: #{cross_attention_3d.2} parent=5 // pred_region
      %s314 = ssub.s32 %s15, 1
      %s315 = smul.u32 32, %s25
      %p316 = scmp.lt.s32.totalorder %s24, 1
      %s317 = scalar_select %p316, %s24, 1
      %p318 = scmp.lt.s32.totalorder %s315, 63
      %s319 = scalar_select %p318, %s315, 63
      %s320 = smul.addr %s317, 64
      %s321 = sadd.s32 %s319, %s320
      %s322 = smul.addr %s321, 8
      %s323 = scalar_lea.vmem %s0, %s322
      %p324 = pneg %p55
      %p325 = pneg %p52
      %s326 = smul.u32 32, %s25
      %p327 = scmp.lt.s32.totalorder %s24, 1
      %s328 = scalar_select %p327, %s24, 1
      %p329 = scmp.lt.s32.totalorder %s326, 63
      %s330 = scalar_select %p329, %s326, 63
      %s331 = smul.addr %s328, 64
      %s332 = sadd.s32 %s330, %s331
      %s333 = smul.addr %s332, 8
      %s334 = scalar_lea.vmem %s1, %s333
      %p335 = pneg %p83
      %p336 = pneg %p80
      %p337 = pneg %p104
      %p338 = pneg %p101
      %p339 = pneg %p125
      %p340 = pneg %p122
      %p341 = pneg %p146
      %p342 = pneg %p143
      %p343 = pneg %p167
      %p344 = pneg %p164
      %p345 = pneg %p195
      %p346 = pneg %p192
      %s347 = smul.u32 32, %s25
      %p348 = scmp.lt.s32.totalorder %s24, 1
      %s349 = scalar_select %p348, %s24, 1
      %p350 = scmp.lt.s32.totalorder %s347, 63
      %s351 = scalar_select %p350, %s347, 63
      %s352 = smul.addr %s349, 64
      %s353 = sadd.s32 %s351, %s352
      %s354 = smul.addr %s353, 4
      %s355 = scalar_lea.vmem %s6, %s354
      %p356 = pneg %p223
      %p357 = pneg %p220
      %s358 = smul.u32 32, %s25
      %p359 = scmp.lt.s32.totalorder %s24, 1
      %s360 = scalar_select %p359, %s24, 1
      %p361 = scmp.lt.s32.totalorder %s358, 63
      %s362 = scalar_select %p361, %s358, 63
      %s363 = smul.addr %s360, 64
      %s364 = sadd.s32 %s362, %s363
      %s365 = smul.addr %s364, 4
      %s366 = scalar_lea.vmem %s7, %s365
      %p367 = pneg %p251
      %p368 = pneg %p248
      %s369 = smul.u32 32, %s25
      %p370 = scmp.lt.s32.totalorder %s24, 1
      %s371 = scalar_select %p370, %s24, 1
      %p372 = scmp.lt.s32.totalorder %s369, 63
      %s373 = scalar_select %p372, %s369, 63
      %s374 = smul.addr %s371, 64
      %s375 = sadd.s32 %s373, %s374
      %s376 = smul.addr %s375, 4
      %s377 = scalar_lea.vmem %s8, %s376
      %s378 = smul.u32 32, %s25
      %p379 = scmp.lt.s32.totalorder %s24, 1
      %s380 = scalar_select %p379, %s24, 1
      %p381 = scmp.lt.s32.totalorder %s378, 63
      %s382 = scalar_select %p381, %s378, 63
      %s383 = smul.addr %s380, 64
      %s384 = sadd.s32 %s382, %s383
      %s385 = smul.addr %s384, 8
      %s386 = scalar_lea.vmem %s0, %s385
      %s387 = smul.u32 32, %s25
      %s388 = smul.u32 32, %s25
      %p389 = scmp.lt.s32.totalorder %s24, 1
      %s390 = scalar_select %p389, %s24, 1
      %p391 = scmp.lt.s32.totalorder %s388, 63
      %s392 = scalar_select %p391, %s388, 63
      %s393 = smul.addr %s390, 64
      %s394 = sadd.s32 %s392, %s393
      %s395 = smul.addr %s394, 8
      %s396 = scalar_lea.vmem %s1, %s395
      %s397 = smul.u32 32, %s25
      %s398 = smul.u32 32, %s25
      %p399 = scmp.lt.s32.totalorder %s24, 1
      %s400 = scalar_select %p399, %s24, 1
      %p401 = scmp.lt.s32.totalorder %s398, 63
      %s402 = scalar_select %p401, %s398, 63
      %s403 = smul.addr %s400, 64
      %s404 = sadd.s32 %s402, %s403
      %s405 = smul.addr %s404, 4
      %s406 = scalar_lea.vmem %s6, %s405
      %s407 = smul.u32 32, %s25
      %s408 = smul.u32 32, %s25
      %p409 = scmp.lt.s32.totalorder %s24, 1
      %s410 = scalar_select %p409, %s24, 1
      %p411 = scmp.lt.s32.totalorder %s408, 63
      %s412 = scalar_select %p411, %s408, 63
      %s413 = smul.addr %s410, 64
      %s414 = sadd.s32 %s412, %s413
      %s415 = smul.addr %s414, 4
      %s416 = scalar_lea.vmem %s7, %s415
      %s417 = smul.u32 32, %s25
      %s418 = smul.u32 32, %s25
      %p419 = scmp.lt.s32.totalorder %s24, 1
      %s420 = scalar_select %p419, %s24, 1
      %p421 = scmp.lt.s32.totalorder %s418, 63
      %s422 = scalar_select %p421, %s418, 63
      %s423 = smul.addr %s420, 64
      %s424 = sadd.s32 %s422, %s423
      %s425 = smul.addr %s424, 4
      %s426 = scalar_lea.vmem %s8, %s425
      %s427 = smul.u32 32, %s25
      %v428 = vld [vmem:[%s386] sm:$0xff]
      %v429 = vld [vmem:[%s386 + $0x8] sm:$0xff]
      %v430 = vld [vmem:[%s386 + $0x10] sm:$0xff]
      %v431 = vld [vmem:[%s386 + $0x18] sm:$0xff]
      %v432 = vld [vmem:[%s386 + $0x20] sm:$0xff]
      %v433 = vld [vmem:[%s386 + $0x28] sm:$0xff]
      %v434 = vld [vmem:[%s386 + $0x30] sm:$0xff]
      %v435 = vld [vmem:[%s386 + $0x38] sm:$0xff]
      %v436 = vld [vmem:[%s386 + $0x40] sm:$0xff]
      %v437 = vld [vmem:[%s386 + $0x48] sm:$0xff]
      %v438 = vld [vmem:[%s386 + $0x50] sm:$0xff]
      %v439 = vld [vmem:[%s386 + $0x58] sm:$0xff]
      %v440 = vld [vmem:[%s386 + $0x60] sm:$0xff]
      %v441 = vld [vmem:[%s386 + $0x68] sm:$0xff]
      %v442 = vld [vmem:[%s386 + $0x70] sm:$0xff]
      %v443 = vld [vmem:[%s386 + $0x78] sm:$0xff]
      %v444 = vld [vmem:[%s386 + $0x80] sm:$0xff]
      %v445 = vld [vmem:[%s386 + $0x88] sm:$0xff]
      %v446 = vld [vmem:[%s386 + $0x90] sm:$0xff]
      %v447 = vld [vmem:[%s386 + $0x98] sm:$0xff]
      %v448 = vld [vmem:[%s386 + $0xa0] sm:$0xff]
      %v449 = vld [vmem:[%s386 + $0xa8] sm:$0xff]
      %v450 = vld [vmem:[%s386 + $0xb0] sm:$0xff]
      %v451 = vld [vmem:[%s386 + $0xb8] sm:$0xff]
      %v452 = vld [vmem:[%s386 + $0xc0] sm:$0xff]
      %v453 = vld [vmem:[%s386 + $0xc8] sm:$0xff]
      %v454 = vld [vmem:[%s386 + $0xd0] sm:$0xff]
      %v455 = vld [vmem:[%s386 + $0xd8] sm:$0xff]
      %v456 = vld [vmem:[%s386 + $0xe0] sm:$0xff]
      %v457 = vld [vmem:[%s386 + $0xe8] sm:$0xff]
      %v458 = vld [vmem:[%s386 + $0xf0] sm:$0xff]
      %v459 = vld [vmem:[%s386 + $0xf8] sm:$0xff]
      %v460 = vld [vmem:[%s396] sm:$0xff]
      %v461 = vld [vmem:[%s396 + $0x8] sm:$0xff]
      %v462 = vld [vmem:[%s396 + $0x10] sm:$0xff]
      %v463 = vld [vmem:[%s396 + $0x18] sm:$0xff]
      %v464 = vld [vmem:[%s396 + $0x20] sm:$0xff]
      %v465 = vld [vmem:[%s396 + $0x28] sm:$0xff]
      %v466 = vld [vmem:[%s396 + $0x30] sm:$0xff]
      %v467 = vld [vmem:[%s396 + $0x38] sm:$0xff]
      %v468 = vld [vmem:[%s396 + $0x40] sm:$0xff]
      %v469 = vld [vmem:[%s396 + $0x48] sm:$0xff]
      %v470 = vld [vmem:[%s396 + $0x50] sm:$0xff]
      %v471 = vld [vmem:[%s396 + $0x58] sm:$0xff]
      %v472 = vld [vmem:[%s396 + $0x60] sm:$0xff]
      %v473 = vld [vmem:[%s396 + $0x68] sm:$0xff]
      %v474 = vld [vmem:[%s396 + $0x70] sm:$0xff]
      %v475 = vld [vmem:[%s396 + $0x78] sm:$0xff]
      %v476 = vld [vmem:[%s396 + $0x80] sm:$0xff]
      %v477 = vld [vmem:[%s396 + $0x88] sm:$0xff]
      %v478 = vld [vmem:[%s396 + $0x90] sm:$0xff]
      %v479 = vld [vmem:[%s396 + $0x98] sm:$0xff]
      %v480 = vld [vmem:[%s396 + $0xa0] sm:$0xff]
      %v481 = vld [vmem:[%s396 + $0xa8] sm:$0xff]
      %v482 = vld [vmem:[%s396 + $0xb0] sm:$0xff]
      %v483 = vld [vmem:[%s396 + $0xb8] sm:$0xff]
      %v484 = vld [vmem:[%s396 + $0xc0] sm:$0xff]
      %v485 = vld [vmem:[%s396 + $0xc8] sm:$0xff]
      %v486 = vld [vmem:[%s396 + $0xd0] sm:$0xff]
      %v487 = vld [vmem:[%s396 + $0xd8] sm:$0xff]
      %v488 = vld [vmem:[%s396 + $0xe0] sm:$0xff]
      %v489 = vld [vmem:[%s396 + $0xe8] sm:$0xff]
      %v490 = vld [vmem:[%s396 + $0xf0] sm:$0xff]
      %v491 = vld [vmem:[%s396 + $0xf8] sm:$0xff]
      %v492 = vld [vmem:[%s2] sm:$0xff]
      %v493 = vld [vmem:[%s2 + $0x8] sm:$0xff]
      %v494 = vld [vmem:[%s2 + $0x10] sm:$0xff]
      %v495 = vld [vmem:[%s2 + $0x18] sm:$0xff]
      %v496 = vld [vmem:[%s2 + $0x20] sm:$0xff]
      %v497 = vld [vmem:[%s2 + $0x28] sm:$0xff]
      %v498 = vld [vmem:[%s2 + $0x30] sm:$0xff]
      %v499 = vld [vmem:[%s2 + $0x38] sm:$0xff]
      %v500 = vld [vmem:[%s2 + $0x40] sm:$0xff]
      %v501 = vld [vmem:[%s2 + $0x48] sm:$0xff]
      %v502 = vld [vmem:[%s2 + $0x50] sm:$0xff]
      %v503 = vld [vmem:[%s2 + $0x58] sm:$0xff]
      %v504 = vld [vmem:[%s2 + $0x60] sm:$0xff]
      %v505 = vld [vmem:[%s2 + $0x68] sm:$0xff]
      %v506 = vld [vmem:[%s2 + $0x70] sm:$0xff]
      %v507 = vld [vmem:[%s2 + $0x78] sm:$0xff]
      %v508 = vld [vmem:[%s3] sm:$0x1]
      %v510 = vperm.slane %v508, 0
      %512 = vmatpush.msra.mxu0 %v507
      %513 = vmatpush.msra.mxu0 %v506
      %514 = vmatpush.msra.mxu0 %v505
      %515 = vmatpush.msra.mxu0 %v504
      %516 = vmatpush.msra.mxu0 %v503
      %517 = vmatpush.msra.mxu0 %v502
      %518 = vmatpush.msra.mxu0 %v501
      %519 = vmatpush.msra.mxu0 %v500
      %520 = vmatpush.msra.mxu0 %v499
      %521 = vmatpush.msra.mxu0 %v498
      %522 = vmatpush.msra.mxu0 %v497
      %523 = vmatpush.msra.mxu0 %v496
      %524 = vmatpush.msra.mxu0 %v495
      %525 = vmatpush.msra.mxu0 %v494
      %526 = vmatpush.msra.mxu0 %v493
      %527 = vmatpush.msra.mxu0 %v492
      %528 = vmatmul.f32.gmra.mxu0 %v428
      %v529 = vpop.f32.mrf.mxu0
      %v530 = vadd.f32 %v510, %v529
      %531 = vmatmul.f32.gmra.mxu0 %v429
      %v532 = vpop.f32.mrf.mxu0
      %v533 = vadd.f32 %v510, %v532
      %534 = vmatmul.f32.gmra.mxu0 %v430
      %v535 = vpop.f32.mrf.mxu0
      %v536 = vadd.f32 %v510, %v535
      %537 = vmatmul.f32.gmra.mxu0 %v431
      %v538 = vpop.f32.mrf.mxu0
      %v539 = vadd.f32 %v510, %v538
      %540 = vmatmul.f32.gmra.mxu0 %v432
      %v541 = vpop.f32.mrf.mxu0
      %v542 = vadd.f32 %v510, %v541
      %543 = vmatmul.f32.gmra.mxu0 %v433
      %v544 = vpop.f32.mrf.mxu0
      %v545 = vadd.f32 %v510, %v544
      %546 = vmatmul.f32.gmra.mxu0 %v434
      %v547 = vpop.f32.mrf.mxu0
      %v548 = vadd.f32 %v510, %v547
      %549 = vmatmul.f32.gmra.mxu0 %v435
      %v550 = vpop.f32.mrf.mxu0
      %v551 = vadd.f32 %v510, %v550
      %552 = vmatmul.f32.gmra.mxu0 %v436
      %v553 = vpop.f32.mrf.mxu0
      %v554 = vadd.f32 %v510, %v553
      %555 = vmatmul.f32.gmra.mxu0 %v437
      %v556 = vpop.f32.mrf.mxu0
      %v557 = vadd.f32 %v510, %v556
      %558 = vmatmul.f32.gmra.mxu0 %v438
      %v559 = vpop.f32.mrf.mxu0
      %v560 = vadd.f32 %v510, %v559
      %561 = vmatmul.f32.gmra.mxu0 %v439
      %v562 = vpop.f32.mrf.mxu0
      %v563 = vadd.f32 %v510, %v562
      %564 = vmatmul.f32.gmra.mxu0 %v440
      %v565 = vpop.f32.mrf.mxu0
      %v566 = vadd.f32 %v510, %v565
      %567 = vmatmul.f32.gmra.mxu0 %v441
      %v568 = vpop.f32.mrf.mxu0
      %v569 = vadd.f32 %v510, %v568
      %570 = vmatmul.f32.gmra.mxu0 %v442
      %v571 = vpop.f32.mrf.mxu0
      %v572 = vadd.f32 %v510, %v571
      %573 = vmatmul.f32.gmra.mxu0 %v443
      %v574 = vpop.f32.mrf.mxu0
      %v575 = vadd.f32 %v510, %v574
      %576 = vmatmul.f32.gmra.mxu0 %v444
      %v577 = vpop.f32.mrf.mxu0
      %v578 = vadd.f32 %v510, %v577
      %579 = vmatmul.f32.gmra.mxu0 %v445
      %v580 = vpop.f32.mrf.mxu0
      %v581 = vadd.f32 %v510, %v580
      %582 = vmatmul.f32.gmra.mxu0 %v446
      %v583 = vpop.f32.mrf.mxu0
      %v584 = vadd.f32 %v510, %v583
      %585 = vmatmul.f32.gmra.mxu0 %v447
      %v586 = vpop.f32.mrf.mxu0
      %v587 = vadd.f32 %v510, %v586
      %588 = vmatmul.f32.gmra.mxu0 %v448
      %v589 = vpop.f32.mrf.mxu0
      %v590 = vadd.f32 %v510, %v589
      %591 = vmatmul.f32.gmra.mxu0 %v449
      %v592 = vpop.f32.mrf.mxu0
      %v593 = vadd.f32 %v510, %v592
      %594 = vmatmul.f32.gmra.mxu0 %v450
      %v595 = vpop.f32.mrf.mxu0
      %v596 = vadd.f32 %v510, %v595
      %597 = vmatmul.f32.gmra.mxu0 %v451
      %v598 = vpop.f32.mrf.mxu0
      %v599 = vadd.f32 %v510, %v598
      %600 = vmatmul.f32.gmra.mxu0 %v452
      %v601 = vpop.f32.mrf.mxu0
      %v602 = vadd.f32 %v510, %v601
      %603 = vmatmul.f32.gmra.mxu0 %v453
      %v604 = vpop.f32.mrf.mxu0
      %v605 = vadd.f32 %v510, %v604
      %606 = vmatmul.f32.gmra.mxu0 %v454
      %v607 = vpop.f32.mrf.mxu0
      %v608 = vadd.f32 %v510, %v607
      %609 = vmatmul.f32.gmra.mxu0 %v455
      %v610 = vpop.f32.mrf.mxu0
      %v611 = vadd.f32 %v510, %v610
      %612 = vmatmul.f32.gmra.mxu0 %v456
      %v613 = vpop.f32.mrf.mxu0
      %v614 = vadd.f32 %v510, %v613
      %615 = vmatmul.f32.gmra.mxu0 %v457
      %v616 = vpop.f32.mrf.mxu0
      %v617 = vadd.f32 %v510, %v616
      %618 = vmatmul.f32.gmra.mxu0 %v458
      %v619 = vpop.f32.mrf.mxu0
      %v620 = vadd.f32 %v510, %v619
      %621 = vmatmul.f32.gmra.mxu0 %v459
      %v622 = vpop.f32.mrf.mxu0
      %v623 = vadd.f32 %v510, %v622
      %624 = vdwg.mxu0
      %v625 = vld [vmem:[%s4] sm:$0xff]
      %v626 = vld [vmem:[%s4 + $0x8] sm:$0xff]
      %v627 = vld [vmem:[%s4 + $0x10] sm:$0xff]
      %v628 = vld [vmem:[%s4 + $0x18] sm:$0xff]
      %v629 = vld [vmem:[%s4 + $0x20] sm:$0xff]
      %v630 = vld [vmem:[%s4 + $0x28] sm:$0xff]
      %v631 = vld [vmem:[%s4 + $0x30] sm:$0xff]
      %v632 = vld [vmem:[%s4 + $0x38] sm:$0xff]
      %v633 = vld [vmem:[%s4 + $0x40] sm:$0xff]
      %v634 = vld [vmem:[%s4 + $0x48] sm:$0xff]
      %v635 = vld [vmem:[%s4 + $0x50] sm:$0xff]
      %v636 = vld [vmem:[%s4 + $0x58] sm:$0xff]
      %v637 = vld [vmem:[%s4 + $0x60] sm:$0xff]
      %v638 = vld [vmem:[%s4 + $0x68] sm:$0xff]
      %v639 = vld [vmem:[%s4 + $0x70] sm:$0xff]
      %v640 = vld [vmem:[%s4 + $0x78] sm:$0xff]
      %v641 = vld [vmem:[%s4 + $0x80] sm:$0xff]
      %v642 = vld [vmem:[%s4 + $0x88] sm:$0xff]
      %v643 = vld [vmem:[%s4 + $0x90] sm:$0xff]
      %v644 = vld [vmem:[%s4 + $0x98] sm:$0xff]
      %v645 = vld [vmem:[%s4 + $0xa0] sm:$0xff]
      %v646 = vld [vmem:[%s4 + $0xa8] sm:$0xff]
      %v647 = vld [vmem:[%s4 + $0xb0] sm:$0xff]
      %v648 = vld [vmem:[%s4 + $0xb8] sm:$0xff]
      %v649 = vld [vmem:[%s4 + $0xc0] sm:$0xff]
      %v650 = vld [vmem:[%s4 + $0xc8] sm:$0xff]
      %v651 = vld [vmem:[%s4 + $0xd0] sm:$0xff]
      %v652 = vld [vmem:[%s4 + $0xd8] sm:$0xff]
      %v653 = vld [vmem:[%s4 + $0xe0] sm:$0xff]
      %v654 = vld [vmem:[%s4 + $0xe8] sm:$0xff]
      %v655 = vld [vmem:[%s4 + $0xf0] sm:$0xff]
      %v656 = vld [vmem:[%s4 + $0xf8] sm:$0xff]
      %v657 = vld [vmem:[%s5] sm:$0x3]
      %v659 = vperm.slane %v657, 0
      %v660 = vperm.slane %v657, 1
      %663 = vmatpush.msra.mxu0 %v655
      %664 = vmatpush.msra.mxu0 %v653
      %665 = vmatpush.msra.mxu0 %v651
      %666 = vmatpush.msra.mxu0 %v649
      %667 = vmatpush.msra.mxu0 %v647
      %668 = vmatpush.msra.mxu0 %v645
      %669 = vmatpush.msra.mxu0 %v643
      %670 = vmatpush.msra.mxu0 %v641
      %671 = vmatpush.msra.mxu0 %v639
      %672 = vmatpush.msra.mxu0 %v637
      %673 = vmatpush.msra.mxu0 %v635
      %674 = vmatpush.msra.mxu0 %v633
      %675 = vmatpush.msra.mxu0 %v631
      %676 = vmatpush.msra.mxu0 %v629
      %677 = vmatpush.msra.mxu0 %v627
      %678 = vmatpush.msra.mxu0 %v625
      %679 = vmatmul.f32.gmra.mxu0 %v460
      %v680 = vpop.f32.mrf.mxu0
      %v681 = vadd.f32 %v659, %v680
      %682 = vmatmul.f32.gmra.mxu0 %v461
      %v683 = vpop.f32.mrf.mxu0
      %v684 = vadd.f32 %v659, %v683
      %685 = vmatmul.f32.gmra.mxu0 %v462
      %v686 = vpop.f32.mrf.mxu0
      %v687 = vadd.f32 %v659, %v686
      %688 = vmatmul.f32.gmra.mxu0 %v463
      %v689 = vpop.f32.mrf.mxu0
      %v690 = vadd.f32 %v659, %v689
      %691 = vmatmul.f32.gmra.mxu0 %v464
      %v692 = vpop.f32.mrf.mxu0
      %v693 = vadd.f32 %v659, %v692
      %694 = vmatmul.f32.gmra.mxu0 %v465
      %v695 = vpop.f32.mrf.mxu0
      %v696 = vadd.f32 %v659, %v695
      %697 = vmatmul.f32.gmra.mxu0 %v466
      %v698 = vpop.f32.mrf.mxu0
      %v699 = vadd.f32 %v659, %v698
      %700 = vmatmul.f32.gmra.mxu0 %v467
      %v701 = vpop.f32.mrf.mxu0
      %v702 = vadd.f32 %v659, %v701
      %703 = vmatmul.f32.gmra.mxu0 %v468
      %v704 = vpop.f32.mrf.mxu0
      %v705 = vadd.f32 %v659, %v704
      %706 = vmatmul.f32.gmra.mxu0 %v469
      %v707 = vpop.f32.mrf.mxu0
      %v708 = vadd.f32 %v659, %v707
      %709 = vmatmul.f32.gmra.mxu0 %v470
      %v710 = vpop.f32.mrf.mxu0
      %v711 = vadd.f32 %v659, %v710
      %712 = vmatmul.f32.gmra.mxu0 %v471
      %v713 = vpop.f32.mrf.mxu0
      %v714 = vadd.f32 %v659, %v713
      %715 = vmatmul.f32.gmra.mxu0 %v472
      %v716 = vpop.f32.mrf.mxu0
      %v717 = vadd.f32 %v659, %v716
      %718 = vmatmul.f32.gmra.mxu0 %v473
      %v719 = vpop.f32.mrf.mxu0
      %v720 = vadd.f32 %v659, %v719
      %721 = vmatmul.f32.gmra.mxu0 %v474
      %v722 = vpop.f32.mrf.mxu0
      %v723 = vadd.f32 %v659, %v722
      %724 = vmatmul.f32.gmra.mxu0 %v475
      %v725 = vpop.f32.mrf.mxu0
      %v726 = vadd.f32 %v659, %v725
      %727 = vmatmul.f32.gmra.mxu0 %v476
      %v728 = vpop.f32.mrf.mxu0
      %v729 = vadd.f32 %v659, %v728
      %730 = vmatmul.f32.gmra.mxu0 %v477
      %v731 = vpop.f32.mrf.mxu0
      %v732 = vadd.f32 %v659, %v731
      %733 = vmatmul.f32.gmra.mxu0 %v478
      %v734 = vpop.f32.mrf.mxu0
      %v735 = vadd.f32 %v659, %v734
      %736 = vmatmul.f32.gmra.mxu0 %v479
      %v737 = vpop.f32.mrf.mxu0
      %v738 = vadd.f32 %v659, %v737
      %739 = vmatmul.f32.gmra.mxu0 %v480
      %v740 = vpop.f32.mrf.mxu0
      %v741 = vadd.f32 %v659, %v740
      %742 = vmatmul.f32.gmra.mxu0 %v481
      %v743 = vpop.f32.mrf.mxu0
      %v744 = vadd.f32 %v659, %v743
      %745 = vmatmul.f32.gmra.mxu0 %v482
      %v746 = vpop.f32.mrf.mxu0
      %v747 = vadd.f32 %v659, %v746
      %748 = vmatmul.f32.gmra.mxu0 %v483
      %v749 = vpop.f32.mrf.mxu0
      %v750 = vadd.f32 %v659, %v749
      %751 = vmatmul.f32.gmra.mxu0 %v484
      %v752 = vpop.f32.mrf.mxu0
      %v753 = vadd.f32 %v659, %v752
      %754 = vmatmul.f32.gmra.mxu0 %v485
      %v755 = vpop.f32.mrf.mxu0
      %v756 = vadd.f32 %v659, %v755
      %757 = vmatmul.f32.gmra.mxu0 %v486
      %v758 = vpop.f32.mrf.mxu0
      %v759 = vadd.f32 %v659, %v758
      %760 = vmatmul.f32.gmra.mxu0 %v487
      %v761 = vpop.f32.mrf.mxu0
      %v762 = vadd.f32 %v659, %v761
      %763 = vmatmul.f32.gmra.mxu0 %v488
      %v764 = vpop.f32.mrf.mxu0
      %v765 = vadd.f32 %v659, %v764
      %766 = vmatmul.f32.gmra.mxu0 %v489
      %v767 = vpop.f32.mrf.mxu0
      %v768 = vadd.f32 %v659, %v767
      %769 = vmatmul.f32.gmra.mxu0 %v490
      %v770 = vpop.f32.mrf.mxu0
      %v771 = vadd.f32 %v659, %v770
      %772 = vmatmul.f32.gmra.mxu0 %v491
      %v773 = vpop.f32.mrf.mxu0
      %v774 = vadd.f32 %v659, %v773
      %775 = vdwg.mxu0
      %776 = vmatpush.msra.mxu0 %v656
      %777 = vmatpush.msra.mxu0 %v654
      %778 = vmatpush.msra.mxu0 %v652
      %779 = vmatpush.msra.mxu0 %v650
      %780 = vmatpush.msra.mxu0 %v648
      %781 = vmatpush.msra.mxu0 %v646
      %782 = vmatpush.msra.mxu0 %v644
      %783 = vmatpush.msra.mxu0 %v642
      %784 = vmatpush.msra.mxu0 %v640
      %785 = vmatpush.msra.mxu0 %v638
      %786 = vmatpush.msra.mxu0 %v636
      %787 = vmatpush.msra.mxu0 %v634
      %788 = vmatpush.msra.mxu0 %v632
      %789 = vmatpush.msra.mxu0 %v630
      %790 = vmatpush.msra.mxu0 %v628
      %791 = vmatpush.msra.mxu0 %v626
      %792 = vmatmul.f32.gmra.mxu0 %v460
      %v793 = vpop.f32.mrf.mxu0
      %v794 = vadd.f32 %v660, %v793
      %795 = vmatmul.f32.gmra.mxu0 %v461
      %v796 = vpop.f32.mrf.mxu0
      %v797 = vadd.f32 %v660, %v796
      %798 = vmatmul.f32.gmra.mxu0 %v462
      %v799 = vpop.f32.mrf.mxu0
      %v800 = vadd.f32 %v660, %v799
      %801 = vmatmul.f32.gmra.mxu0 %v463
      %v802 = vpop.f32.mrf.mxu0
      %v803 = vadd.f32 %v660, %v802
      %804 = vmatmul.f32.gmra.mxu0 %v464
      %v805 = vpop.f32.mrf.mxu0
      %v806 = vadd.f32 %v660, %v805
      %807 = vmatmul.f32.gmra.mxu0 %v465
      %v808 = vpop.f32.mrf.mxu0
      %v809 = vadd.f32 %v660, %v808
      %810 = vmatmul.f32.gmra.mxu0 %v466
      %v811 = vpop.f32.mrf.mxu0
      %v812 = vadd.f32 %v660, %v811
      %813 = vmatmul.f32.gmra.mxu0 %v467
      %v814 = vpop.f32.mrf.mxu0
      %v815 = vadd.f32 %v660, %v814
      %816 = vmatmul.f32.gmra.mxu0 %v468
      %v817 = vpop.f32.mrf.mxu0
      %v818 = vadd.f32 %v660, %v817
      %819 = vmatmul.f32.gmra.mxu0 %v469
      %v820 = vpop.f32.mrf.mxu0
      %v821 = vadd.f32 %v660, %v820
      %822 = vmatmul.f32.gmra.mxu0 %v470
      %v823 = vpop.f32.mrf.mxu0
      %v824 = vadd.f32 %v660, %v823
      %825 = vmatmul.f32.gmra.mxu0 %v471
      %v826 = vpop.f32.mrf.mxu0
      %v827 = vadd.f32 %v660, %v826
      %828 = vmatmul.f32.gmra.mxu0 %v472
      %v829 = vpop.f32.mrf.mxu0
      %v830 = vadd.f32 %v660, %v829
      %831 = vmatmul.f32.gmra.mxu0 %v473
      %v832 = vpop.f32.mrf.mxu0
      %v833 = vadd.f32 %v660, %v832
      %834 = vmatmul.f32.gmra.mxu0 %v474
      %v835 = vpop.f32.mrf.mxu0
      %v836 = vadd.f32 %v660, %v835
      %837 = vmatmul.f32.gmra.mxu0 %v475
      %v838 = vpop.f32.mrf.mxu0
      %v839 = vadd.f32 %v660, %v838
      %840 = vmatmul.f32.gmra.mxu0 %v476
      %v841 = vpop.f32.mrf.mxu0
      %v842 = vadd.f32 %v660, %v841
      %843 = vmatmul.f32.gmra.mxu0 %v477
      %v844 = vpop.f32.mrf.mxu0
      %v845 = vadd.f32 %v660, %v844
      %846 = vmatmul.f32.gmra.mxu0 %v478
      %v847 = vpop.f32.mrf.mxu0
      %v848 = vadd.f32 %v660, %v847
      %849 = vmatmul.f32.gmra.mxu0 %v479
      %v850 = vpop.f32.mrf.mxu0
      %v851 = vadd.f32 %v660, %v850
      %852 = vmatmul.f32.gmra.mxu0 %v480
      %v853 = vpop.f32.mrf.mxu0
      %v854 = vadd.f32 %v660, %v853
      %855 = vmatmul.f32.gmra.mxu0 %v481
      %v856 = vpop.f32.mrf.mxu0
      %v857 = vadd.f32 %v660, %v856
      %858 = vmatmul.f32.gmra.mxu0 %v482
      %v859 = vpop.f32.mrf.mxu0
      %v860 = vadd.f32 %v660, %v859
      %861 = vmatmul.f32.gmra.mxu0 %v483
      %v862 = vpop.f32.mrf.mxu0
      %v863 = vadd.f32 %v660, %v862
      %864 = vmatmul.f32.gmra.mxu0 %v484
      %v865 = vpop.f32.mrf.mxu0
      %v866 = vadd.f32 %v660, %v865
      %867 = vmatmul.f32.gmra.mxu0 %v485
      %v868 = vpop.f32.mrf.mxu0
      %v869 = vadd.f32 %v660, %v868
      %870 = vmatmul.f32.gmra.mxu0 %v486
      %v871 = vpop.f32.mrf.mxu0
      %v872 = vadd.f32 %v660, %v871
      %873 = vmatmul.f32.gmra.mxu0 %v487
      %v874 = vpop.f32.mrf.mxu0
      %v875 = vadd.f32 %v660, %v874
      %876 = vmatmul.f32.gmra.mxu0 %v488
      %v877 = vpop.f32.mrf.mxu0
      %v878 = vadd.f32 %v660, %v877
      %879 = vmatmul.f32.gmra.mxu0 %v489
      %v880 = vpop.f32.mrf.mxu0
      %v881 = vadd.f32 %v660, %v880
      %882 = vmatmul.f32.gmra.mxu0 %v490
      %v883 = vpop.f32.mrf.mxu0
      %v884 = vadd.f32 %v660, %v883
      %885 = vmatmul.f32.gmra.mxu0 %v491
      %v886 = vpop.f32.mrf.mxu0
      %v887 = vadd.f32 %v660, %v886
      %888 = vdwg.mxu0
      %v889 = vpack.c.bf16 %v530, %v530
      %v890 = vpack.c.bf16 %v533, %v533
      %v891 = vpack.c.bf16 %v536, %v536
      %v892 = vpack.c.bf16 %v539, %v539
      %v893 = vpack.c.bf16 %v542, %v542
      %v894 = vpack.c.bf16 %v545, %v545
      %v895 = vpack.c.bf16 %v548, %v548
      %v896 = vpack.c.bf16 %v551, %v551
      %v897 = vpack.c.bf16 %v554, %v554
      %v898 = vpack.c.bf16 %v557, %v557
      %v899 = vpack.c.bf16 %v560, %v560
      %v900 = vpack.c.bf16 %v563, %v563
      %v901 = vpack.c.bf16 %v566, %v566
      %v902 = vpack.c.bf16 %v569, %v569
      %v903 = vpack.c.bf16 %v572, %v572
      %v904 = vpack.c.bf16 %v575, %v575
      %v905 = vpack.c.bf16 %v578, %v578
      %v906 = vpack.c.bf16 %v581, %v581
      %v907 = vpack.c.bf16 %v584, %v584
      %v908 = vpack.c.bf16 %v587, %v587
      %v909 = vpack.c.bf16 %v590, %v590
      %v910 = vpack.c.bf16 %v593, %v593
      %v911 = vpack.c.bf16 %v596, %v596
      %v912 = vpack.c.bf16 %v599, %v599
      %v913 = vpack.c.bf16 %v602, %v602
      %v914 = vpack.c.bf16 %v605, %v605
      %v915 = vpack.c.bf16 %v608, %v608
      %v916 = vpack.c.bf16 %v611, %v611
      %v917 = vpack.c.bf16 %v614, %v614
      %v918 = vpack.c.bf16 %v617, %v617
      %v919 = vpack.c.bf16 %v620, %v620
      %v920 = vpack.c.bf16 %v623, %v623
      %921 = vst [vmem:[%s406] sm:$0xf] %v889
      %922 = vst [vmem:[%s406 + $0x4] sm:$0xf] %v890
      %923 = vst [vmem:[%s406 + $0x8] sm:$0xf] %v891
      %924 = vst [vmem:[%s406 + $0xc] sm:$0xf] %v892
      %925 = vst [vmem:[%s406 + $0x10] sm:$0xf] %v893
      %926 = vst [vmem:[%s406 + $0x14] sm:$0xf] %v894
      %927 = vst [vmem:[%s406 + $0x18] sm:$0xf] %v895
      %928 = vst [vmem:[%s406 + $0x1c] sm:$0xf] %v896
      %929 = vst [vmem:[%s406 + $0x20] sm:$0xf] %v897
      %930 = vst [vmem:[%s406 + $0x24] sm:$0xf] %v898
      %931 = vst [vmem:[%s406 + $0x28] sm:$0xf] %v899
      %932 = vst [vmem:[%s406 + $0x2c] sm:$0xf] %v900
      %933 = vst [vmem:[%s406 + $0x30] sm:$0xf] %v901
      %934 = vst [vmem:[%s406 + $0x34] sm:$0xf] %v902
      %935 = vst [vmem:[%s406 + $0x38] sm:$0xf] %v903
      %936 = vst [vmem:[%s406 + $0x3c] sm:$0xf] %v904
      %937 = vst [vmem:[%s406 + $0x40] sm:$0xf] %v905
      %938 = vst [vmem:[%s406 + $0x44] sm:$0xf] %v906
      %939 = vst [vmem:[%s406 + $0x48] sm:$0xf] %v907
      %940 = vst [vmem:[%s406 + $0x4c] sm:$0xf] %v908
      %941 = vst [vmem:[%s406 + $0x50] sm:$0xf] %v909
      %942 = vst [vmem:[%s406 + $0x54] sm:$0xf] %v910
      %943 = vst [vmem:[%s406 + $0x58] sm:$0xf] %v911
      %944 = vst [vmem:[%s406 + $0x5c] sm:$0xf] %v912
      %945 = vst [vmem:[%s406 + $0x60] sm:$0xf] %v913
      %946 = vst [vmem:[%s406 + $0x64] sm:$0xf] %v914
      %947 = vst [vmem:[%s406 + $0x68] sm:$0xf] %v915
      %948 = vst [vmem:[%s406 + $0x6c] sm:$0xf] %v916
      %949 = vst [vmem:[%s406 + $0x70] sm:$0xf] %v917
      %950 = vst [vmem:[%s406 + $0x74] sm:$0xf] %v918
      %951 = vst [vmem:[%s406 + $0x78] sm:$0xf] %v919
      %952 = vst [vmem:[%s406 + $0x7c] sm:$0xf] %v920
      %v953 = vpack.c.bf16 %v681, %v681
      %v954 = vpack.c.bf16 %v684, %v684
      %v955 = vpack.c.bf16 %v687, %v687
      %v956 = vpack.c.bf16 %v690, %v690
      %v957 = vpack.c.bf16 %v693, %v693
      %v958 = vpack.c.bf16 %v696, %v696
      %v959 = vpack.c.bf16 %v699, %v699
      %v960 = vpack.c.bf16 %v702, %v702
      %v961 = vpack.c.bf16 %v705, %v705
      %v962 = vpack.c.bf16 %v708, %v708
      %v963 = vpack.c.bf16 %v711, %v711
      %v964 = vpack.c.bf16 %v714, %v714
      %v965 = vpack.c.bf16 %v717, %v717
      %v966 = vpack.c.bf16 %v720, %v720
      %v967 = vpack.c.bf16 %v723, %v723
      %v968 = vpack.c.bf16 %v726, %v726
      %v969 = vpack.c.bf16 %v729, %v729
      %v970 = vpack.c.bf16 %v732, %v732
      %v971 = vpack.c.bf16 %v735, %v735
      %v972 = vpack.c.bf16 %v738, %v738
      %v973 = vpack.c.bf16 %v741, %v741
      %v974 = vpack.c.bf16 %v744, %v744
      %v975 = vpack.c.bf16 %v747, %v747
      %v976 = vpack.c.bf16 %v750, %v750
      %v977 = vpack.c.bf16 %v753, %v753
      %v978 = vpack.c.bf16 %v756, %v756
      %v979 = vpack.c.bf16 %v759, %v759
      %v980 = vpack.c.bf16 %v762, %v762
      %v981 = vpack.c.bf16 %v765, %v765
      %v982 = vpack.c.bf16 %v768, %v768
      %v983 = vpack.c.bf16 %v771, %v771
      %v984 = vpack.c.bf16 %v774, %v774
      %985 = vst [vmem:[%s416] sm:$0xf] %v953
      %986 = vst [vmem:[%s416 + $0x4] sm:$0xf] %v954
      %987 = vst [vmem:[%s416 + $0x8] sm:$0xf] %v955
      %988 = vst [vmem:[%s416 + $0xc] sm:$0xf] %v956
      %989 = vst [vmem:[%s416 + $0x10] sm:$0xf] %v957
      %990 = vst [vmem:[%s416 + $0x14] sm:$0xf] %v958
      %991 = vst [vmem:[%s416 + $0x18] sm:$0xf] %v959
      %992 = vst [vmem:[%s416 + $0x1c] sm:$0xf] %v960
      %993 = vst [vmem:[%s416 + $0x20] sm:$0xf] %v961
      %994 = vst [vmem:[%s416 + $0x24] sm:$0xf] %v962
      %995 = vst [vmem:[%s416 + $0x28] sm:$0xf] %v963
      %996 = vst [vmem:[%s416 + $0x2c] sm:$0xf] %v964
      %997 = vst [vmem:[%s416 + $0x30] sm:$0xf] %v965
      %998 = vst [vmem:[%s416 + $0x34] sm:$0xf] %v966
      %999 = vst [vmem:[%s416 + $0x38] sm:$0xf] %v967
      %1000 = vst [vmem:[%s416 + $0x3c] sm:$0xf] %v968
      %1001 = vst [vmem:[%s416 + $0x40] sm:$0xf] %v969
      %1002 = vst [vmem:[%s416 + $0x44] sm:$0xf] %v970
      %1003 = vst [vmem:[%s416 + $0x48] sm:$0xf] %v971
      %1004 = vst [vmem:[%s416 + $0x4c] sm:$0xf] %v972
      %1005 = vst [vmem:[%s416 + $0x50] sm:$0xf] %v973
      %1006 = vst [vmem:[%s416 + $0x54] sm:$0xf] %v974
      %1007 = vst [vmem:[%s416 + $0x58] sm:$0xf] %v975
      %1008 = vst [vmem:[%s416 + $0x5c] sm:$0xf] %v976
      %1009 = vst [vmem:[%s416 + $0x60] sm:$0xf] %v977
      %1010 = vst [vmem:[%s416 + $0x64] sm:$0xf] %v978
      %1011 = vst [vmem:[%s416 + $0x68] sm:$0xf] %v979
      %1012 = vst [vmem:[%s416 + $0x6c] sm:$0xf] %v980
      %1013 = vst [vmem:[%s416 + $0x70] sm:$0xf] %v981
      %1014 = vst [vmem:[%s416 + $0x74] sm:$0xf] %v982
      %1015 = vst [vmem:[%s416 + $0x78] sm:$0xf] %v983
      %1016 = vst [vmem:[%s416 + $0x7c] sm:$0xf] %v984
      %v1017 = vpack.c.bf16 %v794, %v794
      %v1018 = vpack.c.bf16 %v797, %v797
      %v1019 = vpack.c.bf16 %v800, %v800
      %v1020 = vpack.c.bf16 %v803, %v803
      %v1021 = vpack.c.bf16 %v806, %v806
      %v1022 = vpack.c.bf16 %v809, %v809
      %v1023 = vpack.c.bf16 %v812, %v812
      %v1024 = vpack.c.bf16 %v815, %v815
      %v1025 = vpack.c.bf16 %v818, %v818
      %v1026 = vpack.c.bf16 %v821, %v821
      %v1027 = vpack.c.bf16 %v824, %v824
      %v1028 = vpack.c.bf16 %v827, %v827
      %v1029 = vpack.c.bf16 %v830, %v830
      %v1030 = vpack.c.bf16 %v833, %v833
      %v1031 = vpack.c.bf16 %v836, %v836
      %v1032 = vpack.c.bf16 %v839, %v839
      %v1033 = vpack.c.bf16 %v842, %v842
      %v1034 = vpack.c.bf16 %v845, %v845
      %v1035 = vpack.c.bf16 %v848, %v848
      %v1036 = vpack.c.bf16 %v851, %v851
      %v1037 = vpack.c.bf16 %v854, %v854
      %v1038 = vpack.c.bf16 %v857, %v857
      %v1039 = vpack.c.bf16 %v860, %v860
      %v1040 = vpack.c.bf16 %v863, %v863
      %v1041 = vpack.c.bf16 %v866, %v866
      %v1042 = vpack.c.bf16 %v869, %v869
      %v1043 = vpack.c.bf16 %v872, %v872
      %v1044 = vpack.c.bf16 %v875, %v875
      %v1045 = vpack.c.bf16 %v878, %v878
      %v1046 = vpack.c.bf16 %v881, %v881
      %v1047 = vpack.c.bf16 %v884, %v884
      %v1048 = vpack.c.bf16 %v887, %v887
      %1049 = vst [vmem:[%s426] sm:$0xf] %v1017
      %1050 = vst [vmem:[%s426 + $0x4] sm:$0xf] %v1018
      %1051 = vst [vmem:[%s426 + $0x8] sm:$0xf] %v1019
      %1052 = vst [vmem:[%s426 + $0xc] sm:$0xf] %v1020
      %1053 = vst [vmem:[%s426 + $0x10] sm:$0xf] %v1021
      %1054 = vst [vmem:[%s426 + $0x14] sm:$0xf] %v1022
      %1055 = vst [vmem:[%s426 + $0x18] sm:$0xf] %v1023
      %1056 = vst [vmem:[%s426 + $0x1c] sm:$0xf] %v1024
      %1057 = vst [vmem:[%s426 + $0x20] sm:$0xf] %v1025
      %1058 = vst [vmem:[%s426 + $0x24] sm:$0xf] %v1026
      %1059 = vst [vmem:[%s426 + $0x28] sm:$0xf] %v1027
      %1060 = vst [vmem:[%s426 + $0x2c] sm:$0xf] %v1028
      %1061 = vst [vmem:[%s426 + $0x30] sm:$0xf] %v1029
      %1062 = vst [vmem:[%s426 + $0x34] sm:$0xf] %v1030
      %1063 = vst [vmem:[%s426 + $0x38] sm:$0xf] %v1031
      %1064 = vst [vmem:[%s426 + $0x3c] sm:$0xf] %v1032
      %1065 = vst [vmem:[%s426 + $0x40] sm:$0xf] %v1033
      %1066 = vst [vmem:[%s426 + $0x44] sm:$0xf] %v1034
      %1067 = vst [vmem:[%s426 + $0x48] sm:$0xf] %v1035
      %1068 = vst [vmem:[%s426 + $0x4c] sm:$0xf] %v1036
      %1069 = vst [vmem:[%s426 + $0x50] sm:$0xf] %v1037
      %1070 = vst [vmem:[%s426 + $0x54] sm:$0xf] %v1038
      %1071 = vst [vmem:[%s426 + $0x58] sm:$0xf] %v1039
      %1072 = vst [vmem:[%s426 + $0x5c] sm:$0xf] %v1040
      %1073 = vst [vmem:[%s426 + $0x60] sm:$0xf] %v1041
      %1074 = vst [vmem:[%s426 + $0x64] sm:$0xf] %v1042
      %1075 = vst [vmem:[%s426 + $0x68] sm:$0xf] %v1043
      %1076 = vst [vmem:[%s426 + $0x6c] sm:$0xf] %v1044
      %1077 = vst [vmem:[%s426 + $0x70] sm:$0xf] %v1045
      %1078 = vst [vmem:[%s426 + $0x74] sm:$0xf] %v1046
      %1079 = vst [vmem:[%s426 + $0x78] sm:$0xf] %v1047
      %1080 = vst [vmem:[%s426 + $0x7c] sm:$0xf] %v1048
      %s1081 = smul.u32 32, %s25
      %p1082 = scmp.lt.s32.totalorder %s24, 1
      %s1083 = scalar_select %p1082, %s24, 1
      %p1084 = scmp.lt.s32.totalorder %s1081, 63
      %s1085 = scalar_select %p1084, %s1081, 63
      %s1086 = smul.addr %s1083, 64
      %s1087 = sadd.s32 %s1085, %s1086
      %s1088 = smul.addr %s1087, 4
      %s1089 = scalar_lea.vmem %s6, %s1088
      %s1090 = smul.u32 32, %s25
      %p1091 = scmp.lt.s32.totalorder %s24, 1
      %s1092 = scalar_select %p1091, %s24, 1
      %p1093 = scmp.lt.s32.totalorder %s1090, 63
      %s1094 = scalar_select %p1093, %s1090, 63
      %s1095 = smul.addr %s1092, 64
      %s1096 = sadd.s32 %s1094, %s1095
      %s1097 = smul.addr %s1096, 4
      %s1098 = scalar_lea.vmem %s7, %s1097
      %s1099 = smul.u32 32, %s25
      %p1100 = scmp.lt.s32.totalorder %s24, 1
      %s1101 = scalar_select %p1100, %s24, 1
      %p1102 = scmp.lt.s32.totalorder %s1099, 63
      %s1103 = scalar_select %p1102, %s1099, 63
      %s1104 = smul.addr %s1101, 64
      %s1105 = sadd.s32 %s1103, %s1104
      %s1106 = smul.addr %s1105, 4
      %s1107 = scalar_lea.vmem %s8, %s1106
      // Predicated region
      $region45: #{cross_attention_3d.2} parent=43 // pred_check
        %p1108 = pneg %p192
      $region46: #{cross_attention_3d.2} parent=43 // pred_check_branch
        %1110 = sbr.rel (%p1108) target = $region48
      $region47: #{cross_attention_3d.2} parent=43 // pred_region
        %s1111 = smul.u32 32, %s25
      $region48: #{cross_attention_3d.2} parent=43 // pred_fallthru
        _
      // Predicated region
      $region49: #{cross_attention_3d.2} parent=43 // pred_check
        %p1112 = pneg %p220
      $region50: #{cross_attention_3d.2} parent=43 // pred_check_branch
        %1114 = sbr.rel (%p1112) target = $region52
      $region51: #{cross_attention_3d.2} parent=43 // pred_region
        %s1115 = smul.u32 32, %s25
      $region52: #{cross_attention_3d.2} parent=43 // pred_fallthru
        _
      // Predicated region
      $region53: #{cross_attention_3d.2} parent=43 // pred_check
        %p1116 = pneg %p248
      $region54: #{cross_attention_3d.2} parent=43 // pred_check_branch
        %1118 = sbr.rel (%p1116) target = $region56
      $region55: #{cross_attention_3d.2} parent=43 // pred_region
        %s1119 = smul.u32 32, %s25
      $region56: #{cross_attention_3d.2} parent=43 // pred_fallthru
        _
    $region44: #{cross_attention_3d.2} parent=5 // pred_fallthru
      _
    %p1120 = scmp.le.s32.totalorder 2, %s15
    // Predicated region
    $region57: #{cross_attention_3d.2} parent=5 // pred_check
      %p1121 = pneg %p1120
    $region58: #{cross_attention_3d.2} parent=5 // pred_check_branch
      %1123 = sbr.rel (%p1121) target = $region60
    $region59: #{cross_attention_3d.2} parent=5 // pred_region
      %s1124 = ssub.s32 %s15, 2
      // Predicated region
      $region61: #{cross_attention_3d.2} parent=59 // pred_check
        %p1125 = pneg %p198
      $region62: #{cross_attention_3d.2} parent=59 // pred_check_branch
        %1127 = sbr.rel (%p1125) target = $region64
      $region63: #{cross_attention_3d.2} parent=59 // pred_region
        %s1128 = smul.u32 32, %s27
        %p1129 = scmp.lt.s32.totalorder %s26, 1
        %s1130 = scalar_select %p1129, %s26, 1
        %p1131 = scmp.lt.s32.totalorder %s1128, 63
        %s1132 = scalar_select %p1131, %s1128, 63
        %s1133 = smul.addr %s1130, 64
        %s1134 = sadd.s32 %s1132, %s1133
        %s1135 = smul.addr %s1134, 4
        %s1136 = scalar_lea.vmem %s6, %s1135
      $region64: #{cross_attention_3d.2} parent=59 // pred_fallthru
        _
      // Predicated region
      $region65: #{cross_attention_3d.2} parent=59 // pred_check
        %p1137 = pneg %p226
      $region66: #{cross_attention_3d.2} parent=59 // pred_check_branch
        %1139 = sbr.rel (%p1137) target = $region68
      $region67: #{cross_attention_3d.2} parent=59 // pred_region
        %s1140 = smul.u32 32, %s27
        %p1141 = scmp.lt.s32.totalorder %s26, 1
        %s1142 = scalar_select %p1141, %s26, 1
        %p1143 = scmp.lt.s32.totalorder %s1140, 63
        %s1144 = scalar_select %p1143, %s1140, 63
        %s1145 = smul.addr %s1142, 64
        %s1146 = sadd.s32 %s1144, %s1145
        %s1147 = smul.addr %s1146, 4
        %s1148 = scalar_lea.vmem %s7, %s1147
      $region68: #{cross_attention_3d.2} parent=59 // pred_fallthru
        _
      // Predicated region
      $region69: #{cross_attention_3d.2} parent=59 // pred_check
        %p1149 = pneg %p254
      $region70: #{cross_attention_3d.2} parent=59 // pred_check_branch
        %1151 = sbr.rel (%p1149) target = $region72
      $region71: #{cross_attention_3d.2} parent=59 // pred_region
        %s1152 = smul.u32 32, %s27
        %p1153 = scmp.lt.s32.totalorder %s26, 1
        %s1154 = scalar_select %p1153, %s26, 1
        %p1155 = scmp.lt.s32.totalorder %s1152, 63
        %s1156 = scalar_select %p1155, %s1152, 63
        %s1157 = smul.addr %s1154, 64
        %s1158 = sadd.s32 %s1156, %s1157
        %s1159 = smul.addr %s1158, 4
        %s1160 = scalar_lea.vmem %s8, %s1159
      $region72: #{cross_attention_3d.2} parent=59 // pred_fallthru
        _
    $region60: #{cross_attention_3d.2} parent=5 // pred_fallthru
      _
  $region6: #{cross_attention_3d.2} parent=0 // loop_footer
    %s19 = sadd.s32 1, %s15
  $region7: #{cross_attention_3d.2} parent=0 // loop_footer_branch
    %14 = sbr.rel target = $region3
  $region8: #{cross_attention_3d.2} parent=0 // loop_exit
    _

// kernel: cross_attention_3d.3
$region0: #{cross_attention_3d.3}
  #allocation0 [shape = 'u32[]', space=smem, size = 0x4, offset = 0x4, fixed_abs, tag = 'smem constant byte address 0x4 - core index']
  #allocation1 [shape = 'u32[72,128]{1,0:T(1,128)}', space=vmem, size = 0x9000, scoped, tag = 'internal scratch']
  #allocation2 [shape = 'f32[256,1]{1,0:T(8,128)}', space=vmem, size = 0x20000, scoped, tag = 'scratch operand']
  #allocation3 [shape = 'f32[256,1]{1,0:T(8,128)}', space=vmem, size = 0x20000, scoped, tag = 'scratch operand']
  #allocation4 [shape = 'f32[256,128]{1,0:T(8,128)}', space=vmem, size = 0x20000, scoped, tag = 'scratch operand']
  %s0 = inlined_call_operand.vmem [shape: bf16[2,512,128], index: 0, kind: input, shape index: {}]
  %s1 = inlined_call_operand.vmem [shape: bf16[2,512,128], index: 1, kind: input, shape index: {}]
  %s2 = inlined_call_operand.vmem [shape: bf16[2,512,128], index: 2, kind: input, shape index: {}]
  %s3 = inlined_call_operand.vmem [shape: f32[128,128], index: 3, kind: input, shape index: {}]
  %s4 = inlined_call_operand.vmem [shape: f32[1,128], index: 4, kind: input, shape index: {}]
  %s5 = inlined_call_operand.vmem [shape: f32[2,512,128], index: 5, kind: output, shape index: {}]
  %s6 = sld [smem:[#allocation0]]
  $region61: #{cross_attention_3d.3} parent=0
    _
  %s8 = ssub.s32 1, %s6
  %s9 = scalar_select 0, %s8, %s6
  loop: start=0, step=1, limit=10
  $region2: #{cross_attention_3d.3} parent=0 // loop_pre_header
    _
  $region3: #{cross_attention_3d.3} parent=0 // loop_header
    %s11 = sphi 0, %s15
    %p12 = scmp.ge.s32.totalorder %s11, 10
    %s18 = sphi 0, %s37
    %s19 = sphi 0, %s33
    %s20 = sphi 0, %s29
    %s21 = sphi 0, %s18
    %s22 = sphi 0, %s19
    %s23 = sphi 0, %s20
    %s24 = sphi 0, %s21
    %s25 = sphi 0, %s22
    %s26 = sphi 0, %s23
    %s42 = sphi 0, %s44
    %s45 = sphi 0, %s42
    %s46 = sphi 0, %s45
    %s62 = sphi 0, %s46
    %s70 = sphi 0, %s72
    %s73 = sphi 0, %s70
    %s74 = sphi 0, %s73
    %s90 = sphi 0, %s74
    %s98 = sphi 0, %s100
    %s101 = sphi 0, %s98
    %s102 = sphi 0, %s101
    %s118 = sphi 0, %s102
    %s122 = sphi 0, %s122
    %s124 = sphi 0, %s122
    %s125 = sphi 0, %s124
    %s139 = sphi 0, %s125
    %s143 = sphi 0, %s143
    %s145 = sphi 0, %s143
    %s146 = sphi 0, %s145
    %s160 = sphi 0, %s146
    %s168 = sphi 0, %s170
    %s171 = sphi 0, %s168
    %s172 = sphi 0, %s171
    %s188 = sphi 0, %s172
  $region4: #{cross_attention_3d.3} parent=0 // loop_header_branch
    %14 = sbr.rel (%p12) target = $region8
  $region5: #{cross_attention_3d.3} parent=0 // loop_body
    %s16 = ssub.s32 %s11, 1
    %s17 = ssub.s32 %s11, 2
    %s27 = sadd.s32 1, %s20
    %p28 = scmp.ge.s32.totalorder %s27, 2
    %s29 = scalar_select %p28, 0, %s27
    %s30 = sadd.s32 1, %s19
    %s31 = scalar_select %p28, %s30, %s19
    %p32 = scmp.ge.s32.totalorder %s31, 2
    %s33 = scalar_select %p32, 0, %s31
    %s34 = sadd.s32 1, %s18
    %s35 = scalar_select %p32, %s34, %s18
    %p36 = scmp.ge.s32.totalorder %s35, 2
    %s37 = scalar_select %p36, 0, %s35
    %s38 = ssub.s32 %s18, %s37
    %s39 = ssub.s32 %s19, %s33
    %s40 = sor.u32 %s38, %s39
    %p41 = scmp.eq.s32.totalorder %s40, 0
    %s43 = sadd.s32 %s42, 1
    %s44 = scalar_select %p41, %s42, %s43
    %p47 = pneg %p41
    %p48 = scmp.eq.s32.totalorder %s11, 7
    %p49 = por %p47, %p48
    %p50 = scmp.ne.s32.totalorder %s42, %s45
    %p51 = scmp.eq.s32.totalorder %s11, 0
    %p52 = por %p50, %p51
    %p53 = scmp.ne.s32.totalorder %s42, %s45
    %p54 = scmp.eq.s32.totalorder %s16, 7
    %p55 = por %p53, %p54
    %p56 = scmp.ne.s32.totalorder %s45, %s46
    %p57 = scmp.eq.s32.totalorder %s16, 0
    %p58 = por %p56, %p57
    %p59 = scmp.ne.s32.totalorder %s45, %s46
    %p60 = scmp.eq.s32.totalorder %s17, 7
    %p61 = por %p59, %p60
    %p63 = scmp.ne.s32.totalorder %s46, %s62
    %p64 = scmp.eq.s32.totalorder %s17, 0
    %p65 = por %p63, %p64
    %s66 = ssub.s32 %s18, %s37
    %s67 = ssub.s32 %s20, %s29
    %s68 = sor.u32 %s66, %s67
    %p69 = scmp.eq.s32.totalorder %s68, 0
    %s71 = sadd.s32 %s70, 1
    %s72 = scalar_select %p69, %s70, %s71
    %p75 = pneg %p69
    %p76 = scmp.eq.s32.totalorder %s11, 7
    %p77 = por %p75, %p76
    %p78 = scmp.ne.s32.totalorder %s70, %s73
    %p79 = scmp.eq.s32.totalorder %s11, 0
    %p80 = por %p78, %p79
    %p81 = scmp.ne.s32.totalorder %s70, %s73
    %p82 = scmp.eq.s32.totalorder %s16, 7
    %p83 = por %p81, %p82
    %p84 = scmp.ne.s32.totalorder %s73, %s74
    %p85 = scmp.eq.s32.totalorder %s16, 0
    %p86 = por %p84, %p85
    %p87 = scmp.ne.s32.totalorder %s73, %s74
    %p88 = scmp.eq.s32.totalorder %s17, 7
    %p89 = por %p87, %p88
    %p91 = scmp.ne.s32.totalorder %s74, %s90
    %p92 = scmp.eq.s32.totalorder %s17, 0
    %p93 = por %p91, %p92
    %s94 = ssub.s32 %s18, %s37
    %s95 = ssub.s32 %s20, %s29
    %s96 = sor.u32 %s94, %s95
    %p97 = scmp.eq.s32.totalorder %s96, 0
    %s99 = sadd.s32 %s98, 1
    %s100 = scalar_select %p97, %s98, %s99
    %p103 = pneg %p97
    %p104 = scmp.eq.s32.totalorder %s11, 7
    %p105 = por %p103, %p104
    %p106 = scmp.ne.s32.totalorder %s98, %s101
    %p107 = scmp.eq.s32.totalorder %s11, 0
    %p108 = por %p106, %p107
    %p109 = scmp.ne.s32.totalorder %s98, %s101
    %p110 = scmp.eq.s32.totalorder %s16, 7
    %p111 = por %p109, %p110
    %p112 = scmp.ne.s32.totalorder %s101, %s102
    %p113 = scmp.eq.s32.totalorder %s16, 0
    %p114 = por %p112, %p113
    %p115 = scmp.ne.s32.totalorder %s101, %s102
    %p116 = scmp.eq.s32.totalorder %s17, 7
    %p117 = por %p115, %p116
    %p119 = scmp.ne.s32.totalorder %s102, %s118
    %p120 = scmp.eq.s32.totalorder %s17, 0
    %p121 = por %p119, %p120
    %s123 = sadd.s32 %s122, 1
    %p126 = scmp.eq.s32.totalorder %s11, 7
    %p127 = scmp.ne.s32.totalorder %s122, %s124
    %p128 = scmp.eq.s32.totalorder %s11, 0
    %p129 = por %p127, %p128
    %p130 = scmp.ne.s32.totalorder %s122, %s124
    %p131 = scmp.eq.s32.totalorder %s16, 7
    %p132 = por %p130, %p131
    %p133 = scmp.ne.s32.totalorder %s124, %s125
    %p134 = scmp.eq.s32.totalorder %s16, 0
    %p135 = por %p133, %p134
    %p136 = scmp.ne.s32.totalorder %s124, %s125
    %p137 = scmp.eq.s32.totalorder %s17, 7
    %p138 = por %p136, %p137
    %p140 = scmp.ne.s32.totalorder %s125, %s139
    %p141 = scmp.eq.s32.totalorder %s17, 0
    %p142 = por %p140, %p141
    %s144 = sadd.s32 %s143, 1
    %p147 = scmp.eq.s32.totalorder %s11, 7
    %p148 = scmp.ne.s32.totalorder %s143, %s145
    %p149 = scmp.eq.s32.totalorder %s11, 0
    %p150 = por %p148, %p149
    %p151 = scmp.ne.s32.totalorder %s143, %s145
    %p152 = scmp.eq.s32.totalorder %s16, 7
    %p153 = por %p151, %p152
    %p154 = scmp.ne.s32.totalorder %s145, %s146
    %p155 = scmp.eq.s32.totalorder %s16, 0
    %p156 = por %p154, %p155
    %p157 = scmp.ne.s32.totalorder %s145, %s146
    %p158 = scmp.eq.s32.totalorder %s17, 7
    %p159 = por %p157, %p158
    %p161 = scmp.ne.s32.totalorder %s146, %s160
    %p162 = scmp.eq.s32.totalorder %s17, 0
    %p163 = por %p161, %p162
    %s164 = ssub.s32 %s18, %s37
    %s165 = ssub.s32 %s19, %s33
    %s166 = sor.u32 %s164, %s165
    %p167 = scmp.eq.s32.totalorder %s166, 0
    %s169 = sadd.s32 %s168, 1
    %s170 = scalar_select %p167, %s168, %s169
    %p173 = pneg %p167
    %p174 = scmp.eq.s32.totalorder %s11, 7
    %p175 = por %p173, %p174
    %p176 = scmp.ne.s32.totalorder %s168, %s171
    %p177 = scmp.eq.s32.totalorder %s11, 0
    %p178 = por %p176, %p177
    %p179 = scmp.ne.s32.totalorder %s168, %s171
    %p180 = scmp.eq.s32.totalorder %s16, 7
    %p181 = por %p179, %p180
    %p182 = scmp.ne.s32.totalorder %s171, %s172
    %p183 = scmp.eq.s32.totalorder %s16, 0
    %p184 = por %p182, %p183
    %p185 = scmp.ne.s32.totalorder %s171, %s172
    %p186 = scmp.eq.s32.totalorder %s17, 7
    %p187 = por %p185, %p186
    %p189 = scmp.ne.s32.totalorder %s172, %s188
    %p190 = scmp.eq.s32.totalorder %s17, 0
    %p191 = por %p189, %p190
    %p192 = scmp.le.s32.totalorder 1, %s11
    %p193 = scmp.lt.s32.totalorder %s11, 9
    %p194 = pnand %p192, %p193
    %p195 = pneg %p194
    // Predicated region
    $region9: #{cross_attention_3d.3} parent=5 // pred_check
      _
    $region10: #{cross_attention_3d.3} parent=5 // pred_check_branch
      %197 = sbr.rel (%p194) target = $region12
    $region11: #{cross_attention_3d.3} parent=5 // pred_region
      %s198 = ssub.s32 %s11, 1
      // Predicated region
      $region13: #{cross_attention_3d.3} parent=11 // pred_check
        %p199 = pneg %p135
      $region14: #{cross_attention_3d.3} parent=11 // pred_check_branch
        %201 = sbr.rel (%p199) target = $region16
      $region15: #{cross_attention_3d.3} parent=11 // pred_region
        _
      $region16: #{cross_attention_3d.3} parent=11 // pred_fallthru
        _
      // Predicated region
      $region17: #{cross_attention_3d.3} parent=11 // pred_check
        %p202 = pneg %p156
      $region18: #{cross_attention_3d.3} parent=11 // pred_check_branch
        %204 = sbr.rel (%p202) target = $region20
      $region19: #{cross_attention_3d.3} parent=11 // pred_region
        _
      $region20: #{cross_attention_3d.3} parent=11 // pred_fallthru
        _
    $region12: #{cross_attention_3d.3} parent=5 // pred_fallthru
      _
    %p205 = scmp.lt.s32.totalorder %s11, 8
    // Predicated region
    $region21: #{cross_attention_3d.3} parent=5 // pred_check
      %p206 = pneg %p205
    $region22: #{cross_attention_3d.3} parent=5 // pred_check_branch
      %208 = sbr.rel (%p206) target = $region24
    $region23: #{cross_attention_3d.3} parent=5 // pred_region
      // Predicated region
      $region25: #{cross_attention_3d.3} parent=23 // pred_check
        %p209 = pneg %p52
      $region26: #{cross_attention_3d.3} parent=23 // pred_check_branch
        %211 = sbr.rel (%p209) target = $region28
      $region27: #{cross_attention_3d.3} parent=23 // pred_region
        %s212 = smul.u32 32, %s19
        %p213 = scmp.lt.s32.totalorder %s18, 1
        %s214 = scalar_select %p213, %s18, 1
        %p215 = scmp.lt.s32.totalorder %s212, 63
        %s216 = scalar_select %p215, %s212, 63
        %s217 = smul.addr %s214, 64
        %s218 = sadd.s32 %s216, %s217
        %s219 = smul.addr %s218, 4
        %s220 = scalar_lea.vmem %s0, %s219
        %s221 = smul.u32 32, %s19
      $region28: #{cross_attention_3d.3} parent=23 // pred_fallthru
        _
      // Predicated region
      $region29: #{cross_attention_3d.3} parent=23 // pred_check
        %p222 = pneg %p80
      $region30: #{cross_attention_3d.3} parent=23 // pred_check_branch
        %224 = sbr.rel (%p222) target = $region32
      $region31: #{cross_attention_3d.3} parent=23 // pred_region
        %s225 = smul.u32 32, %s20
        %p226 = scmp.lt.s32.totalorder %s18, 1
        %s227 = scalar_select %p226, %s18, 1
        %p228 = scmp.lt.s32.totalorder %s225, 63
        %s229 = scalar_select %p228, %s225, 63
        %s230 = smul.addr %s227, 64
        %s231 = sadd.s32 %s229, %s230
        %s232 = smul.addr %s231, 4
        %s233 = scalar_lea.vmem %s1, %s232
        %s234 = smul.u32 32, %s20
      $region32: #{cross_attention_3d.3} parent=23 // pred_fallthru
        _
      // Predicated region
      $region33: #{cross_attention_3d.3} parent=23 // pred_check
        %p235 = pneg %p108
      $region34: #{cross_attention_3d.3} parent=23 // pred_check_branch
        %237 = sbr.rel (%p235) target = $region36
      $region35: #{cross_attention_3d.3} parent=23 // pred_region
        %s238 = smul.u32 32, %s20
        %p239 = scmp.lt.s32.totalorder %s18, 1
        %s240 = scalar_select %p239, %s18, 1
        %p241 = scmp.lt.s32.totalorder %s238, 63
        %s242 = scalar_select %p241, %s238, 63
        %s243 = smul.addr %s240, 64
        %s244 = sadd.s32 %s242, %s243
        %s245 = smul.addr %s244, 4
        %s246 = scalar_lea.vmem %s2, %s245
        %s247 = smul.u32 32, %s20
      $region36: #{cross_attention_3d.3} parent=23 // pred_fallthru
        _
    $region24: #{cross_attention_3d.3} parent=5 // pred_fallthru
      _
    %p248 = scmp.le.s32.totalorder 1, %s11
    %p249 = scmp.lt.s32.totalorder %s11, 9
    %p250 = pnand %p248, %p249
    %p251 = pneg %p250
    // Predicated region
    $region37: #{cross_attention_3d.3} parent=5 // pred_check
      _
    $region38: #{cross_attention_3d.3} parent=5 // pred_check_branch
      %253 = sbr.rel (%p250) target = $region40
    $region39: #{cross_attention_3d.3} parent=5 // pred_region
      %s254 = ssub.s32 %s11, 1
      %s255 = smul.u32 32, %s22
      %p256 = scmp.lt.s32.totalorder %s21, 1
      %s257 = scalar_select %p256, %s21, 1
      %p258 = scmp.lt.s32.totalorder %s255, 63
      %s259 = scalar_select %p258, %s255, 63
      %s260 = smul.addr %s257, 64
      %s261 = sadd.s32 %s259, %s260
      %s262 = smul.addr %s261, 4
      %s263 = scalar_lea.vmem %s0, %s262
      %p264 = pneg %p58
      %p265 = pneg %p55
      %s266 = smul.u32 32, %s23
      %p267 = scmp.lt.s32.totalorder %s21, 1
      %s268 = scalar_select %p267, %s21, 1
      %p269 = scmp.lt.s32.totalorder %s266, 63
      %s270 = scalar_select %p269, %s266, 63
      %s271 = smul.addr %s268, 64
      %s272 = sadd.s32 %s270, %s271
      %s273 = smul.addr %s272, 4
      %s274 = scalar_lea.vmem %s1, %s273
      %p275 = pneg %p86
      %p276 = pneg %p83
      %s277 = smul.u32 32, %s23
      %p278 = scmp.lt.s32.totalorder %s21, 1
      %s279 = scalar_select %p278, %s21, 1
      %p280 = scmp.lt.s32.totalorder %s277, 63
      %s281 = scalar_select %p280, %s277, 63
      %s282 = smul.addr %s279, 64
      %s283 = sadd.s32 %s281, %s282
      %s284 = smul.addr %s283, 4
      %s285 = scalar_lea.vmem %s2, %s284
      %p286 = pneg %p114
      %p287 = pneg %p111
      %p288 = pneg %p135
      %p289 = pneg %p132
      %p290 = pneg %p156
      %p291 = pneg %p153
      %p292 = pneg %p184
      %p293 = pneg %p181
      %s294 = smul.u32 32, %s22
      %p295 = scmp.lt.s32.totalorder %s21, 1
      %s296 = scalar_select %p295, %s21, 1
      %p297 = scmp.lt.s32.totalorder %s294, 63
      %s298 = scalar_select %p297, %s294, 63
      %s299 = smul.addr %s296, 64
      %s300 = sadd.s32 %s298, %s299
      %s301 = smul.addr %s300, 8
      %s302 = scalar_lea.vmem %s5, %s301
      %s303 = smul.u32 32, %s22
      %p304 = scmp.lt.s32.totalorder %s21, 1
      %s305 = scalar_select %p304, %s21, 1
      %p306 = scmp.lt.s32.totalorder %s303, 63
      %s307 = scalar_select %p306, %s303, 63
      %s308 = smul.addr %s305, 64
      %s309 = sadd.s32 %s307, %s308
      %s310 = smul.addr %s309, 4
      %s311 = scalar_lea.vmem %s0, %s310
      %s312 = smul.u32 32, %s22
      %s313 = smul.u32 32, %s23
      %p314 = scmp.lt.s32.totalorder %s21, 1
      %s315 = scalar_select %p314, %s21, 1
      %p316 = scmp.lt.s32.totalorder %s313, 63
      %s317 = scalar_select %p316, %s313, 63
      %s318 = smul.addr %s315, 64
      %s319 = sadd.s32 %s317, %s318
      %s320 = smul.addr %s319, 4
      %s321 = scalar_lea.vmem %s1, %s320
      %s322 = smul.u32 32, %s23
      %s323 = smul.u32 32, %s23
      %p324 = scmp.lt.s32.totalorder %s21, 1
      %s325 = scalar_select %p324, %s21, 1
      %p326 = scmp.lt.s32.totalorder %s323, 63
      %s327 = scalar_select %p326, %s323, 63
      %s328 = smul.addr %s325, 64
      %s329 = sadd.s32 %s327, %s328
      %s330 = smul.addr %s329, 4
      %s331 = scalar_lea.vmem %s2, %s330
      %s332 = smul.u32 32, %s23
      %s333 = smul.u32 32, %s22
      %p334 = scmp.lt.s32.totalorder %s21, 1
      %s335 = scalar_select %p334, %s21, 1
      %p336 = scmp.lt.s32.totalorder %s333, 63
      %s337 = scalar_select %p336, %s333, 63
      %s338 = smul.addr %s335, 64
      %s339 = sadd.s32 %s337, %s338
      %s340 = smul.addr %s339, 8
      %s341 = scalar_lea.vmem %s5, %s340
      %s342 = smul.u32 32, %s22
      %p343 = scmp.eq.s32.totalorder %s23, 0
      // Predicated region
      $region41: #{cross_attention_3d.3} parent=39 // pred_check
        %p344 = pneg %p343
      $region42: #{cross_attention_3d.3} parent=39 // pred_check_branch
        %346 = sbr.rel (%p344) target = $region44
      $region43: #{cross_attention_3d.3} parent=39 // pred_region
        %vm347 = vcmask 7168
        %348 = vst.msk [vmem:[#allocation2] sm:$0xff] %vm347, -1e+30
        %349 = vst.msk [vmem:[#allocation2 + $0x8] sm:$0xff] %vm347, -1e+30
        %350 = vst.msk [vmem:[#allocation2 + $0x10] sm:$0xff] %vm347, -1e+30
        %351 = vst.msk [vmem:[#allocation2 + $0x18] sm:$0xff] %vm347, -1e+30
        %352 = vst.msk [vmem:[#allocation2 + $0x20] sm:$0xff] %vm347, -1e+30
        %353 = vst.msk [vmem:[#allocation2 + $0x28] sm:$0xff] %vm347, -1e+30
        %354 = vst.msk [vmem:[#allocation2 + $0x30] sm:$0xff] %vm347, -1e+30
        %355 = vst.msk [vmem:[#allocation2 + $0x38] sm:$0xff] %vm347, -1e+30
        %356 = vst.msk [vmem:[#allocation2 + $0x40] sm:$0xff] %vm347, -1e+30
        %357 = vst.msk [vmem:[#allocation2 + $0x48] sm:$0xff] %vm347, -1e+30
        %358 = vst.msk [vmem:[#allocation2 + $0x50] sm:$0xff] %vm347, -1e+30
        %359 = vst.msk [vmem:[#allocation2 + $0x58] sm:$0xff] %vm347, -1e+30
        %360 = vst.msk [vmem:[#allocation2 + $0x60] sm:$0xff] %vm347, -1e+30
        %361 = vst.msk [vmem:[#allocation2 + $0x68] sm:$0xff] %vm347, -1e+30
        %362 = vst.msk [vmem:[#allocation2 + $0x70] sm:$0xff] %vm347, -1e+30
        %363 = vst.msk [vmem:[#allocation2 + $0x78] sm:$0xff] %vm347, -1e+30
        %364 = vst.msk [vmem:[#allocation2 + $0x80] sm:$0xff] %vm347, -1e+30
        %365 = vst.msk [vmem:[#allocation2 + $0x88] sm:$0xff] %vm347, -1e+30
        %366 = vst.msk [vmem:[#allocation2 + $0x90] sm:$0xff] %vm347, -1e+30
        %367 = vst.msk [vmem:[#allocation2 + $0x98] sm:$0xff] %vm347, -1e+30
        %368 = vst.msk [vmem:[#allocation2 + $0xa0] sm:$0xff] %vm347, -1e+30
        %369 = vst.msk [vmem:[#allocation2 + $0xa8] sm:$0xff] %vm347, -1e+30
        %370 = vst.msk [vmem:[#allocation2 + $0xb0] sm:$0xff] %vm347, -1e+30
        %371 = vst.msk [vmem:[#allocation2 + $0xb8] sm:$0xff] %vm347, -1e+30
        %372 = vst.msk [vmem:[#allocation2 + $0xc0] sm:$0xff] %vm347, -1e+30
        %373 = vst.msk [vmem:[#allocation2 + $0xc8] sm:$0xff] %vm347, -1e+30
        %374 = vst.msk [vmem:[#allocation2 + $0xd0] sm:$0xff] %vm347, -1e+30
        %375 = vst.msk [vmem:[#allocation2 + $0xd8] sm:$0xff] %vm347, -1e+30
        %376 = vst.msk [vmem:[#allocation2 + $0xe0] sm:$0xff] %vm347, -1e+30
        %377 = vst.msk [vmem:[#allocation2 + $0xe8] sm:$0xff] %vm347, -1e+30
        %378 = vst.msk [vmem:[#allocation2 + $0xf0] sm:$0xff] %vm347, -1e+30
        %379 = vst.msk [vmem:[#allocation2 + $0xf8] sm:$0xff] %vm347, -1e+30
        %380 = vst.msk [vmem:[#allocation3] sm:$0xff] %vm347, 0.0
        %381 = vst.msk [vmem:[#allocation3 + $0x8] sm:$0xff] %vm347, 0.0
        %382 = vst.msk [vmem:[#allocation3 + $0x10] sm:$0xff] %vm347, 0.0
        %383 = vst.msk [vmem:[#allocation3 + $0x18] sm:$0xff] %vm347, 0.0
        %384 = vst.msk [vmem:[#allocation3 + $0x20] sm:$0xff] %vm347, 0.0
        %385 = vst.msk [vmem:[#allocation3 + $0x28] sm:$0xff] %vm347, 0.0
        %386 = vst.msk [vmem:[#allocation3 + $0x30] sm:$0xff] %vm347, 0.0
        %387 = vst.msk [vmem:[#allocation3 + $0x38] sm:$0xff] %vm347, 0.0
        %388 = vst.msk [vmem:[#allocation3 + $0x40] sm:$0xff] %vm347, 0.0
        %389 = vst.msk [vmem:[#allocation3 + $0x48] sm:$0xff] %vm347, 0.0
        %390 = vst.msk [vmem:[#allocation3 + $0x50] sm:$0xff] %vm347, 0.0
        %391 = vst.msk [vmem:[#allocation3 + $0x58] sm:$0xff] %vm347, 0.0
        %392 = vst.msk [vmem:[#allocation3 + $0x60] sm:$0xff] %vm347, 0.0
        %393 = vst.msk [vmem:[#allocation3 + $0x68] sm:$0xff] %vm347, 0.0
        %394 = vst.msk [vmem:[#allocation3 + $0x70] sm:$0xff] %vm347, 0.0
        %395 = vst.msk [vmem:[#allocation3 + $0x78] sm:$0xff] %vm347, 0.0
        %396 = vst.msk [vmem:[#allocation3 + $0x80] sm:$0xff] %vm347, 0.0
        %397 = vst.msk [vmem:[#allocation3 + $0x88] sm:$0xff] %vm347, 0.0
        %398 = vst.msk [vmem:[#allocation3 + $0x90] sm:$0xff] %vm347, 0.0
        %399 = vst.msk [vmem:[#allocation3 + $0x98] sm:$0xff] %vm347, 0.0
        %400 = vst.msk [vmem:[#allocation3 + $0xa0] sm:$0xff] %vm347, 0.0
        %401 = vst.msk [vmem:[#allocation3 + $0xa8] sm:$0xff] %vm347, 0.0
        %402 = vst.msk [vmem:[#allocation3 + $0xb0] sm:$0xff] %vm347, 0.0
        %403 = vst.msk [vmem:[#allocation3 + $0xb8] sm:$0xff] %vm347, 0.0
        %404 = vst.msk [vmem:[#allocation3 + $0xc0] sm:$0xff] %vm347, 0.0
        %405 = vst.msk [vmem:[#allocation3 + $0xc8] sm:$0xff] %vm347, 0.0
        %406 = vst.msk [vmem:[#allocation3 + $0xd0] sm:$0xff] %vm347, 0.0
        %407 = vst.msk [vmem:[#allocation3 + $0xd8] sm:$0xff] %vm347, 0.0
        %408 = vst.msk [vmem:[#allocation3 + $0xe0] sm:$0xff] %vm347, 0.0
        %409 = vst.msk [vmem:[#allocation3 + $0xe8] sm:$0xff] %vm347, 0.0
        %410 = vst.msk [vmem:[#allocation3 + $0xf0] sm:$0xff] %vm347, 0.0
        %411 = vst.msk [vmem:[#allocation3 + $0xf8] sm:$0xff] %vm347, 0.0
        %412 = vst [vmem:[#allocation4] sm:$0xff] 0.0
        %413 = vst [vmem:[#allocation4 + $0x8] sm:$0xff] 0.0
        %414 = vst [vmem:[#allocation4 + $0x10] sm:$0xff] 0.0
        %415 = vst [vmem:[#allocation4 + $0x18] sm:$0xff] 0.0
        %416 = vst [vmem:[#allocation4 + $0x20] sm:$0xff] 0.0
        %417 = vst [vmem:[#allocation4 + $0x28] sm:$0xff] 0.0
        %418 = vst [vmem:[#allocation4 + $0x30] sm:$0xff] 0.0
        %419 = vst [vmem:[#allocation4 + $0x38] sm:$0xff] 0.0
        %420 = vst [vmem:[#allocation4 + $0x40] sm:$0xff] 0.0
        %421 = vst [vmem:[#allocation4 + $0x48] sm:$0xff] 0.0
        %422 = vst [vmem:[#allocation4 + $0x50] sm:$0xff] 0.0
        %423 = vst [vmem:[#allocation4 + $0x58] sm:$0xff] 0.0
        %424 = vst [vmem:[#allocation4 + $0x60] sm:$0xff] 0.0
        %425 = vst [vmem:[#allocation4 + $0x68] sm:$0xff] 0.0
        %426 = vst [vmem:[#allocation4 + $0x70] sm:$0xff] 0.0
        %427 = vst [vmem:[#allocation4 + $0x78] sm:$0xff] 0.0
        %428 = vst [vmem:[#allocation4 + $0x80] sm:$0xff] 0.0
        %429 = vst [vmem:[#allocation4 + $0x88] sm:$0xff] 0.0
        %430 = vst [vmem:[#allocation4 + $0x90] sm:$0xff] 0.0
        %431 = vst [vmem:[#allocation4 + $0x98] sm:$0xff] 0.0
        %432 = vst [vmem:[#allocation4 + $0xa0] sm:$0xff] 0.0
        %433 = vst [vmem:[#allocation4 + $0xa8] sm:$0xff] 0.0
        %434 = vst [vmem:[#allocation4 + $0xb0] sm:$0xff] 0.0
        %435 = vst [vmem:[#allocation4 + $0xb8] sm:$0xff] 0.0
        %436 = vst [vmem:[#allocation4 + $0xc0] sm:$0xff] 0.0
        %437 = vst [vmem:[#allocation4 + $0xc8] sm:$0xff] 0.0
        %438 = vst [vmem:[#allocation4 + $0xd0] sm:$0xff] 0.0
        %439 = vst [vmem:[#allocation4 + $0xd8] sm:$0xff] 0.0
        %440 = vst [vmem:[#allocation4 + $0xe0] sm:$0xff] 0.0
        %441 = vst [vmem:[#allocation4 + $0xe8] sm:$0xff] 0.0
        %442 = vst [vmem:[#allocation4 + $0xf0] sm:$0xff] 0.0
        %443 = vst [vmem:[#allocation4 + $0xf8] sm:$0xff] 0.0
      $region44: #{cross_attention_3d.3} parent=39 // pred_fallthru
        _
      %v444 = vld [vmem:[%s311] sm:$0xf]
      %v445 = vld [vmem:[%s311 + $0x4] sm:$0xf]
      %v446 = vld [vmem:[%s311 + $0x8] sm:$0xf]
      %v447 = vld [vmem:[%s311 + $0xc] sm:$0xf]
      %v448 = vld [vmem:[%s311 + $0x10] sm:$0xf]
      %v449 = vld [vmem:[%s311 + $0x14] sm:$0xf]
      %v450 = vld [vmem:[%s311 + $0x18] sm:$0xf]
      %v451 = vld [vmem:[%s311 + $0x1c] sm:$0xf]
      %v452 = vld [vmem:[%s311 + $0x20] sm:$0xf]
      %v453 = vld [vmem:[%s311 + $0x24] sm:$0xf]
      %v454 = vld [vmem:[%s311 + $0x28] sm:$0xf]
      %v455 = vld [vmem:[%s311 + $0x2c] sm:$0xf]
      %v456 = vld [vmem:[%s311 + $0x30] sm:$0xf]
      %v457 = vld [vmem:[%s311 + $0x34] sm:$0xf]
      %v458 = vld [vmem:[%s311 + $0x38] sm:$0xf]
      %v459 = vld [vmem:[%s311 + $0x3c] sm:$0xf]
      %v460 = vld [vmem:[%s311 + $0x40] sm:$0xf]
      %v461 = vld [vmem:[%s311 + $0x44] sm:$0xf]
      %v462 = vld [vmem:[%s311 + $0x48] sm:$0xf]
      %v463 = vld [vmem:[%s311 + $0x4c] sm:$0xf]
      %v464 = vld [vmem:[%s311 + $0x50] sm:$0xf]
      %v465 = vld [vmem:[%s311 + $0x54] sm:$0xf]
      %v466 = vld [vmem:[%s311 + $0x58] sm:$0xf]
      %v467 = vld [vmem:[%s311 + $0x5c] sm:$0xf]
      %v468 = vld [vmem:[%s311 + $0x60] sm:$0xf]
      %v469 = vld [vmem:[%s311 + $0x64] sm:$0xf]
      %v470 = vld [vmem:[%s311 + $0x68] sm:$0xf]
      %v471 = vld [vmem:[%s311 + $0x6c] sm:$0xf]
      %v472 = vld [vmem:[%s311 + $0x70] sm:$0xf]
      %v473 = vld [vmem:[%s311 + $0x74] sm:$0xf]
      %v474 = vld [vmem:[%s311 + $0x78] sm:$0xf]
      %v475 = vld [vmem:[%s311 + $0x7c] sm:$0xf]
      %v476 = vld [vmem:[%s321] sm:$0xf]
      %v477 = vld [vmem:[%s321 + $0x4] sm:$0xf]
      %v478 = vld [vmem:[%s321 + $0x8] sm:$0xf]
      %v479 = vld [vmem:[%s321 + $0xc] sm:$0xf]
      %v480 = vld [vmem:[%s321 + $0x10] sm:$0xf]
      %v481 = vld [vmem:[%s321 + $0x14] sm:$0xf]
      %v482 = vld [vmem:[%s321 + $0x18] sm:$0xf]
      %v483 = vld [vmem:[%s321 + $0x1c] sm:$0xf]
      %v484 = vld [vmem:[%s321 + $0x20] sm:$0xf]
      %v485 = vld [vmem:[%s321 + $0x24] sm:$0xf]
      %v486 = vld [vmem:[%s321 + $0x28] sm:$0xf]
      %v487 = vld [vmem:[%s321 + $0x2c] sm:$0xf]
      %v488 = vld [vmem:[%s321 + $0x30] sm:$0xf]
      %v489 = vld [vmem:[%s321 + $0x34] sm:$0xf]
      %v490 = vld [vmem:[%s321 + $0x38] sm:$0xf]
      %v491 = vld [vmem:[%s321 + $0x3c] sm:$0xf]
      %v492 = vld [vmem:[%s321 + $0x40] sm:$0xf]
      %v493 = vld [vmem:[%s321 + $0x44] sm:$0xf]
      %v494 = vld [vmem:[%s321 + $0x48] sm:$0xf]
      %v495 = vld [vmem:[%s321 + $0x4c] sm:$0xf]
      %v496 = vld [vmem:[%s321 + $0x50] sm:$0xf]
      %v497 = vld [vmem:[%s321 + $0x54] sm:$0xf]
      %v498 = vld [vmem:[%s321 + $0x58] sm:$0xf]
      %v499 = vld [vmem:[%s321 + $0x5c] sm:$0xf]
      %v500 = vld [vmem:[%s321 + $0x60] sm:$0xf]
      %v501 = vld [vmem:[%s321 + $0x64] sm:$0xf]
      %v502 = vld [vmem:[%s321 + $0x68] sm:$0xf]
      %v503 = vld [vmem:[%s321 + $0x6c] sm:$0xf]
      %v504 = vld [vmem:[%s321 + $0x70] sm:$0xf]
      %v505 = vld [vmem:[%s321 + $0x74] sm:$0xf]
      %v506 = vld [vmem:[%s321 + $0x78] sm:$0xf]
      %v507 = vld [vmem:[%s321 + $0x7c] sm:$0xf]
      %v508 = vld [vmem:[%s331] sm:$0xf]
      %v509 = vld [vmem:[%s331 + $0x4] sm:$0xf]
      %v510 = vld [vmem:[%s331 + $0x8] sm:$0xf]
      %v511 = vld [vmem:[%s331 + $0xc] sm:$0xf]
      %v512 = vld [vmem:[%s331 + $0x10] sm:$0xf]
      %v513 = vld [vmem:[%s331 + $0x14] sm:$0xf]
      %v514 = vld [vmem:[%s331 + $0x18] sm:$0xf]
      %v515 = vld [vmem:[%s331 + $0x1c] sm:$0xf]
      %v516 = vld [vmem:[%s331 + $0x20] sm:$0xf]
      %v517 = vld [vmem:[%s331 + $0x24] sm:$0xf]
      %v518 = vld [vmem:[%s331 + $0x28] sm:$0xf]
      %v519 = vld [vmem:[%s331 + $0x2c] sm:$0xf]
      %v520 = vld [vmem:[%s331 + $0x30] sm:$0xf]
      %v521 = vld [vmem:[%s331 + $0x34] sm:$0xf]
      %v522 = vld [vmem:[%s331 + $0x38] sm:$0xf]
      %v523 = vld [vmem:[%s331 + $0x3c] sm:$0xf]
      %v524 = vld [vmem:[%s331 + $0x40] sm:$0xf]
      %v525 = vld [vmem:[%s331 + $0x44] sm:$0xf]
      %v526 = vld [vmem:[%s331 + $0x48] sm:$0xf]
      %v527 = vld [vmem:[%s331 + $0x4c] sm:$0xf]
      %v528 = vld [vmem:[%s331 + $0x50] sm:$0xf]
      %v529 = vld [vmem:[%s331 + $0x54] sm:$0xf]
      %v530 = vld [vmem:[%s331 + $0x58] sm:$0xf]
      %v531 = vld [vmem:[%s331 + $0x5c] sm:$0xf]
      %v532 = vld [vmem:[%s331 + $0x60] sm:$0xf]
      %v533 = vld [vmem:[%s331 + $0x64] sm:$0xf]
      %v534 = vld [vmem:[%s331 + $0x68] sm:$0xf]
      %v535 = vld [vmem:[%s331 + $0x6c] sm:$0xf]
      %v536 = vld [vmem:[%s331 + $0x70] sm:$0xf]
      %v537 = vld [vmem:[%s331 + $0x74] sm:$0xf]
      %v538 = vld [vmem:[%s331 + $0x78] sm:$0xf]
      %v539 = vld [vmem:[%s331 + $0x7c] sm:$0xf]
      %v572 = vunpack.c.l.b16 %v444
      %v573 = vunpack.c.l.b16 %v445
      %v574 = vunpack.c.l.b16 %v446
      %v575 = vunpack.c.l.b16 %v447
      %v576 = vunpack.c.l.b16 %v448
      %v577 = vunpack.c.l.b16 %v449
      %v578 = vunpack.c.l.b16 %v450
      %v579 = vunpack.c.l.b16 %v451
      %v580 = vunpack.c.l.b16 %v452
      %v581 = vunpack.c.l.b16 %v453
      %v582 = vunpack.c.l.b16 %v454
      %v583 = vunpack.c.l.b16 %v455
      %v584 = vunpack.c.l.b16 %v456
      %v585 = vunpack.c.l.b16 %v457
      %v586 = vunpack.c.l.b16 %v458
      %v587 = vunpack.c.l.b16 %v459
      %v588 = vunpack.c.l.b16 %v460
      %v589 = vunpack.c.l.b16 %v461
      %v590 = vunpack.c.l.b16 %v462
      %v591 = vunpack.c.l.b16 %v463
      %v592 = vunpack.c.l.b16 %v464
      %v593 = vunpack.c.l.b16 %v465
      %v594 = vunpack.c.l.b16 %v466
      %v595 = vunpack.c.l.b16 %v467
      %v596 = vunpack.c.l.b16 %v468
      %v597 = vunpack.c.l.b16 %v469
      %v598 = vunpack.c.l.b16 %v470
      %v599 = vunpack.c.l.b16 %v471
      %v600 = vunpack.c.l.b16 %v472
      %v601 = vunpack.c.l.b16 %v473
      %v602 = vunpack.c.l.b16 %v474
      %v603 = vunpack.c.l.b16 %v475
      %v604 = vpack.c.b16 %v573, %v572
      %v605 = vpack.c.b16 %v575, %v574
      %v606 = vpack.c.b16 %v577, %v576
      %v607 = vpack.c.b16 %v579, %v578
      %v608 = vpack.c.b16 %v581, %v580
      %v609 = vpack.c.b16 %v583, %v582
      %v610 = vpack.c.b16 %v585, %v584
      %v611 = vpack.c.b16 %v587, %v586
      %v612 = vpack.c.b16 %v589, %v588
      %v613 = vpack.c.b16 %v591, %v590
      %v614 = vpack.c.b16 %v593, %v592
      %v615 = vpack.c.b16 %v595, %v594
      %v616 = vpack.c.b16 %v597, %v596
      %v617 = vpack.c.b16 %v599, %v598
      %v618 = vpack.c.b16 %v601, %v600
      %v619 = vpack.c.b16 %v603, %v602
      %v668 = vunpack.c.l.b16 %v476
      %v669 = vunpack.c.l.b16 %v477
      %v670 = vunpack.c.l.b16 %v478
      %v671 = vunpack.c.l.b16 %v479
      %v672 = vunpack.c.l.b16 %v480
      %v673 = vunpack.c.l.b16 %v481
      %v674 = vunpack.c.l.b16 %v482
      %v675 = vunpack.c.l.b16 %v483
      %v676 = vunpack.c.l.b16 %v484
      %v677 = vunpack.c.l.b16 %v485
      %v678 = vunpack.c.l.b16 %v486
      %v679 = vunpack.c.l.b16 %v487
      %v680 = vunpack.c.l.b16 %v488
      %v681 = vunpack.c.l.b16 %v489
      %v682 = vunpack.c.l.b16 %v490
      %v683 = vunpack.c.l.b16 %v491
      %v684 = vunpack.c.l.b16 %v492
      %v685 = vunpack.c.l.b16 %v493
      %v686 = vunpack.c.l.b16 %v494
      %v687 = vunpack.c.l.b16 %v495
      %v688 = vunpack.c.l.b16 %v496
      %v689 = vunpack.c.l.b16 %v497
      %v690 = vunpack.c.l.b16 %v498
      %v691 = vunpack.c.l.b16 %v499
      %v692 = vunpack.c.l.b16 %v500
      %v693 = vunpack.c.l.b16 %v501
      %v694 = vunpack.c.l.b16 %v502
      %v695 = vunpack.c.l.b16 %v503
      %v696 = vunpack.c.l.b16 %v504
      %v697 = vunpack.c.l.b16 %v505
      %v698 = vunpack.c.l.b16 %v506
      %v699 = vunpack.c.l.b16 %v507
      %v700 = vpack.c.b16 %v669, %v668
      %v701 = vpack.c.b16 %v671, %v670
      %v702 = vpack.c.b16 %v673, %v672
      %v703 = vpack.c.b16 %v675, %v674
      %v704 = vpack.c.b16 %v677, %v676
      %v705 = vpack.c.b16 %v679, %v678
      %v706 = vpack.c.b16 %v681, %v680
      %v707 = vpack.c.b16 %v683, %v682
      %v708 = vpack.c.b16 %v685, %v684
      %v709 = vpack.c.b16 %v687, %v686
      %v710 = vpack.c.b16 %v689, %v688
      %v711 = vpack.c.b16 %v691, %v690
      %v712 = vpack.c.b16 %v693, %v692
      %v713 = vpack.c.b16 %v695, %v694
      %v714 = vpack.c.b16 %v697, %v696
      %v715 = vpack.c.b16 %v699, %v698
      %732 = vmatpush.bf16.xpose.msra.mxu0 %v707
      %733 = vmatpush.bf16.xpose.msra.mxu0 %v706
      %734 = vmatpush.bf16.xpose.msra.mxu0 %v705
      %735 = vmatpush.bf16.xpose.msra.mxu0 %v704
      %736 = vmatpush.bf16.xpose.msra.mxu0 %v703
      %737 = vmatpush.bf16.xpose.msra.mxu0 %v702
      %738 = vmatpush.bf16.xpose.msra.mxu0 %v701
      %739 = vmatpush.bf16.xpose.msra.mxu0 %v700
      %740 = vmatmul.bf16.gmra.mxu0 %v604
      %v741 = vpop.f32.mrf.mxu0
      %v742 = vadd.f32 0.0, %v741
      %v743 = vpop.f32.mrf.mxu0
      %v744 = vadd.f32 0.0, %v743
      %745 = vmatmul.bf16.gmra.mxu0 %v605
      %v746 = vpop.f32.mrf.mxu0
      %v747 = vadd.f32 0.0, %v746
      %v748 = vpop.f32.mrf.mxu0
      %v749 = vadd.f32 0.0, %v748
      %750 = vmatmul.bf16.gmra.mxu0 %v606
      %v751 = vpop.f32.mrf.mxu0
      %v752 = vadd.f32 0.0, %v751
      %v753 = vpop.f32.mrf.mxu0
      %v754 = vadd.f32 0.0, %v753
      %755 = vmatmul.bf16.gmra.mxu0 %v607
      %v756 = vpop.f32.mrf.mxu0
      %v757 = vadd.f32 0.0, %v756
      %v758 = vpop.f32.mrf.mxu0
      %v759 = vadd.f32 0.0, %v758
      %760 = vmatmul.bf16.gmra.mxu0 %v608
      %v761 = vpop.f32.mrf.mxu0
      %v762 = vadd.f32 0.0, %v761
      %v763 = vpop.f32.mrf.mxu0
      %v764 = vadd.f32 0.0, %v763
      %765 = vmatmul.bf16.gmra.mxu0 %v609
      %v766 = vpop.f32.mrf.mxu0
      %v767 = vadd.f32 0.0, %v766
      %v768 = vpop.f32.mrf.mxu0
      %v769 = vadd.f32 0.0, %v768
      %770 = vmatmul.bf16.gmra.mxu0 %v610
      %v771 = vpop.f32.mrf.mxu0
      %v772 = vadd.f32 0.0, %v771
      %v773 = vpop.f32.mrf.mxu0
      %v774 = vadd.f32 0.0, %v773
      %775 = vmatmul.bf16.gmra.mxu0 %v611
      %v776 = vpop.f32.mrf.mxu0
      %v777 = vadd.f32 0.0, %v776
      %v778 = vpop.f32.mrf.mxu0
      %v779 = vadd.f32 0.0, %v778
      %780 = vmatmul.bf16.gmra.mxu0 %v612
      %v781 = vpop.f32.mrf.mxu0
      %v782 = vadd.f32 0.0, %v781
      %v783 = vpop.f32.mrf.mxu0
      %v784 = vadd.f32 0.0, %v783
      %785 = vmatmul.bf16.gmra.mxu0 %v613
      %v786 = vpop.f32.mrf.mxu0
      %v787 = vadd.f32 0.0, %v786
      %v788 = vpop.f32.mrf.mxu0
      %v789 = vadd.f32 0.0, %v788
      %790 = vmatmul.bf16.gmra.mxu0 %v614
      %v791 = vpop.f32.mrf.mxu0
      %v792 = vadd.f32 0.0, %v791
      %v793 = vpop.f32.mrf.mxu0
      %v794 = vadd.f32 0.0, %v793
      %795 = vmatmul.bf16.gmra.mxu0 %v615
      %v796 = vpop.f32.mrf.mxu0
      %v797 = vadd.f32 0.0, %v796
      %v798 = vpop.f32.mrf.mxu0
      %v799 = vadd.f32 0.0, %v798
      %800 = vmatmul.bf16.gmra.mxu0 %v616
      %v801 = vpop.f32.mrf.mxu0
      %v802 = vadd.f32 0.0, %v801
      %v803 = vpop.f32.mrf.mxu0
      %v804 = vadd.f32 0.0, %v803
      %805 = vmatmul.bf16.gmra.mxu0 %v617
      %v806 = vpop.f32.mrf.mxu0
      %v807 = vadd.f32 0.0, %v806
      %v808 = vpop.f32.mrf.mxu0
      %v809 = vadd.f32 0.0, %v808
      %810 = vmatmul.bf16.gmra.mxu0 %v618
      %v811 = vpop.f32.mrf.mxu0
      %v812 = vadd.f32 0.0, %v811
      %v813 = vpop.f32.mrf.mxu0
      %v814 = vadd.f32 0.0, %v813
      %815 = vmatmul.bf16.gmra.mxu0 %v619
      %v816 = vpop.f32.mrf.mxu0
      %v817 = vadd.f32 0.0, %v816
      %v818 = vpop.f32.mrf.mxu0
      %v819 = vadd.f32 0.0, %v818
      %820 = vdwg.mxu0
      %821 = vmatpush.bf16.xpose.msra.mxu0 %v715
      %822 = vmatpush.bf16.xpose.msra.mxu0 %v714
      %823 = vmatpush.bf16.xpose.msra.mxu0 %v713
      %824 = vmatpush.bf16.xpose.msra.mxu0 %v712
      %825 = vmatpush.bf16.xpose.msra.mxu0 %v711
      %826 = vmatpush.bf16.xpose.msra.mxu0 %v710
      %827 = vmatpush.bf16.xpose.msra.mxu0 %v709
      %828 = vmatpush.bf16.xpose.msra.mxu0 %v708
      %829 = vmatmul.bf16.gmra.mxu0 %v604
      %v830 = vpop.f32.mrf.mxu0
      %v831 = vadd.f32 0.0, %v830
      %v832 = vpop.f32.mrf.mxu0
      %v833 = vadd.f32 0.0, %v832
      %834 = vmatmul.bf16.gmra.mxu0 %v605
      %v835 = vpop.f32.mrf.mxu0
      %v836 = vadd.f32 0.0, %v835
      %v837 = vpop.f32.mrf.mxu0
      %v838 = vadd.f32 0.0, %v837
      %839 = vmatmul.bf16.gmra.mxu0 %v606
      %v840 = vpop.f32.mrf.mxu0
      %v841 = vadd.f32 0.0, %v840
      %v842 = vpop.f32.mrf.mxu0
      %v843 = vadd.f32 0.0, %v842
      %844 = vmatmul.bf16.gmra.mxu0 %v607
      %v845 = vpop.f32.mrf.mxu0
      %v846 = vadd.f32 0.0, %v845
      %v847 = vpop.f32.mrf.mxu0
      %v848 = vadd.f32 0.0, %v847
      %849 = vmatmul.bf16.gmra.mxu0 %v608
      %v850 = vpop.f32.mrf.mxu0
      %v851 = vadd.f32 0.0, %v850
      %v852 = vpop.f32.mrf.mxu0
      %v853 = vadd.f32 0.0, %v852
      %854 = vmatmul.bf16.gmra.mxu0 %v609
      %v855 = vpop.f32.mrf.mxu0
      %v856 = vadd.f32 0.0, %v855
      %v857 = vpop.f32.mrf.mxu0
      %v858 = vadd.f32 0.0, %v857
      %859 = vmatmul.bf16.gmra.mxu0 %v610
      %v860 = vpop.f32.mrf.mxu0
      %v861 = vadd.f32 0.0, %v860
      %v862 = vpop.f32.mrf.mxu0
      %v863 = vadd.f32 0.0, %v862
      %864 = vmatmul.bf16.gmra.mxu0 %v611
      %v865 = vpop.f32.mrf.mxu0
      %v866 = vadd.f32 0.0, %v865
      %v867 = vpop.f32.mrf.mxu0
      %v868 = vadd.f32 0.0, %v867
      %869 = vmatmul.bf16.gmra.mxu0 %v612
      %v870 = vpop.f32.mrf.mxu0
      %v871 = vadd.f32 0.0, %v870
      %v872 = vpop.f32.mrf.mxu0
      %v873 = vadd.f32 0.0, %v872
      %874 = vmatmul.bf16.gmra.mxu0 %v613
      %v875 = vpop.f32.mrf.mxu0
      %v876 = vadd.f32 0.0, %v875
      %v877 = vpop.f32.mrf.mxu0
      %v878 = vadd.f32 0.0, %v877
      %879 = vmatmul.bf16.gmra.mxu0 %v614
      %v880 = vpop.f32.mrf.mxu0
      %v881 = vadd.f32 0.0, %v880
      %v882 = vpop.f32.mrf.mxu0
      %v883 = vadd.f32 0.0, %v882
      %884 = vmatmul.bf16.gmra.mxu0 %v615
      %v885 = vpop.f32.mrf.mxu0
      %v886 = vadd.f32 0.0, %v885
      %v887 = vpop.f32.mrf.mxu0
      %v888 = vadd.f32 0.0, %v887
      %889 = vmatmul.bf16.gmra.mxu0 %v616
      %v890 = vpop.f32.mrf.mxu0
      %v891 = vadd.f32 0.0, %v890
      %v892 = vpop.f32.mrf.mxu0
      %v893 = vadd.f32 0.0, %v892
      %894 = vmatmul.bf16.gmra.mxu0 %v617
      %v895 = vpop.f32.mrf.mxu0
      %v896 = vadd.f32 0.0, %v895
      %v897 = vpop.f32.mrf.mxu0
      %v898 = vadd.f32 0.0, %v897
      %899 = vmatmul.bf16.gmra.mxu0 %v618
      %v900 = vpop.f32.mrf.mxu0
      %v901 = vadd.f32 0.0, %v900
      %v902 = vpop.f32.mrf.mxu0
      %v903 = vadd.f32 0.0, %v902
      %904 = vmatmul.bf16.gmra.mxu0 %v619
      %v905 = vpop.f32.mrf.mxu0
      %v906 = vadd.f32 0.0, %v905
      %v907 = vpop.f32.mrf.mxu0
      %v908 = vadd.f32 0.0, %v907
      %909 = vdwg.mxu0
      %v910 = vld [vmem:[#allocation2] sm:$0xff]
      %v911 = vld [vmem:[#allocation2 + $0x8] sm:$0xff]
      %v912 = vld [vmem:[#allocation2 + $0x10] sm:$0xff]
      %v913 = vld [vmem:[#allocation2 + $0x18] sm:$0xff]
      %v914 = vld [vmem:[#allocation2 + $0x20] sm:$0xff]
      %v915 = vld [vmem:[#allocation2 + $0x28] sm:$0xff]
      %v916 = vld [vmem:[#allocation2 + $0x30] sm:$0xff]
      %v917 = vld [vmem:[#allocation2 + $0x38] sm:$0xff]
      %v918 = vld [vmem:[#allocation2 + $0x40] sm:$0xff]
      %v919 = vld [vmem:[#allocation2 + $0x48] sm:$0xff]
      %v920 = vld [vmem:[#allocation2 + $0x50] sm:$0xff]
      %v921 = vld [vmem:[#allocation2 + $0x58] sm:$0xff]
      %v922 = vld [vmem:[#allocation2 + $0x60] sm:$0xff]
      %v923 = vld [vmem:[#allocation2 + $0x68] sm:$0xff]
      %v924 = vld [vmem:[#allocation2 + $0x70] sm:$0xff]
      %v925 = vld [vmem:[#allocation2 + $0x78] sm:$0xff]
      %v926 = vld [vmem:[#allocation2 + $0x80] sm:$0xff]
      %v927 = vld [vmem:[#allocation2 + $0x88] sm:$0xff]
      %v928 = vld [vmem:[#allocation2 + $0x90] sm:$0xff]
      %v929 = vld [vmem:[#allocation2 + $0x98] sm:$0xff]
      %v930 = vld [vmem:[#allocation2 + $0xa0] sm:$0xff]
      %v931 = vld [vmem:[#allocation2 + $0xa8] sm:$0xff]
      %v932 = vld [vmem:[#allocation2 + $0xb0] sm:$0xff]
      %v933 = vld [vmem:[#allocation2 + $0xb8] sm:$0xff]
      %v934 = vld [vmem:[#allocation2 + $0xc0] sm:$0xff]
      %v935 = vld [vmem:[#allocation2 + $0xc8] sm:$0xff]
      %v936 = vld [vmem:[#allocation2 + $0xd0] sm:$0xff]
      %v937 = vld [vmem:[#allocation2 + $0xd8] sm:$0xff]
      %v938 = vld [vmem:[#allocation2 + $0xe0] sm:$0xff]
      %v939 = vld [vmem:[#allocation2 + $0xe8] sm:$0xff]
      %v940 = vld [vmem:[#allocation2 + $0xf0] sm:$0xff]
      %v941 = vld [vmem:[#allocation2 + $0xf8] sm:$0xff]
      %v942 = vmax.f32 %v742, %v831
      %943 = vmax.xlane.f32.xlu0 %v942
      %v944 = vpop.xlane.xlu0 %943
      %v945 = vmax.f32 %v744, %v833
      %946 = vmax.xlane.f32.xlu0 %v945
      %v947 = vpop.xlane.xlu0 %946
      %v948 = vmax.f32 %v747, %v836
      %949 = vmax.xlane.f32.xlu0 %v948
      %v950 = vpop.xlane.xlu0 %949
      %v951 = vmax.f32 %v749, %v838
      %952 = vmax.xlane.f32.xlu0 %v951
      %v953 = vpop.xlane.xlu0 %952
      %v954 = vmax.f32 %v752, %v841
      %955 = vmax.xlane.f32.xlu0 %v954
      %v956 = vpop.xlane.xlu0 %955
      %v957 = vmax.f32 %v754, %v843
      %958 = vmax.xlane.f32.xlu0 %v957
      %v959 = vpop.xlane.xlu0 %958
      %v960 = vmax.f32 %v757, %v846
      %961 = vmax.xlane.f32.xlu0 %v960
      %v962 = vpop.xlane.xlu0 %961
      %v963 = vmax.f32 %v759, %v848
      %964 = vmax.xlane.f32.xlu0 %v963
      %v965 = vpop.xlane.xlu0 %964
      %v966 = vmax.f32 %v762, %v851
      %967 = vmax.xlane.f32.xlu0 %v966
      %v968 = vpop.xlane.xlu0 %967
      %v969 = vmax.f32 %v764, %v853
      %970 = vmax.xlane.f32.xlu0 %v969
      %v971 = vpop.xlane.xlu0 %970
      %v972 = vmax.f32 %v767, %v856
      %973 = vmax.xlane.f32.xlu0 %v972
      %v974 = vpop.xlane.xlu0 %973
      %v975 = vmax.f32 %v769, %v858
      %976 = vmax.xlane.f32.xlu0 %v975
      %v977 = vpop.xlane.xlu0 %976
      %v978 = vmax.f32 %v772, %v861
      %979 = vmax.xlane.f32.xlu0 %v978
      %v980 = vpop.xlane.xlu0 %979
      %v981 = vmax.f32 %v774, %v863
      %982 = vmax.xlane.f32.xlu0 %v981
      %v983 = vpop.xlane.xlu0 %982
      %v984 = vmax.f32 %v777, %v866
      %985 = vmax.xlane.f32.xlu0 %v984
      %v986 = vpop.xlane.xlu0 %985
      %v987 = vmax.f32 %v779, %v868
      %988 = vmax.xlane.f32.xlu0 %v987
      %v989 = vpop.xlane.xlu0 %988
      %v990 = vmax.f32 %v782, %v871
      %991 = vmax.xlane.f32.xlu0 %v990
      %v992 = vpop.xlane.xlu0 %991
      %v993 = vmax.f32 %v784, %v873
      %994 = vmax.xlane.f32.xlu0 %v993
      %v995 = vpop.xlane.xlu0 %994
      %v996 = vmax.f32 %v787, %v876
      %997 = vmax.xlane.f32.xlu0 %v996
      %v998 = vpop.xlane.xlu0 %997
      %v999 = vmax.f32 %v789, %v878
      %1000 = vmax.xlane.f32.xlu0 %v999
      %v1001 = vpop.xlane.xlu0 %1000
      %v1002 = vmax.f32 %v792, %v881
      %1003 = vmax.xlane.f32.xlu0 %v1002
      %v1004 = vpop.xlane.xlu0 %1003
      %v1005 = vmax.f32 %v794, %v883
      %1006 = vmax.xlane.f32.xlu0 %v1005
      %v1007 = vpop.xlane.xlu0 %1006
      %v1008 = vmax.f32 %v797, %v886
      %1009 = vmax.xlane.f32.xlu0 %v1008
      %v1010 = vpop.xlane.xlu0 %1009
      %v1011 = vmax.f32 %v799, %v888
      %1012 = vmax.xlane.f32.xlu0 %v1011
      %v1013 = vpop.xlane.xlu0 %1012
      %v1014 = vmax.f32 %v802, %v891
      %1015 = vmax.xlane.f32.xlu0 %v1014
      %v1016 = vpop.xlane.xlu0 %1015
      %v1017 = vmax.f32 %v804, %v893
      %1018 = vmax.xlane.f32.xlu0 %v1017
      %v1019 = vpop.xlane.xlu0 %1018
      %v1020 = vmax.f32 %v807, %v896
      %1021 = vmax.xlane.f32.xlu0 %v1020
      %v1022 = vpop.xlane.xlu0 %1021
      %v1023 = vmax.f32 %v809, %v898
      %1024 = vmax.xlane.f32.xlu0 %v1023
      %v1025 = vpop.xlane.xlu0 %1024
      %v1026 = vmax.f32 %v812, %v901
      %1027 = vmax.xlane.f32.xlu0 %v1026
      %v1028 = vpop.xlane.xlu0 %1027
      %v1029 = vmax.f32 %v814, %v903
      %1030 = vmax.xlane.f32.xlu0 %v1029
      %v1031 = vpop.xlane.xlu0 %1030
      %v1032 = vmax.f32 %v817, %v906
      %1033 = vmax.xlane.f32.xlu0 %v1032
      %v1034 = vpop.xlane.xlu0 %1033
      %v1035 = vmax.f32 %v819, %v908
      %1036 = vmax.xlane.f32.xlu0 %v1035
      %v1037 = vpop.xlane.xlu0 %1036
      %v1038 = vmax.f32 %v910, %v944
      %v1039 = vmax.f32 %v911, %v947
      %v1040 = vmax.f32 %v912, %v950
      %v1041 = vmax.f32 %v913, %v953
      %v1042 = vmax.f32 %v914, %v956
      %v1043 = vmax.f32 %v915, %v959
      %v1044 = vmax.f32 %v916, %v962
      %v1045 = vmax.f32 %v917, %v965
      %v1046 = vmax.f32 %v918, %v968
      %v1047 = vmax.f32 %v919, %v971
      %v1048 = vmax.f32 %v920, %v974
      %v1049 = vmax.f32 %v921, %v977
      %v1050 = vmax.f32 %v922, %v980
      %v1051 = vmax.f32 %v923, %v983
      %v1052 = vmax.f32 %v924, %v986
      %v1053 = vmax.f32 %v925, %v989
      %v1054 = vmax.f32 %v926, %v992
      %v1055 = vmax.f32 %v927, %v995
      %v1056 = vmax.f32 %v928, %v998
      %v1057 = vmax.f32 %v929, %v1001
      %v1058 = vmax.f32 %v930, %v1004
      %v1059 = vmax.f32 %v931, %v1007
      %v1060 = vmax.f32 %v932, %v1010
      %v1061 = vmax.f32 %v933, %v1013
      %v1062 = vmax.f32 %v934, %v1016
      %v1063 = vmax.f32 %v935, %v1019
      %v1064 = vmax.f32 %v936, %v1022
      %v1065 = vmax.f32 %v937, %v1025
      %v1066 = vmax.f32 %v938, %v1028
      %v1067 = vmax.f32 %v939, %v1031
      %v1068 = vmax.f32 %v940, %v1034
      %v1069 = vmax.f32 %v941, %v1037
      %v1070 = vsub.f32 %v910, %v1038
      %v1071 = vsub.f32 %v911, %v1039
      %v1072 = vsub.f32 %v912, %v1040
      %v1073 = vsub.f32 %v913, %v1041
      %v1074 = vsub.f32 %v914, %v1042
      %v1075 = vsub.f32 %v915, %v1043
      %v1076 = vsub.f32 %v916, %v1044
      %v1077 = vsub.f32 %v917, %v1045
      %v1078 = vsub.f32 %v918, %v1046
      %v1079 = vsub.f32 %v919, %v1047
      %v1080 = vsub.f32 %v920, %v1048
      %v1081 = vsub.f32 %v921, %v1049
      %v1082 = vsub.f32 %v922, %v1050
      %v1083 = vsub.f32 %v923, %v1051
      %v1084 = vsub.f32 %v924, %v1052
      %v1085 = vsub.f32 %v925, %v1053
      %v1086 = vsub.f32 %v926, %v1054
      %v1087 = vsub.f32 %v927, %v1055
      %v1088 = vsub.f32 %v928, %v1056
      %v1089 = vsub.f32 %v929, %v1057
      %v1090 = vsub.f32 %v930, %v1058
      %v1091 = vsub.f32 %v931, %v1059
      %v1092 = vsub.f32 %v932, %v1060
      %v1093 = vsub.f32 %v933, %v1061
      %v1094 = vsub.f32 %v934, %v1062
      %v1095 = vsub.f32 %v935, %v1063
      %v1096 = vsub.f32 %v936, %v1064
      %v1097 = vsub.f32 %v937, %v1065
      %v1098 = vsub.f32 %v938, %v1066
      %v1099 = vsub.f32 %v939, %v1067
      %v1100 = vsub.f32 %v940, %v1068
      %v1101 = vsub.f32 %v941, %v1069
      %v1102 = vmul.f32 %v1070, 1.442695
      %v1103 = vpow.pop %v1102
      %v1104 = vmul.f32 %v1071, 1.442695
      %v1105 = vpow.pop %v1104
      %v1106 = vmul.f32 %v1072, 1.442695
      %v1107 = vpow.pop %v1106
      %v1108 = vmul.f32 %v1073, 1.442695
      %v1109 = vpow.pop %v1108
      %v1110 = vmul.f32 %v1074, 1.442695
      %v1111 = vpow.pop %v1110
      %v1112 = vmul.f32 %v1075, 1.442695
      %v1113 = vpow.pop %v1112
      %v1114 = vmul.f32 %v1076, 1.442695
      %v1115 = vpow.pop %v1114
      %v1116 = vmul.f32 %v1077, 1.442695
      %v1117 = vpow.pop %v1116
      %v1118 = vmul.f32 %v1078, 1.442695
      %v1119 = vpow.pop %v1118
      %v1120 = vmul.f32 %v1079, 1.442695
      %v1121 = vpow.pop %v1120
      %v1122 = vmul.f32 %v1080, 1.442695
      %v1123 = vpow.pop %v1122
      %v1124 = vmul.f32 %v1081, 1.442695
      %v1125 = vpow.pop %v1124
      %v1126 = vmul.f32 %v1082, 1.442695
      %v1127 = vpow.pop %v1126
      %v1128 = vmul.f32 %v1083, 1.442695
      %v1129 = vpow.pop %v1128
      %v1130 = vmul.f32 %v1084, 1.442695
      %v1131 = vpow.pop %v1130
      %v1132 = vmul.f32 %v1085, 1.442695
      %v1133 = vpow.pop %v1132
      %v1134 = vmul.f32 %v1086, 1.442695
      %v1135 = vpow.pop %v1134
      %v1136 = vmul.f32 %v1087, 1.442695
      %v1137 = vpow.pop %v1136
      %v1138 = vmul.f32 %v1088, 1.442695
      %v1139 = vpow.pop %v1138
      %v1140 = vmul.f32 %v1089, 1.442695
      %v1141 = vpow.pop %v1140
      %v1142 = vmul.f32 %v1090, 1.442695
      %v1143 = vpow.pop %v1142
      %v1144 = vmul.f32 %v1091, 1.442695
      %v1145 = vpow.pop %v1144
      %v1146 = vmul.f32 %v1092, 1.442695
      %v1147 = vpow.pop %v1146
      %v1148 = vmul.f32 %v1093, 1.442695
      %v1149 = vpow.pop %v1148
      %v1150 = vmul.f32 %v1094, 1.442695
      %v1151 = vpow.pop %v1150
      %v1152 = vmul.f32 %v1095, 1.442695
      %v1153 = vpow.pop %v1152
      %v1154 = vmul.f32 %v1096, 1.442695
      %v1155 = vpow.pop %v1154
      %v1156 = vmul.f32 %v1097, 1.442695
      %v1157 = vpow.pop %v1156
      %v1158 = vmul.f32 %v1098, 1.442695
      %v1159 = vpow.pop %v1158
      %v1160 = vmul.f32 %v1099, 1.442695
      %v1161 = vpow.pop %v1160
      %v1162 = vmul.f32 %v1100, 1.442695
      %v1163 = vpow.pop %v1162
      %v1164 = vmul.f32 %v1101, 1.442695
      %v1165 = vpow.pop %v1164
      %1167 = vset.pattern.permute.xlu0 0
      %1168 = vperm.xlu0 %1167, %v1038
      %v1169 = vpop.permute.xlu0 %1168
      %1172 = vset.pattern.permute.xlu0 0
      %1173 = vperm.xlu0 %1172, %v1039
      %v1174 = vpop.permute.xlu0 %1173
      %1177 = vset.pattern.permute.xlu0 0
      %1178 = vperm.xlu0 %1177, %v1040
      %v1179 = vpop.permute.xlu0 %1178
      %1182 = vset.pattern.permute.xlu0 0
      %1183 = vperm.xlu0 %1182, %v1041
      %v1184 = vpop.permute.xlu0 %1183
      %1187 = vset.pattern.permute.xlu0 0
      %1188 = vperm.xlu0 %1187, %v1042
      %v1189 = vpop.permute.xlu0 %1188
      %1192 = vset.pattern.permute.xlu0 0
      %1193 = vperm.xlu0 %1192, %v1043
      %v1194 = vpop.permute.xlu0 %1193
      %1197 = vset.pattern.permute.xlu0 0
      %1198 = vperm.xlu0 %1197, %v1044
      %v1199 = vpop.permute.xlu0 %1198
      %1202 = vset.pattern.permute.xlu0 0
      %1203 = vperm.xlu0 %1202, %v1045
      %v1204 = vpop.permute.xlu0 %1203
      %1207 = vset.pattern.permute.xlu0 0
      %1208 = vperm.xlu0 %1207, %v1046
      %v1209 = vpop.permute.xlu0 %1208
      %1212 = vset.pattern.permute.xlu0 0
      %1213 = vperm.xlu0 %1212, %v1047
      %v1214 = vpop.permute.xlu0 %1213
      %1217 = vset.pattern.permute.xlu0 0
      %1218 = vperm.xlu0 %1217, %v1048
      %v1219 = vpop.permute.xlu0 %1218
      %1222 = vset.pattern.permute.xlu0 0
      %1223 = vperm.xlu0 %1222, %v1049
      %v1224 = vpop.permute.xlu0 %1223
      %1227 = vset.pattern.permute.xlu0 0
      %1228 = vperm.xlu0 %1227, %v1050
      %v1229 = vpop.permute.xlu0 %1228
      %1232 = vset.pattern.permute.xlu0 0
      %1233 = vperm.xlu0 %1232, %v1051
      %v1234 = vpop.permute.xlu0 %1233
      %1237 = vset.pattern.permute.xlu0 0
      %1238 = vperm.xlu0 %1237, %v1052
      %v1239 = vpop.permute.xlu0 %1238
      %1242 = vset.pattern.permute.xlu0 0
      %1243 = vperm.xlu0 %1242, %v1053
      %v1244 = vpop.permute.xlu0 %1243
      %1247 = vset.pattern.permute.xlu0 0
      %1248 = vperm.xlu0 %1247, %v1054
      %v1249 = vpop.permute.xlu0 %1248
      %1252 = vset.pattern.permute.xlu0 0
      %1253 = vperm.xlu0 %1252, %v1055
      %v1254 = vpop.permute.xlu0 %1253
      %1257 = vset.pattern.permute.xlu0 0
      %1258 = vperm.xlu0 %1257, %v1056
      %v1259 = vpop.permute.xlu0 %1258
      %1262 = vset.pattern.permute.xlu0 0
      %1263 = vperm.xlu0 %1262, %v1057
      %v1264 = vpop.permute.xlu0 %1263
      %1267 = vset.pattern.permute.xlu0 0
      %1268 = vperm.xlu0 %1267, %v1058
      %v1269 = vpop.permute.xlu0 %1268
      %1272 = vset.pattern.permute.xlu0 0
      %1273 = vperm.xlu0 %1272, %v1059
      %v1274 = vpop.permute.xlu0 %1273
      %1277 = vset.pattern.permute.xlu0 0
      %1278 = vperm.xlu0 %1277, %v1060
      %v1279 = vpop.permute.xlu0 %1278
      %1282 = vset.pattern.permute.xlu0 0
      %1283 = vperm.xlu0 %1282, %v1061
      %v1284 = vpop.permute.xlu0 %1283
      %1287 = vset.pattern.permute.xlu0 0
      %1288 = vperm.xlu0 %1287, %v1062
      %v1289 = vpop.permute.xlu0 %1288
      %1292 = vset.pattern.permute.xlu0 0
      %1293 = vperm.xlu0 %1292, %v1063
      %v1294 = vpop.permute.xlu0 %1293
      %1297 = vset.pattern.permute.xlu0 0
      %1298 = vperm.xlu0 %1297, %v1064
      %v1299 = vpop.permute.xlu0 %1298
      %1302 = vset.pattern.permute.xlu0 0
      %1303 = vperm.xlu0 %1302, %v1065
      %v1304 = vpop.permute.xlu0 %1303
      %1307 = vset.pattern.permute.xlu0 0
      %1308 = vperm.xlu0 %1307, %v1066
      %v1309 = vpop.permute.xlu0 %1308
      %1312 = vset.pattern.permute.xlu0 0
      %1313 = vperm.xlu0 %1312, %v1067
      %v1314 = vpop.permute.xlu0 %1313
      %1317 = vset.pattern.permute.xlu0 0
      %1318 = vperm.xlu0 %1317, %v1068
      %v1319 = vpop.permute.xlu0 %1318
      %1322 = vset.pattern.permute.xlu0 0
      %1323 = vperm.xlu0 %1322, %v1069
      %v1324 = vpop.permute.xlu0 %1323
      %v1326 = vsub.f32 %v742, %v1169
      %v1327 = vsub.f32 %v831, %v1169
      %v1328 = vsub.f32 %v744, %v1174
      %v1329 = vsub.f32 %v833, %v1174
      %v1330 = vsub.f32 %v747, %v1179
      %v1331 = vsub.f32 %v836, %v1179
      %v1332 = vsub.f32 %v749, %v1184
      %v1333 = vsub.f32 %v838, %v1184
      %v1334 = vsub.f32 %v752, %v1189
      %v1335 = vsub.f32 %v841, %v1189
      %v1336 = vsub.f32 %v754, %v1194
      %v1337 = vsub.f32 %v843, %v1194
      %v1338 = vsub.f32 %v757, %v1199
      %v1339 = vsub.f32 %v846, %v1199
      %v1340 = vsub.f32 %v759, %v1204
      %v1341 = vsub.f32 %v848, %v1204
      %v1342 = vsub.f32 %v762, %v1209
      %v1343 = vsub.f32 %v851, %v1209
      %v1344 = vsub.f32 %v764, %v1214
      %v1345 = vsub.f32 %v853, %v1214
      %v1346 = vsub.f32 %v767, %v1219
      %v1347 = vsub.f32 %v856, %v1219
      %v1348 = vsub.f32 %v769, %v1224
      %v1349 = vsub.f32 %v858, %v1224
      %v1350 = vsub.f32 %v772, %v1229
      %v1351 = vsub.f32 %v861, %v1229
      %v1352 = vsub.f32 %v774, %v1234
      %v1353 = vsub.f32 %v863, %v1234
      %v1354 = vsub.f32 %v777, %v1239
      %v1355 = vsub.f32 %v866, %v1239
      %v1356 = vsub.f32 %v779, %v1244
      %v1357 = vsub.f32 %v868, %v1244
      %v1358 = vsub.f32 %v782, %v1249
      %v1359 = vsub.f32 %v871, %v1249
      %v1360 = vsub.f32 %v784, %v1254
      %v1361 = vsub.f32 %v873, %v1254
      %v1362 = vsub.f32 %v787, %v1259
      %v1363 = vsub.f32 %v876, %v1259
      %v1364 = vsub.f32 %v789, %v1264
      %v1365 = vsub.f32 %v878, %v1264
      %v1366 = vsub.f32 %v792, %v1269
      %v1367 = vsub.f32 %v881, %v1269
      %v1368 = vsub.f32 %v794, %v1274
      %v1369 = vsub.f32 %v883, %v1274
      %v1370 = vsub.f32 %v797, %v1279
      %v1371 = vsub.f32 %v886, %v1279
      %v1372 = vsub.f32 %v799, %v1284
      %v1373 = vsub.f32 %v888, %v1284
      %v1374 = vsub.f32 %v802, %v1289
      %v1375 = vsub.f32 %v891, %v1289
      %v1376 = vsub.f32 %v804, %v1294
      %v1377 = vsub.f32 %v893, %v1294
      %v1378 = vsub.f32 %v807, %v1299
      %v1379 = vsub.f32 %v896, %v1299
      %v1380 = vsub.f32 %v809, %v1304
      %v1381 = vsub.f32 %v898, %v1304
      %v1382 = vsub.f32 %v812, %v1309
      %v1383 = vsub.f32 %v901, %v1309
      %v1384 = vsub.f32 %v814, %v1314
      %v1385 = vsub.f32 %v903, %v1314
      %v1386 = vsub.f32 %v817, %v1319
      %v1387 = vsub.f32 %v906, %v1319
      %v1388 = vsub.f32 %v819, %v1324
      %v1389 = vsub.f32 %v908, %v1324
      %v1390 = vmul.f32 %v1326, 1.442695
      %v1391 = vpow.pop %v1390
      %v1392 = vmul.f32 %v1327, 1.442695
      %v1393 = vpow.pop %v1392
      %v1394 = vmul.f32 %v1328, 1.442695
      %v1395 = vpow.pop %v1394
      %v1396 = vmul.f32 %v1329, 1.442695
      %v1397 = vpow.pop %v1396
      %v1398 = vmul.f32 %v1330, 1.442695
      %v1399 = vpow.pop %v1398
      %v1400 = vmul.f32 %v1331, 1.442695
      %v1401 = vpow.pop %v1400
      %v1402 = vmul.f32 %v1332, 1.442695
      %v1403 = vpow.pop %v1402
      %v1404 = vmul.f32 %v1333, 1.442695
      %v1405 = vpow.pop %v1404
      %v1406 = vmul.f32 %v1334, 1.442695
      %v1407 = vpow.pop %v1406
      %v1408 = vmul.f32 %v1335, 1.442695
      %v1409 = vpow.pop %v1408
      %v1410 = vmul.f32 %v1336, 1.442695
      %v1411 = vpow.pop %v1410
      %v1412 = vmul.f32 %v1337, 1.442695
      %v1413 = vpow.pop %v1412
      %v1414 = vmul.f32 %v1338, 1.442695
      %v1415 = vpow.pop %v1414
      %v1416 = vmul.f32 %v1339, 1.442695
      %v1417 = vpow.pop %v1416
      %v1418 = vmul.f32 %v1340, 1.442695
      %v1419 = vpow.pop %v1418
      %v1420 = vmul.f32 %v1341, 1.442695
      %v1421 = vpow.pop %v1420
      %v1422 = vmul.f32 %v1342, 1.442695
      %v1423 = vpow.pop %v1422
      %v1424 = vmul.f32 %v1343, 1.442695
      %v1425 = vpow.pop %v1424
      %v1426 = vmul.f32 %v1344, 1.442695
      %v1427 = vpow.pop %v1426
      %v1428 = vmul.f32 %v1345, 1.442695
      %v1429 = vpow.pop %v1428
      %v1430 = vmul.f32 %v1346, 1.442695
      %v1431 = vpow.pop %v1430
      %v1432 = vmul.f32 %v1347, 1.442695
      %v1433 = vpow.pop %v1432
      %v1434 = vmul.f32 %v1348, 1.442695
      %v1435 = vpow.pop %v1434
      %v1436 = vmul.f32 %v1349, 1.442695
      %v1437 = vpow.pop %v1436
      %v1438 = vmul.f32 %v1350, 1.442695
      %v1439 = vpow.pop %v1438
      %v1440 = vmul.f32 %v1351, 1.442695
      %v1441 = vpow.pop %v1440
      %v1442 = vmul.f32 %v1352, 1.442695
      %v1443 = vpow.pop %v1442
      %v1444 = vmul.f32 %v1353, 1.442695
      %v1445 = vpow.pop %v1444
      %v1446 = vmul.f32 %v1354, 1.442695
      %v1447 = vpow.pop %v1446
      %v1448 = vmul.f32 %v1355, 1.442695
      %v1449 = vpow.pop %v1448
      %v1450 = vmul.f32 %v1356, 1.442695
      %v1451 = vpow.pop %v1450
      %v1452 = vmul.f32 %v1357, 1.442695
      %v1453 = vpow.pop %v1452
      %v1454 = vmul.f32 %v1358, 1.442695
      %v1455 = vpow.pop %v1454
      %v1456 = vmul.f32 %v1359, 1.442695
      %v1457 = vpow.pop %v1456
      %v1458 = vmul.f32 %v1360, 1.442695
      %v1459 = vpow.pop %v1458
      %v1460 = vmul.f32 %v1361, 1.442695
      %v1461 = vpow.pop %v1460
      %v1462 = vmul.f32 %v1362, 1.442695
      %v1463 = vpow.pop %v1462
      %v1464 = vmul.f32 %v1363, 1.442695
      %v1465 = vpow.pop %v1464
      %v1466 = vmul.f32 %v1364, 1.442695
      %v1467 = vpow.pop %v1466
      %v1468 = vmul.f32 %v1365, 1.442695
      %v1469 = vpow.pop %v1468
      %v1470 = vmul.f32 %v1366, 1.442695
      %v1471 = vpow.pop %v1470
      %v1472 = vmul.f32 %v1367, 1.442695
      %v1473 = vpow.pop %v1472
      %v1474 = vmul.f32 %v1368, 1.442695
      %v1475 = vpow.pop %v1474
      %v1476 = vmul.f32 %v1369, 1.442695
      %v1477 = vpow.pop %v1476
      %v1478 = vmul.f32 %v1370, 1.442695
      %v1479 = vpow.pop %v1478
      %v1480 = vmul.f32 %v1371, 1.442695
      %v1481 = vpow.pop %v1480
      %v1482 = vmul.f32 %v1372, 1.442695
      %v1483 = vpow.pop %v1482
      %v1484 = vmul.f32 %v1373, 1.442695
      %v1485 = vpow.pop %v1484
      %v1486 = vmul.f32 %v1374, 1.442695
      %v1487 = vpow.pop %v1486
      %v1488 = vmul.f32 %v1375, 1.442695
      %v1489 = vpow.pop %v1488
      %v1490 = vmul.f32 %v1376, 1.442695
      %v1491 = vpow.pop %v1490
      %v1492 = vmul.f32 %v1377, 1.442695
      %v1493 = vpow.pop %v1492
      %v1494 = vmul.f32 %v1378, 1.442695
      %v1495 = vpow.pop %v1494
      %v1496 = vmul.f32 %v1379, 1.442695
      %v1497 = vpow.pop %v1496
      %v1498 = vmul.f32 %v1380, 1.442695
      %v1499 = vpow.pop %v1498
      %v1500 = vmul.f32 %v1381, 1.442695
      %v1501 = vpow.pop %v1500
      %v1502 = vmul.f32 %v1382, 1.442695
      %v1503 = vpow.pop %v1502
      %v1504 = vmul.f32 %v1383, 1.442695
      %v1505 = vpow.pop %v1504
      %v1506 = vmul.f32 %v1384, 1.442695
      %v1507 = vpow.pop %v1506
      %v1508 = vmul.f32 %v1385, 1.442695
      %v1509 = vpow.pop %v1508
      %v1510 = vmul.f32 %v1386, 1.442695
      %v1511 = vpow.pop %v1510
      %v1512 = vmul.f32 %v1387, 1.442695
      %v1513 = vpow.pop %v1512
      %v1514 = vmul.f32 %v1388, 1.442695
      %v1515 = vpow.pop %v1514
      %v1516 = vmul.f32 %v1389, 1.442695
      %v1517 = vpow.pop %v1516
      %v1518 = vld [vmem:[#allocation3] sm:$0xff]
      %v1519 = vld [vmem:[#allocation3 + $0x8] sm:$0xff]
      %v1520 = vld [vmem:[#allocation3 + $0x10] sm:$0xff]
      %v1521 = vld [vmem:[#allocation3 + $0x18] sm:$0xff]
      %v1522 = vld [vmem:[#allocation3 + $0x20] sm:$0xff]
      %v1523 = vld [vmem:[#allocation3 + $0x28] sm:$0xff]
      %v1524 = vld [vmem:[#allocation3 + $0x30] sm:$0xff]
      %v1525 = vld [vmem:[#allocation3 + $0x38] sm:$0xff]
      %v1526 = vld [vmem:[#allocation3 + $0x40] sm:$0xff]
      %v1527 = vld [vmem:[#allocation3 + $0x48] sm:$0xff]
      %v1528 = vld [vmem:[#allocation3 + $0x50] sm:$0xff]
      %v1529 = vld [vmem:[#allocation3 + $0x58] sm:$0xff]
      %v1530 = vld [vmem:[#allocation3 + $0x60] sm:$0xff]
      %v1531 = vld [vmem:[#allocation3 + $0x68] sm:$0xff]
      %v1532 = vld [vmem:[#allocation3 + $0x70] sm:$0xff]
      %v1533 = vld [vmem:[#allocation3 + $0x78] sm:$0xff]
      %v1534 = vld [vmem:[#allocation3 + $0x80] sm:$0xff]
      %v1535 = vld [vmem:[#allocation3 + $0x88] sm:$0xff]
      %v1536 = vld [vmem:[#allocation3 + $0x90] sm:$0xff]
      %v1537 = vld [vmem:[#allocation3 + $0x98] sm:$0xff]
      %v1538 = vld [vmem:[#allocation3 + $0xa0] sm:$0xff]
      %v1539 = vld [vmem:[#allocation3 + $0xa8] sm:$0xff]
      %v1540 = vld [vmem:[#allocation3 + $0xb0] sm:$0xff]
      %v1541 = vld [vmem:[#allocation3 + $0xb8] sm:$0xff]
      %v1542 = vld [vmem:[#allocation3 + $0xc0] sm:$0xff]
      %v1543 = vld [vmem:[#allocation3 + $0xc8] sm:$0xff]
      %v1544 = vld [vmem:[#allocation3 + $0xd0] sm:$0xff]
      %v1545 = vld [vmem:[#allocation3 + $0xd8] sm:$0xff]
      %v1546 = vld [vmem:[#allocation3 + $0xe0] sm:$0xff]
      %v1547 = vld [vmem:[#allocation3 + $0xe8] sm:$0xff]
      %v1548 = vld [vmem:[#allocation3 + $0xf0] sm:$0xff]
      %v1549 = vld [vmem:[#allocation3 + $0xf8] sm:$0xff]
      %v1550 = vmul.f32 %v1103, %v1518
      %v1551 = vmul.f32 %v1105, %v1519
      %v1552 = vmul.f32 %v1107, %v1520
      %v1553 = vmul.f32 %v1109, %v1521
      %v1554 = vmul.f32 %v1111, %v1522
      %v1555 = vmul.f32 %v1113, %v1523
      %v1556 = vmul.f32 %v1115, %v1524
      %v1557 = vmul.f32 %v1117, %v1525
      %v1558 = vmul.f32 %v1119, %v1526
      %v1559 = vmul.f32 %v1121, %v1527
      %v1560 = vmul.f32 %v1123, %v1528
      %v1561 = vmul.f32 %v1125, %v1529
      %v1562 = vmul.f32 %v1127, %v1530
      %v1563 = vmul.f32 %v1129, %v1531
      %v1564 = vmul.f32 %v1131, %v1532
      %v1565 = vmul.f32 %v1133, %v1533
      %v1566 = vmul.f32 %v1135, %v1534
      %v1567 = vmul.f32 %v1137, %v1535
      %v1568 = vmul.f32 %v1139, %v1536
      %v1569 = vmul.f32 %v1141, %v1537
      %v1570 = vmul.f32 %v1143, %v1538
      %v1571 = vmul.f32 %v1145, %v1539
      %v1572 = vmul.f32 %v1147, %v1540
      %v1573 = vmul.f32 %v1149, %v1541
      %v1574 = vmul.f32 %v1151, %v1542
      %v1575 = vmul.f32 %v1153, %v1543
      %v1576 = vmul.f32 %v1155, %v1544
      %v1577 = vmul.f32 %v1157, %v1545
      %v1578 = vmul.f32 %v1159, %v1546
      %v1579 = vmul.f32 %v1161, %v1547
      %v1580 = vmul.f32 %v1163, %v1548
      %v1581 = vmul.f32 %v1165, %v1549
      %v1582 = vadd.f32 %v1391, %v1393
      %1583 = vadd.xlane.f32.xlu0 %v1582
      %v1584 = vpop.xlane.xlu0 %1583
      %v1585 = vadd.f32 %v1395, %v1397
      %1586 = vadd.xlane.f32.xlu0 %v1585
      %v1587 = vpop.xlane.xlu0 %1586
      %v1588 = vadd.f32 %v1399, %v1401
      %1589 = vadd.xlane.f32.xlu0 %v1588
      %v1590 = vpop.xlane.xlu0 %1589
      %v1591 = vadd.f32 %v1403, %v1405
      %1592 = vadd.xlane.f32.xlu0 %v1591
      %v1593 = vpop.xlane.xlu0 %1592
      %v1594 = vadd.f32 %v1407, %v1409
      %1595 = vadd.xlane.f32.xlu0 %v1594
      %v1596 = vpop.xlane.xlu0 %1595
      %v1597 = vadd.f32 %v1411, %v1413
      %1598 = vadd.xlane.f32.xlu0 %v1597
      %v1599 = vpop.xlane.xlu0 %1598
      %v1600 = vadd.f32 %v1415, %v1417
      %1601 = vadd.xlane.f32.xlu0 %v1600
      %v1602 = vpop.xlane.xlu0 %1601
      %v1603 = vadd.f32 %v1419, %v1421
      %1604 = vadd.xlane.f32.xlu0 %v1603
      %v1605 = vpop.xlane.xlu0 %1604
      %v1606 = vadd.f32 %v1423, %v1425
      %1607 = vadd.xlane.f32.xlu0 %v1606
      %v1608 = vpop.xlane.xlu0 %1607
      %v1609 = vadd.f32 %v1427, %v1429
      %1610 = vadd.xlane.f32.xlu0 %v1609
      %v1611 = vpop.xlane.xlu0 %1610
      %v1612 = vadd.f32 %v1431, %v1433
      %1613 = vadd.xlane.f32.xlu0 %v1612
      %v1614 = vpop.xlane.xlu0 %1613
      %v1615 = vadd.f32 %v1435, %v1437
      %1616 = vadd.xlane.f32.xlu0 %v1615
      %v1617 = vpop.xlane.xlu0 %1616
      %v1618 = vadd.f32 %v1439, %v1441
      %1619 = vadd.xlane.f32.xlu0 %v1618
      %v1620 = vpop.xlane.xlu0 %1619
      %v1621 = vadd.f32 %v1443, %v1445
      %1622 = vadd.xlane.f32.xlu0 %v1621
      %v1623 = vpop.xlane.xlu0 %1622
      %v1624 = vadd.f32 %v1447, %v1449
      %1625 = vadd.xlane.f32.xlu0 %v1624
      %v1626 = vpop.xlane.xlu0 %1625
      %v1627 = vadd.f32 %v1451, %v1453
      %1628 = vadd.xlane.f32.xlu0 %v1627
      %v1629 = vpop.xlane.xlu0 %1628
      %v1630 = vadd.f32 %v1455, %v1457
      %1631 = vadd.xlane.f32.xlu0 %v1630
      %v1632 = vpop.xlane.xlu0 %1631
      %v1633 = vadd.f32 %v1459, %v1461
      %1634 = vadd.xlane.f32.xlu0 %v1633
      %v1635 = vpop.xlane.xlu0 %1634
      %v1636 = vadd.f32 %v1463, %v1465
      %1637 = vadd.xlane.f32.xlu0 %v1636
      %v1638 = vpop.xlane.xlu0 %1637
      %v1639 = vadd.f32 %v1467, %v1469
      %1640 = vadd.xlane.f32.xlu0 %v1639
      %v1641 = vpop.xlane.xlu0 %1640
      %v1642 = vadd.f32 %v1471, %v1473
      %1643 = vadd.xlane.f32.xlu0 %v1642
      %v1644 = vpop.xlane.xlu0 %1643
      %v1645 = vadd.f32 %v1475, %v1477
      %1646 = vadd.xlane.f32.xlu0 %v1645
      %v1647 = vpop.xlane.xlu0 %1646
      %v1648 = vadd.f32 %v1479, %v1481
      %1649 = vadd.xlane.f32.xlu0 %v1648
      %v1650 = vpop.xlane.xlu0 %1649
      %v1651 = vadd.f32 %v1483, %v1485
      %1652 = vadd.xlane.f32.xlu0 %v1651
      %v1653 = vpop.xlane.xlu0 %1652
      %v1654 = vadd.f32 %v1487, %v1489
      %1655 = vadd.xlane.f32.xlu0 %v1654
      %v1656 = vpop.xlane.xlu0 %1655
      %v1657 = vadd.f32 %v1491, %v1493
      %1658 = vadd.xlane.f32.xlu0 %v1657
      %v1659 = vpop.xlane.xlu0 %1658
      %v1660 = vadd.f32 %v1495, %v1497
      %1661 = vadd.xlane.f32.xlu0 %v1660
      %v1662 = vpop.xlane.xlu0 %1661
      %v1663 = vadd.f32 %v1499, %v1501
      %1664 = vadd.xlane.f32.xlu0 %v1663
      %v1665 = vpop.xlane.xlu0 %1664
      %v1666 = vadd.f32 %v1503, %v1505
      %1667 = vadd.xlane.f32.xlu0 %v1666
      %v1668 = vpop.xlane.xlu0 %1667
      %v1669 = vadd.f32 %v1507, %v1509
      %1670 = vadd.xlane.f32.xlu0 %v1669
      %v1671 = vpop.xlane.xlu0 %1670
      %v1672 = vadd.f32 %v1511, %v1513
      %1673 = vadd.xlane.f32.xlu0 %v1672
      %v1674 = vpop.xlane.xlu0 %1673
      %v1675 = vadd.f32 %v1515, %v1517
      %1676 = vadd.xlane.f32.xlu0 %v1675
      %v1677 = vpop.xlane.xlu0 %1676
      %v1678 = vadd.f32 %v1550, %v1584
      %v1679 = vadd.f32 %v1551, %v1587
      %v1680 = vadd.f32 %v1552, %v1590
      %v1681 = vadd.f32 %v1553, %v1593
      %v1682 = vadd.f32 %v1554, %v1596
      %v1683 = vadd.f32 %v1555, %v1599
      %v1684 = vadd.f32 %v1556, %v1602
      %v1685 = vadd.f32 %v1557, %v1605
      %v1686 = vadd.f32 %v1558, %v1608
      %v1687 = vadd.f32 %v1559, %v1611
      %v1688 = vadd.f32 %v1560, %v1614
      %v1689 = vadd.f32 %v1561, %v1617
      %v1690 = vadd.f32 %v1562, %v1620
      %v1691 = vadd.f32 %v1563, %v1623
      %v1692 = vadd.f32 %v1564, %v1626
      %v1693 = vadd.f32 %v1565, %v1629
      %v1694 = vadd.f32 %v1566, %v1632
      %v1695 = vadd.f32 %v1567, %v1635
      %v1696 = vadd.f32 %v1568, %v1638
      %v1697 = vadd.f32 %v1569, %v1641
      %v1698 = vadd.f32 %v1570, %v1644
      %v1699 = vadd.f32 %v1571, %v1647
      %v1700 = vadd.f32 %v1572, %v1650
      %v1701 = vadd.f32 %v1573, %v1653
      %v1702 = vadd.f32 %v1574, %v1656
      %v1703 = vadd.f32 %v1575, %v1659
      %v1704 = vadd.f32 %v1576, %v1662
      %v1705 = vadd.f32 %v1577, %v1665
      %v1706 = vadd.f32 %v1578, %v1668
      %v1707 = vadd.f32 %v1579, %v1671
      %v1708 = vadd.f32 %v1580, %v1674
      %v1709 = vadd.f32 %v1581, %v1677
      %vm1710 = vcmask 7168
      %1711 = vst.msk [vmem:[#allocation3] sm:$0xff] %vm1710, %v1678
      %1712 = vst.msk [vmem:[#allocation3 + $0x8] sm:$0xff] %vm1710, %v1679
      %1713 = vst.msk [vmem:[#allocation3 + $0x10] sm:$0xff] %vm1710, %v1680
      %1714 = vst.msk [vmem:[#allocation3 + $0x18] sm:$0xff] %vm1710, %v1681
      %1715 = vst.msk [vmem:[#allocation3 + $0x20] sm:$0xff] %vm1710, %v1682
      %1716 = vst.msk [vmem:[#allocation3 + $0x28] sm:$0xff] %vm1710, %v1683
      %1717 = vst.msk [vmem:[#allocation3 + $0x30] sm:$0xff] %vm1710, %v1684
      %1718 = vst.msk [vmem:[#allocation3 + $0x38] sm:$0xff] %vm1710, %v1685
      %1719 = vst.msk [vmem:[#allocation3 + $0x40] sm:$0xff] %vm1710, %v1686
      %1720 = vst.msk [vmem:[#allocation3 + $0x48] sm:$0xff] %vm1710, %v1687
      %1721 = vst.msk [vmem:[#allocation3 + $0x50] sm:$0xff] %vm1710, %v1688
      %1722 = vst.msk [vmem:[#allocation3 + $0x58] sm:$0xff] %vm1710, %v1689
      %1723 = vst.msk [vmem:[#allocation3 + $0x60] sm:$0xff] %vm1710, %v1690
      %1724 = vst.msk [vmem:[#allocation3 + $0x68] sm:$0xff] %vm1710, %v1691
      %1725 = vst.msk [vmem:[#allocation3 + $0x70] sm:$0xff] %vm1710, %v1692
      %1726 = vst.msk [vmem:[#allocation3 + $0x78] sm:$0xff] %vm1710, %v1693
      %1727 = vst.msk [vmem:[#allocation3 + $0x80] sm:$0xff] %vm1710, %v1694
      %1728 = vst.msk [vmem:[#allocation3 + $0x88] sm:$0xff] %vm1710, %v1695
      %1729 = vst.msk [vmem:[#allocation3 + $0x90] sm:$0xff] %vm1710, %v1696
      %1730 = vst.msk [vmem:[#allocation3 + $0x98] sm:$0xff] %vm1710, %v1697
      %1731 = vst.msk [vmem:[#allocation3 + $0xa0] sm:$0xff] %vm1710, %v1698
      %1732 = vst.msk [vmem:[#allocation3 + $0xa8] sm:$0xff] %vm1710, %v1699
      %1733 = vst.msk [vmem:[#allocation3 + $0xb0] sm:$0xff] %vm1710, %v1700
      %1734 = vst.msk [vmem:[#allocation3 + $0xb8] sm:$0xff] %vm1710, %v1701
      %1735 = vst.msk [vmem:[#allocation3 + $0xc0] sm:$0xff] %vm1710, %v1702
      %1736 = vst.msk [vmem:[#allocation3 + $0xc8] sm:$0xff] %vm1710, %v1703
      %1737 = vst.msk [vmem:[#allocation3 + $0xd0] sm:$0xff] %vm1710, %v1704
      %1738 = vst.msk [vmem:[#allocation3 + $0xd8] sm:$0xff] %vm1710, %v1705
      %1739 = vst.msk [vmem:[#allocation3 + $0xe0] sm:$0xff] %vm1710, %v1706
      %1740 = vst.msk [vmem:[#allocation3 + $0xe8] sm:$0xff] %vm1710, %v1707
      %1741 = vst.msk [vmem:[#allocation3 + $0xf0] sm:$0xff] %vm1710, %v1708
      %1742 = vst.msk [vmem:[#allocation3 + $0xf8] sm:$0xff] %vm1710, %v1709
      %v1743 = vld [vmem:[#allocation4] sm:$0xff]
      %v1744 = vld [vmem:[#allocation4 + $0x8] sm:$0xff]
      %v1745 = vld [vmem:[#allocation4 + $0x10] sm:$0xff]
      %v1746 = vld [vmem:[#allocation4 + $0x18] sm:$0xff]
      %v1747 = vld [vmem:[#allocation4 + $0x20] sm:$0xff]
      %v1748 = vld [vmem:[#allocation4 + $0x28] sm:$0xff]
      %v1749 = vld [vmem:[#allocation4 + $0x30] sm:$0xff]
      %v1750 = vld [vmem:[#allocation4 + $0x38] sm:$0xff]
      %v1751 = vld [vmem:[#allocation4 + $0x40] sm:$0xff]
      %v1752 = vld [vmem:[#allocation4 + $0x48] sm:$0xff]
      %v1753 = vld [vmem:[#allocation4 + $0x50] sm:$0xff]
      %v1754 = vld [vmem:[#allocation4 + $0x58] sm:$0xff]
      %v1755 = vld [vmem:[#allocation4 + $0x60] sm:$0xff]
      %v1756 = vld [vmem:[#allocation4 + $0x68] sm:$0xff]
      %v1757 = vld [vmem:[#allocation4 + $0x70] sm:$0xff]
      %v1758 = vld [vmem:[#allocation4 + $0x78] sm:$0xff]
      %v1759 = vld [vmem:[#allocation4 + $0x80] sm:$0xff]
      %v1760 = vld [vmem:[#allocation4 + $0x88] sm:$0xff]
      %v1761 = vld [vmem:[#allocation4 + $0x90] sm:$0xff]
      %v1762 = vld [vmem:[#allocation4 + $0x98] sm:$0xff]
      %v1763 = vld [vmem:[#allocation4 + $0xa0] sm:$0xff]
      %v1764 = vld [vmem:[#allocation4 + $0xa8] sm:$0xff]
      %v1765 = vld [vmem:[#allocation4 + $0xb0] sm:$0xff]
      %v1766 = vld [vmem:[#allocation4 + $0xb8] sm:$0xff]
      %v1767 = vld [vmem:[#allocation4 + $0xc0] sm:$0xff]
      %v1768 = vld [vmem:[#allocation4 + $0xc8] sm:$0xff]
      %v1769 = vld [vmem:[#allocation4 + $0xd0] sm:$0xff]
      %v1770 = vld [vmem:[#allocation4 + $0xd8] sm:$0xff]
      %v1771 = vld [vmem:[#allocation4 + $0xe0] sm:$0xff]
      %v1772 = vld [vmem:[#allocation4 + $0xe8] sm:$0xff]
      %v1773 = vld [vmem:[#allocation4 + $0xf0] sm:$0xff]
      %v1774 = vld [vmem:[#allocation4 + $0xf8] sm:$0xff]
      %1776 = vset.pattern.permute.xlu0 0
      %1777 = vperm.xlu0 %1776, %v1103
      %v1778 = vpop.permute.xlu0 %1777
      %1781 = vset.pattern.permute.xlu0 0
      %1782 = vperm.xlu0 %1781, %v1105
      %v1783 = vpop.permute.xlu0 %1782
      %1786 = vset.pattern.permute.xlu0 0
      %1787 = vperm.xlu0 %1786, %v1107
      %v1788 = vpop.permute.xlu0 %1787
      %1791 = vset.pattern.permute.xlu0 0
      %1792 = vperm.xlu0 %1791, %v1109
      %v1793 = vpop.permute.xlu0 %1792
      %1796 = vset.pattern.permute.xlu0 0
      %1797 = vperm.xlu0 %1796, %v1111
      %v1798 = vpop.permute.xlu0 %1797
      %1801 = vset.pattern.permute.xlu0 0
      %1802 = vperm.xlu0 %1801, %v1113
      %v1803 = vpop.permute.xlu0 %1802
      %1806 = vset.pattern.permute.xlu0 0
      %1807 = vperm.xlu0 %1806, %v1115
      %v1808 = vpop.permute.xlu0 %1807
      %1811 = vset.pattern.permute.xlu0 0
      %1812 = vperm.xlu0 %1811, %v1117
      %v1813 = vpop.permute.xlu0 %1812
      %1816 = vset.pattern.permute.xlu0 0
      %1817 = vperm.xlu0 %1816, %v1119
      %v1818 = vpop.permute.xlu0 %1817
      %1821 = vset.pattern.permute.xlu0 0
      %1822 = vperm.xlu0 %1821, %v1121
      %v1823 = vpop.permute.xlu0 %1822
      %1826 = vset.pattern.permute.xlu0 0
      %1827 = vperm.xlu0 %1826, %v1123
      %v1828 = vpop.permute.xlu0 %1827
      %1831 = vset.pattern.permute.xlu0 0
      %1832 = vperm.xlu0 %1831, %v1125
      %v1833 = vpop.permute.xlu0 %1832
      %1836 = vset.pattern.permute.xlu0 0
      %1837 = vperm.xlu0 %1836, %v1127
      %v1838 = vpop.permute.xlu0 %1837
      %1841 = vset.pattern.permute.xlu0 0
      %1842 = vperm.xlu0 %1841, %v1129
      %v1843 = vpop.permute.xlu0 %1842
      %1846 = vset.pattern.permute.xlu0 0
      %1847 = vperm.xlu0 %1846, %v1131
      %v1848 = vpop.permute.xlu0 %1847
      %1851 = vset.pattern.permute.xlu0 0
      %1852 = vperm.xlu0 %1851, %v1133
      %v1853 = vpop.permute.xlu0 %1852
      %1856 = vset.pattern.permute.xlu0 0
      %1857 = vperm.xlu0 %1856, %v1135
      %v1858 = vpop.permute.xlu0 %1857
      %1861 = vset.pattern.permute.xlu0 0
      %1862 = vperm.xlu0 %1861, %v1137
      %v1863 = vpop.permute.xlu0 %1862
      %1866 = vset.pattern.permute.xlu0 0
      %1867 = vperm.xlu0 %1866, %v1139
      %v1868 = vpop.permute.xlu0 %1867
      %1871 = vset.pattern.permute.xlu0 0
      %1872 = vperm.xlu0 %1871, %v1141
      %v1873 = vpop.permute.xlu0 %1872
      %1876 = vset.pattern.permute.xlu0 0
      %1877 = vperm.xlu0 %1876, %v1143
      %v1878 = vpop.permute.xlu0 %1877
      %1881 = vset.pattern.permute.xlu0 0
      %1882 = vperm.xlu0 %1881, %v1145
      %v1883 = vpop.permute.xlu0 %1882
      %1886 = vset.pattern.permute.xlu0 0
      %1887 = vperm.xlu0 %1886, %v1147
      %v1888 = vpop.permute.xlu0 %1887
      %1891 = vset.pattern.permute.xlu0 0
      %1892 = vperm.xlu0 %1891, %v1149
      %v1893 = vpop.permute.xlu0 %1892
      %1896 = vset.pattern.permute.xlu0 0
      %1897 = vperm.xlu0 %1896, %v1151
      %v1898 = vpop.permute.xlu0 %1897
      %1901 = vset.pattern.permute.xlu0 0
      %1902 = vperm.xlu0 %1901, %v1153
      %v1903 = vpop.permute.xlu0 %1902
      %1906 = vset.pattern.permute.xlu0 0
      %1907 = vperm.xlu0 %1906, %v1155
      %v1908 = vpop.permute.xlu0 %1907
      %1911 = vset.pattern.permute.xlu0 0
      %1912 = vperm.xlu0 %1911, %v1157
      %v1913 = vpop.permute.xlu0 %1912
      %1916 = vset.pattern.permute.xlu0 0
      %1917 = vperm.xlu0 %1916, %v1159
      %v1918 = vpop.permute.xlu0 %1917
      %1921 = vset.pattern.permute.xlu0 0
      %1922 = vperm.xlu0 %1921, %v1161
      %v1923 = vpop.permute.xlu0 %1922
      %1926 = vset.pattern.permute.xlu0 0
      %1927 = vperm.xlu0 %1926, %v1163
      %v1928 = vpop.permute.xlu0 %1927
      %1931 = vset.pattern.permute.xlu0 0
      %1932 = vperm.xlu0 %1931, %v1165
      %v1933 = vpop.permute.xlu0 %1932
      %v1935 = vmul.f32 %v1778, %v1743
      %v1936 = vmul.f32 %v1783, %v1744
      %v1937 = vmul.f32 %v1788, %v1745
      %v1938 = vmul.f32 %v1793, %v1746
      %v1939 = vmul.f32 %v1798, %v1747
      %v1940 = vmul.f32 %v1803, %v1748
      %v1941 = vmul.f32 %v1808, %v1749
      %v1942 = vmul.f32 %v1813, %v1750
      %v1943 = vmul.f32 %v1818, %v1751
      %v1944 = vmul.f32 %v1823, %v1752
      %v1945 = vmul.f32 %v1828, %v1753
      %v1946 = vmul.f32 %v1833, %v1754
      %v1947 = vmul.f32 %v1838, %v1755
      %v1948 = vmul.f32 %v1843, %v1756
      %v1949 = vmul.f32 %v1848, %v1757
      %v1950 = vmul.f32 %v1853, %v1758
      %v1951 = vmul.f32 %v1858, %v1759
      %v1952 = vmul.f32 %v1863, %v1760
      %v1953 = vmul.f32 %v1868, %v1761
      %v1954 = vmul.f32 %v1873, %v1762
      %v1955 = vmul.f32 %v1878, %v1763
      %v1956 = vmul.f32 %v1883, %v1764
      %v1957 = vmul.f32 %v1888, %v1765
      %v1958 = vmul.f32 %v1893, %v1766
      %v1959 = vmul.f32 %v1898, %v1767
      %v1960 = vmul.f32 %v1903, %v1768
      %v1961 = vmul.f32 %v1908, %v1769
      %v1962 = vmul.f32 %v1913, %v1770
      %v1963 = vmul.f32 %v1918, %v1771
      %v1964 = vmul.f32 %v1923, %v1772
      %v1965 = vmul.f32 %v1928, %v1773
      %v1966 = vmul.f32 %v1933, %v1774
      %v1967 = vpack.c.bf16 %v1395, %v1391
      %v1968 = vpack.c.bf16 %v1397, %v1393
      %v1969 = vpack.c.bf16 %v1403, %v1399
      %v1970 = vpack.c.bf16 %v1405, %v1401
      %v1971 = vpack.c.bf16 %v1411, %v1407
      %v1972 = vpack.c.bf16 %v1413, %v1409
      %v1973 = vpack.c.bf16 %v1419, %v1415
      %v1974 = vpack.c.bf16 %v1421, %v1417
      %v1975 = vpack.c.bf16 %v1427, %v1423
      %v1976 = vpack.c.bf16 %v1429, %v1425
      %v1977 = vpack.c.bf16 %v1435, %v1431
      %v1978 = vpack.c.bf16 %v1437, %v1433
      %v1979 = vpack.c.bf16 %v1443, %v1439
      %v1980 = vpack.c.bf16 %v1445, %v1441
      %v1981 = vpack.c.bf16 %v1451, %v1447
      %v1982 = vpack.c.bf16 %v1453, %v1449
      %v1983 = vpack.c.bf16 %v1459, %v1455
      %v1984 = vpack.c.bf16 %v1461, %v1457
      %v1985 = vpack.c.bf16 %v1467, %v1463
      %v1986 = vpack.c.bf16 %v1469, %v1465
      %v1987 = vpack.c.bf16 %v1475, %v1471
      %v1988 = vpack.c.bf16 %v1477, %v1473
      %v1989 = vpack.c.bf16 %v1483, %v1479
      %v1990 = vpack.c.bf16 %v1485, %v1481
      %v1991 = vpack.c.bf16 %v1491, %v1487
      %v1992 = vpack.c.bf16 %v1493, %v1489
      %v1993 = vpack.c.bf16 %v1499, %v1495
      %v1994 = vpack.c.bf16 %v1501, %v1497
      %v1995 = vpack.c.bf16 %v1507, %v1503
      %v1996 = vpack.c.bf16 %v1509, %v1505
      %v1997 = vpack.c.bf16 %v1515, %v1511
      %v1998 = vpack.c.bf16 %v1517, %v1513
      %v2031 = vunpack.c.l.b16 %v508
      %v2032 = vunpack.c.l.b16 %v509
      %v2033 = vunpack.c.l.b16 %v510
      %v2034 = vunpack.c.l.b16 %v511
      %v2035 = vunpack.c.l.b16 %v512
      %v2036 = vunpack.c.l.b16 %v513
      %v2037 = vunpack.c.l.b16 %v514
      %v2038 = vunpack.c.l.b16 %v515
      %v2039 = vunpack.c.l.b16 %v516
      %v2040 = vunpack.c.l.b16 %v517
      %v2041 = vunpack.c.l.b16 %v518
      %v2042 = vunpack.c.l.b16 %v519
      %v2043 = vunpack.c.l.b16 %v520
      %v2044 = vunpack.c.l.b16 %v521
      %v2045 = vunpack.c.l.b16 %v522
      %v2046 = vunpack.c.l.b16 %v523
      %v2047 = vunpack.c.l.b16 %v524
      %v2048 = vunpack.c.l.b16 %v525
      %v2049 = vunpack.c.l.b16 %v526
      %v2050 = vunpack.c.l.b16 %v527
      %v2051 = vunpack.c.l.b16 %v528
      %v2052 = vunpack.c.l.b16 %v529
      %v2053 = vunpack.c.l.b16 %v530
      %v2054 = vunpack.c.l.b16 %v531
      %v2055 = vunpack.c.l.b16 %v532
      %v2056 = vunpack.c.l.b16 %v533
      %v2057 = vunpack.c.l.b16 %v534
      %v2058 = vunpack.c.l.b16 %v535
      %v2059 = vunpack.c.l.b16 %v536
      %v2060 = vunpack.c.l.b16 %v537
      %v2061 = vunpack.c.l.b16 %v538
      %v2062 = vunpack.c.l.b16 %v539
      %v2063 = vpack.c.b16 %v2032, %v2031
      %v2064 = vpack.c.b16 %v2034, %v2033
      %v2065 = vpack.c.b16 %v2036, %v2035
      %v2066 = vpack.c.b16 %v2038, %v2037
      %v2067 = vpack.c.b16 %v2040, %v2039
      %v2068 = vpack.c.b16 %v2042, %v2041
      %v2069 = vpack.c.b16 %v2044, %v2043
      %v2070 = vpack.c.b16 %v2046, %v2045
      %v2071 = vpack.c.b16 %v2048, %v2047
      %v2072 = vpack.c.b16 %v2050, %v2049
      %v2073 = vpack.c.b16 %v2052, %v2051
      %v2074 = vpack.c.b16 %v2054, %v2053
      %v2075 = vpack.c.b16 %v2056, %v2055
      %v2076 = vpack.c.b16 %v2058, %v2057
      %v2077 = vpack.c.b16 %v2060, %v2059
      %v2078 = vpack.c.b16 %v2062, %v2061
      %2095 = vmatpush.bf16.msra.mxu0 %v2070
      %2096 = vmatpush.bf16.msra.mxu0 %v2069
      %2097 = vmatpush.bf16.msra.mxu0 %v2068
      %2098 = vmatpush.bf16.msra.mxu0 %v2067
      %2099 = vmatpush.bf16.msra.mxu0 %v2066
      %2100 = vmatpush.bf16.msra.mxu0 %v2065
      %2101 = vmatpush.bf16.msra.mxu0 %v2064
      %2102 = vmatpush.bf16.msra.mxu0 %v2063
      %2103 = vmatmul.bf16.gmra.mxu0 %v1967
      %v2104 = vpop.f32.mrf.mxu0
      %v2105 = vadd.f32 0.0, %v2104
      %v2106 = vpop.f32.mrf.mxu0
      %v2107 = vadd.f32 0.0, %v2106
      %2108 = vmatmul.bf16.gmra.mxu0 %v1969
      %v2109 = vpop.f32.mrf.mxu0
      %v2110 = vadd.f32 0.0, %v2109
      %v2111 = vpop.f32.mrf.mxu0
      %v2112 = vadd.f32 0.0, %v2111
      %2113 = vmatmul.bf16.gmra.mxu0 %v1971
      %v2114 = vpop.f32.mrf.mxu0
      %v2115 = vadd.f32 0.0, %v2114
      %v2116 = vpop.f32.mrf.mxu0
      %v2117 = vadd.f32 0.0, %v2116
      %2118 = vmatmul.bf16.gmra.mxu0 %v1973
      %v2119 = vpop.f32.mrf.mxu0
      %v2120 = vadd.f32 0.0, %v2119
      %v2121 = vpop.f32.mrf.mxu0
      %v2122 = vadd.f32 0.0, %v2121
      %2123 = vmatmul.bf16.gmra.mxu0 %v1975
      %v2124 = vpop.f32.mrf.mxu0
      %v2125 = vadd.f32 0.0, %v2124
      %v2126 = vpop.f32.mrf.mxu0
      %v2127 = vadd.f32 0.0, %v2126
      %2128 = vmatmul.bf16.gmra.mxu0 %v1977
      %v2129 = vpop.f32.mrf.mxu0
      %v2130 = vadd.f32 0.0, %v2129
      %v2131 = vpop.f32.mrf.mxu0
      %v2132 = vadd.f32 0.0, %v2131
      %2133 = vmatmul.bf16.gmra.mxu0 %v1979
      %v2134 = vpop.f32.mrf.mxu0
      %v2135 = vadd.f32 0.0, %v2134
      %v2136 = vpop.f32.mrf.mxu0
      %v2137 = vadd.f32 0.0, %v2136
      %2138 = vmatmul.bf16.gmra.mxu0 %v1981
      %v2139 = vpop.f32.mrf.mxu0
      %v2140 = vadd.f32 0.0, %v2139
      %v2141 = vpop.f32.mrf.mxu0
      %v2142 = vadd.f32 0.0, %v2141
      %2143 = vmatmul.bf16.gmra.mxu0 %v1983
      %v2144 = vpop.f32.mrf.mxu0
      %v2145 = vadd.f32 0.0, %v2144
      %v2146 = vpop.f32.mrf.mxu0
      %v2147 = vadd.f32 0.0, %v2146
      %2148 = vmatmul.bf16.gmra.mxu0 %v1985
      %v2149 = vpop.f32.mrf.mxu0
      %v2150 = vadd.f32 0.0, %v2149
      %v2151 = vpop.f32.mrf.mxu0
      %v2152 = vadd.f32 0.0, %v2151
      %2153 = vmatmul.bf16.gmra.mxu0 %v1987
      %v2154 = vpop.f32.mrf.mxu0
      %v2155 = vadd.f32 0.0, %v2154
      %v2156 = vpop.f32.mrf.mxu0
      %v2157 = vadd.f32 0.0, %v2156
      %2158 = vmatmul.bf16.gmra.mxu0 %v1989
      %v2159 = vpop.f32.mrf.mxu0
      %v2160 = vadd.f32 0.0, %v2159
      %v2161 = vpop.f32.mrf.mxu0
      %v2162 = vadd.f32 0.0, %v2161
      %2163 = vmatmul.bf16.gmra.mxu0 %v1991
      %v2164 = vpop.f32.mrf.mxu0
      %v2165 = vadd.f32 0.0, %v2164
      %v2166 = vpop.f32.mrf.mxu0
      %v2167 = vadd.f32 0.0, %v2166
      %2168 = vmatmul.bf16.gmra.mxu0 %v1993
      %v2169 = vpop.f32.mrf.mxu0
      %v2170 = vadd.f32 0.0, %v2169
      %v2171 = vpop.f32.mrf.mxu0
      %v2172 = vadd.f32 0.0, %v2171
      %2173 = vmatmul.bf16.gmra.mxu0 %v1995
      %v2174 = vpop.f32.mrf.mxu0
      %v2175 = vadd.f32 0.0, %v2174
      %v2176 = vpop.f32.mrf.mxu0
      %v2177 = vadd.f32 0.0, %v2176
      %2178 = vmatmul.bf16.gmra.mxu0 %v1997
      %v2179 = vpop.f32.mrf.mxu0
      %v2180 = vadd.f32 0.0, %v2179
      %v2181 = vpop.f32.mrf.mxu0
      %v2182 = vadd.f32 0.0, %v2181
      %2183 = vdwg.mxu0
      %2184 = vmatpush.bf16.msra.mxu0 %v2078
      %2185 = vmatpush.bf16.msra.mxu0 %v2077
      %2186 = vmatpush.bf16.msra.mxu0 %v2076
      %2187 = vmatpush.bf16.msra.mxu0 %v2075
      %2188 = vmatpush.bf16.msra.mxu0 %v2074
      %2189 = vmatpush.bf16.msra.mxu0 %v2073
      %2190 = vmatpush.bf16.msra.mxu0 %v2072
      %2191 = vmatpush.bf16.msra.mxu0 %v2071
      %2192 = vmatmul.bf16.gmra.mxu0 %v1968
      %v2193 = vpop.f32.mrf.mxu0
      %v2194 = vadd.f32 %v2105, %v2193
      %v2195 = vpop.f32.mrf.mxu0
      %v2196 = vadd.f32 %v2107, %v2195
      %2197 = vmatmul.bf16.gmra.mxu0 %v1970
      %v2198 = vpop.f32.mrf.mxu0
      %v2199 = vadd.f32 %v2110, %v2198
      %v2200 = vpop.f32.mrf.mxu0
      %v2201 = vadd.f32 %v2112, %v2200
      %2202 = vmatmul.bf16.gmra.mxu0 %v1972
      %v2203 = vpop.f32.mrf.mxu0
      %v2204 = vadd.f32 %v2115, %v2203
      %v2205 = vpop.f32.mrf.mxu0
      %v2206 = vadd.f32 %v2117, %v2205
      %2207 = vmatmul.bf16.gmra.mxu0 %v1974
      %v2208 = vpop.f32.mrf.mxu0
      %v2209 = vadd.f32 %v2120, %v2208
      %v2210 = vpop.f32.mrf.mxu0
      %v2211 = vadd.f32 %v2122, %v2210
      %2212 = vmatmul.bf16.gmra.mxu0 %v1976
      %v2213 = vpop.f32.mrf.mxu0
      %v2214 = vadd.f32 %v2125, %v2213
      %v2215 = vpop.f32.mrf.mxu0
      %v2216 = vadd.f32 %v2127, %v2215
      %2217 = vmatmul.bf16.gmra.mxu0 %v1978
      %v2218 = vpop.f32.mrf.mxu0
      %v2219 = vadd.f32 %v2130, %v2218
      %v2220 = vpop.f32.mrf.mxu0
      %v2221 = vadd.f32 %v2132, %v2220
      %2222 = vmatmul.bf16.gmra.mxu0 %v1980
      %v2223 = vpop.f32.mrf.mxu0
      %v2224 = vadd.f32 %v2135, %v2223
      %v2225 = vpop.f32.mrf.mxu0
      %v2226 = vadd.f32 %v2137, %v2225
      %2227 = vmatmul.bf16.gmra.mxu0 %v1982
      %v2228 = vpop.f32.mrf.mxu0
      %v2229 = vadd.f32 %v2140, %v2228
      %v2230 = vpop.f32.mrf.mxu0
      %v2231 = vadd.f32 %v2142, %v2230
      %2232 = vmatmul.bf16.gmra.mxu0 %v1984
      %v2233 = vpop.f32.mrf.mxu0
      %v2234 = vadd.f32 %v2145, %v2233
      %v2235 = vpop.f32.mrf.mxu0
      %v2236 = vadd.f32 %v2147, %v2235
      %2237 = vmatmul.bf16.gmra.mxu0 %v1986
      %v2238 = vpop.f32.mrf.mxu0
      %v2239 = vadd.f32 %v2150, %v2238
      %v2240 = vpop.f32.mrf.mxu0
      %v2241 = vadd.f32 %v2152, %v2240
      %2242 = vmatmul.bf16.gmra.mxu0 %v1988
      %v2243 = vpop.f32.mrf.mxu0
      %v2244 = vadd.f32 %v2155, %v2243
      %v2245 = vpop.f32.mrf.mxu0
      %v2246 = vadd.f32 %v2157, %v2245
      %2247 = vmatmul.bf16.gmra.mxu0 %v1990
      %v2248 = vpop.f32.mrf.mxu0
      %v2249 = vadd.f32 %v2160, %v2248
      %v2250 = vpop.f32.mrf.mxu0
      %v2251 = vadd.f32 %v2162, %v2250
      %2252 = vmatmul.bf16.gmra.mxu0 %v1992
      %v2253 = vpop.f32.mrf.mxu0
      %v2254 = vadd.f32 %v2165, %v2253
      %v2255 = vpop.f32.mrf.mxu0
      %v2256 = vadd.f32 %v2167, %v2255
      %2257 = vmatmul.bf16.gmra.mxu0 %v1994
      %v2258 = vpop.f32.mrf.mxu0
      %v2259 = vadd.f32 %v2170, %v2258
      %v2260 = vpop.f32.mrf.mxu0
      %v2261 = vadd.f32 %v2172, %v2260
      %2262 = vmatmul.bf16.gmra.mxu0 %v1996
      %v2263 = vpop.f32.mrf.mxu0
      %v2264 = vadd.f32 %v2175, %v2263
      %v2265 = vpop.f32.mrf.mxu0
      %v2266 = vadd.f32 %v2177, %v2265
      %2267 = vmatmul.bf16.gmra.mxu0 %v1998
      %v2268 = vpop.f32.mrf.mxu0
      %v2269 = vadd.f32 %v2180, %v2268
      %v2270 = vpop.f32.mrf.mxu0
      %v2271 = vadd.f32 %v2182, %v2270
      %2272 = vdwg.mxu0
      %v2273 = vadd.f32 %v1935, %v2194
      %v2274 = vadd.f32 %v1936, %v2196
      %v2275 = vadd.f32 %v1937, %v2199
      %v2276 = vadd.f32 %v1938, %v2201
      %v2277 = vadd.f32 %v1939, %v2204
      %v2278 = vadd.f32 %v1940, %v2206
      %v2279 = vadd.f32 %v1941, %v2209
      %v2280 = vadd.f32 %v1942, %v2211
      %v2281 = vadd.f32 %v1943, %v2214
      %v2282 = vadd.f32 %v1944, %v2216
      %v2283 = vadd.f32 %v1945, %v2219
      %v2284 = vadd.f32 %v1946, %v2221
      %v2285 = vadd.f32 %v1947, %v2224
      %v2286 = vadd.f32 %v1948, %v2226
      %v2287 = vadd.f32 %v1949, %v2229
      %v2288 = vadd.f32 %v1950, %v2231
      %v2289 = vadd.f32 %v1951, %v2234
      %v2290 = vadd.f32 %v1952, %v2236
      %v2291 = vadd.f32 %v1953, %v2239
      %v2292 = vadd.f32 %v1954, %v2241
      %v2293 = vadd.f32 %v1955, %v2244
      %v2294 = vadd.f32 %v1956, %v2246
      %v2295 = vadd.f32 %v1957, %v2249
      %v2296 = vadd.f32 %v1958, %v2251
      %v2297 = vadd.f32 %v1959, %v2254
      %v2298 = vadd.f32 %v1960, %v2256
      %v2299 = vadd.f32 %v1961, %v2259
      %v2300 = vadd.f32 %v1962, %v2261
      %v2301 = vadd.f32 %v1963, %v2264
      %v2302 = vadd.f32 %v1964, %v2266
      %v2303 = vadd.f32 %v1965, %v2269
      %v2304 = vadd.f32 %v1966, %v2271
      %2305 = vst [vmem:[#allocation4] sm:$0xff] %v2273
      %2306 = vst [vmem:[#allocation4 + $0x8] sm:$0xff] %v2274
      %2307 = vst [vmem:[#allocation4 + $0x10] sm:$0xff] %v2275
      %2308 = vst [vmem:[#allocation4 + $0x18] sm:$0xff] %v2276
      %2309 = vst [vmem:[#allocation4 + $0x20] sm:$0xff] %v2277
      %2310 = vst [vmem:[#allocation4 + $0x28] sm:$0xff] %v2278
      %2311 = vst [vmem:[#allocation4 + $0x30] sm:$0xff] %v2279
      %2312 = vst [vmem:[#allocation4 + $0x38] sm:$0xff] %v2280
      %2313 = vst [vmem:[#allocation4 + $0x40] sm:$0xff] %v2281
      %2314 = vst [vmem:[#allocation4 + $0x48] sm:$0xff] %v2282
      %2315 = vst [vmem:[#allocation4 + $0x50] sm:$0xff] %v2283
      %2316 = vst [vmem:[#allocation4 + $0x58] sm:$0xff] %v2284
      %2317 = vst [vmem:[#allocation4 + $0x60] sm:$0xff] %v2285
      %2318 = vst [vmem:[#allocation4 + $0x68] sm:$0xff] %v2286
      %2319 = vst [vmem:[#allocation4 + $0x70] sm:$0xff] %v2287
      %2320 = vst [vmem:[#allocation4 + $0x78] sm:$0xff] %v2288
      %2321 = vst [vmem:[#allocation4 + $0x80] sm:$0xff] %v2289
      %2322 = vst [vmem:[#allocation4 + $0x88] sm:$0xff] %v2290
      %2323 = vst [vmem:[#allocation4 + $0x90] sm:$0xff] %v2291
      %2324 = vst [vmem:[#allocation4 + $0x98] sm:$0xff] %v2292
      %2325 = vst [vmem:[#allocation4 + $0xa0] sm:$0xff] %v2293
      %2326 = vst [vmem:[#allocation4 + $0xa8] sm:$0xff] %v2294
      %2327 = vst [vmem:[#allocation4 + $0xb0] sm:$0xff] %v2295
      %2328 = vst [vmem:[#allocation4 + $0xb8] sm:$0xff] %v2296
      %2329 = vst [vmem:[#allocation4 + $0xc0] sm:$0xff] %v2297
      %2330 = vst [vmem:[#allocation4 + $0xc8] sm:$0xff] %v2298
      %2331 = vst [vmem:[#allocation4 + $0xd0] sm:$0xff] %v2299
      %2332 = vst [vmem:[#allocation4 + $0xd8] sm:$0xff] %v2300
      %2333 = vst [vmem:[#allocation4 + $0xe0] sm:$0xff] %v2301
      %2334 = vst [vmem:[#allocation4 + $0xe8] sm:$0xff] %v2302
      %2335 = vst [vmem:[#allocation4 + $0xf0] sm:$0xff] %v2303
      %2336 = vst [vmem:[#allocation4 + $0xf8] sm:$0xff] %v2304
      %2337 = vst.msk [vmem:[#allocation2] sm:$0xff] %vm1710, %v1038
      %2338 = vst.msk [vmem:[#allocation2 + $0x8] sm:$0xff] %vm1710, %v1039
      %2339 = vst.msk [vmem:[#allocation2 + $0x10] sm:$0xff] %vm1710, %v1040
      %2340 = vst.msk [vmem:[#allocation2 + $0x18] sm:$0xff] %vm1710, %v1041
      %2341 = vst.msk [vmem:[#allocation2 + $0x20] sm:$0xff] %vm1710, %v1042
      %2342 = vst.msk [vmem:[#allocation2 + $0x28] sm:$0xff] %vm1710, %v1043
      %2343 = vst.msk [vmem:[#allocation2 + $0x30] sm:$0xff] %vm1710, %v1044
      %2344 = vst.msk [vmem:[#allocation2 + $0x38] sm:$0xff] %vm1710, %v1045
      %2345 = vst.msk [vmem:[#allocation2 + $0x40] sm:$0xff] %vm1710, %v1046
      %2346 = vst.msk [vmem:[#allocation2 + $0x48] sm:$0xff] %vm1710, %v1047
      %2347 = vst.msk [vmem:[#allocation2 + $0x50] sm:$0xff] %vm1710, %v1048
      %2348 = vst.msk [vmem:[#allocation2 + $0x58] sm:$0xff] %vm1710, %v1049
      %2349 = vst.msk [vmem:[#allocation2 + $0x60] sm:$0xff] %vm1710, %v1050
      %2350 = vst.msk [vmem:[#allocation2 + $0x68] sm:$0xff] %vm1710, %v1051
      %2351 = vst.msk [vmem:[#allocation2 + $0x70] sm:$0xff] %vm1710, %v1052
      %2352 = vst.msk [vmem:[#allocation2 + $0x78] sm:$0xff] %vm1710, %v1053
      %2353 = vst.msk [vmem:[#allocation2 + $0x80] sm:$0xff] %vm1710, %v1054
      %2354 = vst.msk [vmem:[#allocation2 + $0x88] sm:$0xff] %vm1710, %v1055
      %2355 = vst.msk [vmem:[#allocation2 + $0x90] sm:$0xff] %vm1710, %v1056
      %2356 = vst.msk [vmem:[#allocation2 + $0x98] sm:$0xff] %vm1710, %v1057
      %2357 = vst.msk [vmem:[#allocation2 + $0xa0] sm:$0xff] %vm1710, %v1058
      %2358 = vst.msk [vmem:[#allocation2 + $0xa8] sm:$0xff] %vm1710, %v1059
      %2359 = vst.msk [vmem:[#allocation2 + $0xb0] sm:$0xff] %vm1710, %v1060
      %2360 = vst.msk [vmem:[#allocation2 + $0xb8] sm:$0xff] %vm1710, %v1061
      %2361 = vst.msk [vmem:[#allocation2 + $0xc0] sm:$0xff] %vm1710, %v1062
      %2362 = vst.msk [vmem:[#allocation2 + $0xc8] sm:$0xff] %vm1710, %v1063
      %2363 = vst.msk [vmem:[#allocation2 + $0xd0] sm:$0xff] %vm1710, %v1064
      %2364 = vst.msk [vmem:[#allocation2 + $0xd8] sm:$0xff] %vm1710, %v1065
      %2365 = vst.msk [vmem:[#allocation2 + $0xe0] sm:$0xff] %vm1710, %v1066
      %2366 = vst.msk [vmem:[#allocation2 + $0xe8] sm:$0xff] %vm1710, %v1067
      %2367 = vst.msk [vmem:[#allocation2 + $0xf0] sm:$0xff] %vm1710, %v1068
      %2368 = vst.msk [vmem:[#allocation2 + $0xf8] sm:$0xff] %vm1710, %v1069
      %p2369 = scmp.eq.s32.totalorder %s23, 1
      // Predicated region
      $region45: #{cross_attention_3d.3} parent=39 // pred_check
        %p2370 = pneg %p2369
      $region46: #{cross_attention_3d.3} parent=39 // pred_check_branch
        %2372 = sbr.rel (%p2370) target = $region48
      $region47: #{cross_attention_3d.3} parent=39 // pred_region
        %v2373 = vld [vmem:[#allocation3] sm:$0xff]
        %v2374 = vld [vmem:[#allocation3 + $0x8] sm:$0xff]
        %v2375 = vld [vmem:[#allocation3 + $0x10] sm:$0xff]
        %v2376 = vld [vmem:[#allocation3 + $0x18] sm:$0xff]
        %v2377 = vld [vmem:[#allocation3 + $0x20] sm:$0xff]
        %v2378 = vld [vmem:[#allocation3 + $0x28] sm:$0xff]
        %v2379 = vld [vmem:[#allocation3 + $0x30] sm:$0xff]
        %v2380 = vld [vmem:[#allocation3 + $0x38] sm:$0xff]
        %v2381 = vld [vmem:[#allocation3 + $0x40] sm:$0xff]
        %v2382 = vld [vmem:[#allocation3 + $0x48] sm:$0xff]
        %v2383 = vld [vmem:[#allocation3 + $0x50] sm:$0xff]
        %v2384 = vld [vmem:[#allocation3 + $0x58] sm:$0xff]
        %v2385 = vld [vmem:[#allocation3 + $0x60] sm:$0xff]
        %v2386 = vld [vmem:[#allocation3 + $0x68] sm:$0xff]
        %v2387 = vld [vmem:[#allocation3 + $0x70] sm:$0xff]
        %v2388 = vld [vmem:[#allocation3 + $0x78] sm:$0xff]
        %v2389 = vld [vmem:[#allocation3 + $0x80] sm:$0xff]
        %v2390 = vld [vmem:[#allocation3 + $0x88] sm:$0xff]
        %v2391 = vld [vmem:[#allocation3 + $0x90] sm:$0xff]
        %v2392 = vld [vmem:[#allocation3 + $0x98] sm:$0xff]
        %v2393 = vld [vmem:[#allocation3 + $0xa0] sm:$0xff]
        %v2394 = vld [vmem:[#allocation3 + $0xa8] sm:$0xff]
        %v2395 = vld [vmem:[#allocation3 + $0xb0] sm:$0xff]
        %v2396 = vld [vmem:[#allocation3 + $0xb8] sm:$0xff]
        %v2397 = vld [vmem:[#allocation3 + $0xc0] sm:$0xff]
        %v2398 = vld [vmem:[#allocation3 + $0xc8] sm:$0xff]
        %v2399 = vld [vmem:[#allocation3 + $0xd0] sm:$0xff]
        %v2400 = vld [vmem:[#allocation3 + $0xd8] sm:$0xff]
        %v2401 = vld [vmem:[#allocation3 + $0xe0] sm:$0xff]
        %v2402 = vld [vmem:[#allocation3 + $0xe8] sm:$0xff]
        %v2403 = vld [vmem:[#allocation3 + $0xf0] sm:$0xff]
        %v2404 = vld [vmem:[#allocation3 + $0xf8] sm:$0xff]
        %v2405 = vrcp.pop %v2373
        %v2406 = vrcp.pop %v2374
        %v2407 = vrcp.pop %v2375
        %v2408 = vrcp.pop %v2376
        %v2409 = vrcp.pop %v2377
        %v2410 = vrcp.pop %v2378
        %v2411 = vrcp.pop %v2379
        %v2412 = vrcp.pop %v2380
        %v2413 = vrcp.pop %v2381
        %v2414 = vrcp.pop %v2382
        %v2415 = vrcp.pop %v2383
        %v2416 = vrcp.pop %v2384
        %v2417 = vrcp.pop %v2385
        %v2418 = vrcp.pop %v2386
        %v2419 = vrcp.pop %v2387
        %v2420 = vrcp.pop %v2388
        %v2421 = vrcp.pop %v2389
        %v2422 = vrcp.pop %v2390
        %v2423 = vrcp.pop %v2391
        %v2424 = vrcp.pop %v2392
        %v2425 = vrcp.pop %v2393
        %v2426 = vrcp.pop %v2394
        %v2427 = vrcp.pop %v2395
        %v2428 = vrcp.pop %v2396
        %v2429 = vrcp.pop %v2397
        %v2430 = vrcp.pop %v2398
        %v2431 = vrcp.pop %v2399
        %v2432 = vrcp.pop %v2400
        %v2433 = vrcp.pop %v2401
        %v2434 = vrcp.pop %v2402
        %v2435 = vrcp.pop %v2403
        %v2436 = vrcp.pop %v2404
        %v2437 = vld [vmem:[#allocation4] sm:$0xff]
        %v2438 = vld [vmem:[#allocation4 + $0x8] sm:$0xff]
        %v2439 = vld [vmem:[#allocation4 + $0x10] sm:$0xff]
        %v2440 = vld [vmem:[#allocation4 + $0x18] sm:$0xff]
        %v2441 = vld [vmem:[#allocation4 + $0x20] sm:$0xff]
        %v2442 = vld [vmem:[#allocation4 + $0x28] sm:$0xff]
        %v2443 = vld [vmem:[#allocation4 + $0x30] sm:$0xff]
        %v2444 = vld [vmem:[#allocation4 + $0x38] sm:$0xff]
        %v2445 = vld [vmem:[#allocation4 + $0x40] sm:$0xff]
        %v2446 = vld [vmem:[#allocation4 + $0x48] sm:$0xff]
        %v2447 = vld [vmem:[#allocation4 + $0x50] sm:$0xff]
        %v2448 = vld [vmem:[#allocation4 + $0x58] sm:$0xff]
        %v2449 = vld [vmem:[#allocation4 + $0x60] sm:$0xff]
        %v2450 = vld [vmem:[#allocation4 + $0x68] sm:$0xff]
        %v2451 = vld [vmem:[#allocation4 + $0x70] sm:$0xff]
        %v2452 = vld [vmem:[#allocation4 + $0x78] sm:$0xff]
        %v2453 = vld [vmem:[#allocation4 + $0x80] sm:$0xff]
        %v2454 = vld [vmem:[#allocation4 + $0x88] sm:$0xff]
        %v2455 = vld [vmem:[#allocation4 + $0x90] sm:$0xff]
        %v2456 = vld [vmem:[#allocation4 + $0x98] sm:$0xff]
        %v2457 = vld [vmem:[#allocation4 + $0xa0] sm:$0xff]
        %v2458 = vld [vmem:[#allocation4 + $0xa8] sm:$0xff]
        %v2459 = vld [vmem:[#allocation4 + $0xb0] sm:$0xff]
        %v2460 = vld [vmem:[#allocation4 + $0xb8] sm:$0xff]
        %v2461 = vld [vmem:[#allocation4 + $0xc0] sm:$0xff]
        %v2462 = vld [vmem:[#allocation4 + $0xc8] sm:$0xff]
        %v2463 = vld [vmem:[#allocation4 + $0xd0] sm:$0xff]
        %v2464 = vld [vmem:[#allocation4 + $0xd8] sm:$0xff]
        %v2465 = vld [vmem:[#allocation4 + $0xe0] sm:$0xff]
        %v2466 = vld [vmem:[#allocation4 + $0xe8] sm:$0xff]
        %v2467 = vld [vmem:[#allocation4 + $0xf0] sm:$0xff]
        %v2468 = vld [vmem:[#allocation4 + $0xf8] sm:$0xff]
        %2470 = vset.pattern.permute.xlu0 0
        %2471 = vperm.xlu0 %2470, %v2405
        %v2472 = vpop.permute.xlu0 %2471
        %2475 = vset.pattern.permute.xlu0 0
        %2476 = vperm.xlu0 %2475, %v2406
        %v2477 = vpop.permute.xlu0 %2476
        %2480 = vset.pattern.permute.xlu0 0
        %2481 = vperm.xlu0 %2480, %v2407
        %v2482 = vpop.permute.xlu0 %2481
        %2485 = vset.pattern.permute.xlu0 0
        %2486 = vperm.xlu0 %2485, %v2408
        %v2487 = vpop.permute.xlu0 %2486
        %2490 = vset.pattern.permute.xlu0 0
        %2491 = vperm.xlu0 %2490, %v2409
        %v2492 = vpop.permute.xlu0 %2491
        %2495 = vset.pattern.permute.xlu0 0
        %2496 = vperm.xlu0 %2495, %v2410
        %v2497 = vpop.permute.xlu0 %2496
        %2500 = vset.pattern.permute.xlu0 0
        %2501 = vperm.xlu0 %2500, %v2411
        %v2502 = vpop.permute.xlu0 %2501
        %2505 = vset.pattern.permute.xlu0 0
        %2506 = vperm.xlu0 %2505, %v2412
        %v2507 = vpop.permute.xlu0 %2506
        %2510 = vset.pattern.permute.xlu0 0
        %2511 = vperm.xlu0 %2510, %v2413
        %v2512 = vpop.permute.xlu0 %2511
        %2515 = vset.pattern.permute.xlu0 0
        %2516 = vperm.xlu0 %2515, %v2414
        %v2517 = vpop.permute.xlu0 %2516
        %2520 = vset.pattern.permute.xlu0 0
        %2521 = vperm.xlu0 %2520, %v2415
        %v2522 = vpop.permute.xlu0 %2521
        %2525 = vset.pattern.permute.xlu0 0
        %2526 = vperm.xlu0 %2525, %v2416
        %v2527 = vpop.permute.xlu0 %2526
        %2530 = vset.pattern.permute.xlu0 0
        %2531 = vperm.xlu0 %2530, %v2417
        %v2532 = vpop.permute.xlu0 %2531
        %2535 = vset.pattern.permute.xlu0 0
        %2536 = vperm.xlu0 %2535, %v2418
        %v2537 = vpop.permute.xlu0 %2536
        %2540 = vset.pattern.permute.xlu0 0
        %2541 = vperm.xlu0 %2540, %v2419
        %v2542 = vpop.permute.xlu0 %2541
        %2545 = vset.pattern.permute.xlu0 0
        %2546 = vperm.xlu0 %2545, %v2420
        %v2547 = vpop.permute.xlu0 %2546
        %2550 = vset.pattern.permute.xlu0 0
        %2551 = vperm.xlu0 %2550, %v2421
        %v2552 = vpop.permute.xlu0 %2551
        %2555 = vset.pattern.permute.xlu0 0
        %2556 = vperm.xlu0 %2555, %v2422
        %v2557 = vpop.permute.xlu0 %2556
        %2560 = vset.pattern.permute.xlu0 0
        %2561 = vperm.xlu0 %2560, %v2423
        %v2562 = vpop.permute.xlu0 %2561
        %2565 = vset.pattern.permute.xlu0 0
        %2566 = vperm.xlu0 %2565, %v2424
        %v2567 = vpop.permute.xlu0 %2566
        %2570 = vset.pattern.permute.xlu0 0
        %2571 = vperm.xlu0 %2570, %v2425
        %v2572 = vpop.permute.xlu0 %2571
        %2575 = vset.pattern.permute.xlu0 0
        %2576 = vperm.xlu0 %2575, %v2426
        %v2577 = vpop.permute.xlu0 %2576
        %2580 = vset.pattern.permute.xlu0 0
        %2581 = vperm.xlu0 %2580, %v2427
        %v2582 = vpop.permute.xlu0 %2581
        %2585 = vset.pattern.permute.xlu0 0
        %2586 = vperm.xlu0 %2585, %v2428
        %v2587 = vpop.permute.xlu0 %2586
        %2590 = vset.pattern.permute.xlu0 0
        %2591 = vperm.xlu0 %2590, %v2429
        %v2592 = vpop.permute.xlu0 %2591
        %2595 = vset.pattern.permute.xlu0 0
        %2596 = vperm.xlu0 %2595, %v2430
        %v2597 = vpop.permute.xlu0 %2596
        %2600 = vset.pattern.permute.xlu0 0
        %2601 = vperm.xlu0 %2600, %v2431
        %v2602 = vpop.permute.xlu0 %2601
        %2605 = vset.pattern.permute.xlu0 0
        %2606 = vperm.xlu0 %2605, %v2432
        %v2607 = vpop.permute.xlu0 %2606
        %2610 = vset.pattern.permute.xlu0 0
        %2611 = vperm.xlu0 %2610, %v2433
        %v2612 = vpop.permute.xlu0 %2611
        %2615 = vset.pattern.permute.xlu0 0
        %2616 = vperm.xlu0 %2615, %v2434
        %v2617 = vpop.permute.xlu0 %2616
        %2620 = vset.pattern.permute.xlu0 0
        %2621 = vperm.xlu0 %2620, %v2435
        %v2622 = vpop.permute.xlu0 %2621
        %2625 = vset.pattern.permute.xlu0 0
        %2626 = vperm.xlu0 %2625, %v2436
        %v2627 = vpop.permute.xlu0 %2626
        %v2629 = vmul.f32 %v2437, %v2472
        %v2630 = vmul.f32 %v2438, %v2477
        %v2631 = vmul.f32 %v2439, %v2482
        %v2632 = vmul.f32 %v2440, %v2487
        %v2633 = vmul.f32 %v2441, %v2492
        %v2634 = vmul.f32 %v2442, %v2497
        %v2635 = vmul.f32 %v2443, %v2502
        %v2636 = vmul.f32 %v2444, %v2507
        %v2637 = vmul.f32 %v2445, %v2512
        %v2638 = vmul.f32 %v2446, %v2517
        %v2639 = vmul.f32 %v2447, %v2522
        %v2640 = vmul.f32 %v2448, %v2527
        %v2641 = vmul.f32 %v2449, %v2532
        %v2642 = vmul.f32 %v2450, %v2537
        %v2643 = vmul.f32 %v2451, %v2542
        %v2644 = vmul.f32 %v2452, %v2547
        %v2645 = vmul.f32 %v2453, %v2552
        %v2646 = vmul.f32 %v2454, %v2557
        %v2647 = vmul.f32 %v2455, %v2562
        %v2648 = vmul.f32 %v2456, %v2567
        %v2649 = vmul.f32 %v2457, %v2572
        %v2650 = vmul.f32 %v2458, %v2577
        %v2651 = vmul.f32 %v2459, %v2582
        %v2652 = vmul.f32 %v2460, %v2587
        %v2653 = vmul.f32 %v2461, %v2592
        %v2654 = vmul.f32 %v2462, %v2597
        %v2655 = vmul.f32 %v2463, %v2602
        %v2656 = vmul.f32 %v2464, %v2607
        %v2657 = vmul.f32 %v2465, %v2612
        %v2658 = vmul.f32 %v2466, %v2617
        %v2659 = vmul.f32 %v2467, %v2622
        %v2660 = vmul.f32 %v2468, %v2627
        %v2661 = vld [vmem:[%s3] sm:$0xff]
        %v2662 = vld [vmem:[%s3 + $0x8] sm:$0xff]
        %v2663 = vld [vmem:[%s3 + $0x10] sm:$0xff]
        %v2664 = vld [vmem:[%s3 + $0x18] sm:$0xff]
        %v2665 = vld [vmem:[%s3 + $0x20] sm:$0xff]
        %v2666 = vld [vmem:[%s3 + $0x28] sm:$0xff]
        %v2667 = vld [vmem:[%s3 + $0x30] sm:$0xff]
        %v2668 = vld [vmem:[%s3 + $0x38] sm:$0xff]
        %v2669 = vld [vmem:[%s3 + $0x40] sm:$0xff]
        %v2670 = vld [vmem:[%s3 + $0x48] sm:$0xff]
        %v2671 = vld [vmem:[%s3 + $0x50] sm:$0xff]
        %v2672 = vld [vmem:[%s3 + $0x58] sm:$0xff]
        %v2673 = vld [vmem:[%s3 + $0x60] sm:$0xff]
        %v2674 = vld [vmem:[%s3 + $0x68] sm:$0xff]
        %v2675 = vld [vmem:[%s3 + $0x70] sm:$0xff]
        %v2676 = vld [vmem:[%s3 + $0x78] sm:$0xff]
        %v2677 = vld [vmem:[%s4] sm:$0x1]
        %v2679 = vperm.slane %v2677, 0
        %2681 = vmatpush.msra.mxu0 %v2676
        %2682 = vmatpush.msra.mxu0 %v2675
        %2683 = vmatpush.msra.mxu0 %v2674
        %2684 = vmatpush.msra.mxu0 %v2673
        %2685 = vmatpush.msra.mxu0 %v2672
        %2686 = vmatpush.msra.mxu0 %v2671
        %2687 = vmatpush.msra.mxu0 %v2670
        %2688 = vmatpush.msra.mxu0 %v2669
        %2689 = vmatpush.msra.mxu0 %v2668
        %2690 = vmatpush.msra.mxu0 %v2667
        %2691 = vmatpush.msra.mxu0 %v2666
        %2692 = vmatpush.msra.mxu0 %v2665
        %2693 = vmatpush.msra.mxu0 %v2664
        %2694 = vmatpush.msra.mxu0 %v2663
        %2695 = vmatpush.msra.mxu0 %v2662
        %2696 = vmatpush.msra.mxu0 %v2661
        %2697 = vmatmul.f32.gmra.mxu0 %v2629
        %v2698 = vpop.f32.mrf.mxu0
        %v2699 = vadd.f32 %v2679, %v2698
        %2700 = vmatmul.f32.gmra.mxu0 %v2630
        %v2701 = vpop.f32.mrf.mxu0
        %v2702 = vadd.f32 %v2679, %v2701
        %2703 = vmatmul.f32.gmra.mxu0 %v2631
        %v2704 = vpop.f32.mrf.mxu0
        %v2705 = vadd.f32 %v2679, %v2704
        %2706 = vmatmul.f32.gmra.mxu0 %v2632
        %v2707 = vpop.f32.mrf.mxu0
        %v2708 = vadd.f32 %v2679, %v2707
        %2709 = vmatmul.f32.gmra.mxu0 %v2633
        %v2710 = vpop.f32.mrf.mxu0
        %v2711 = vadd.f32 %v2679, %v2710
        %2712 = vmatmul.f32.gmra.mxu0 %v2634
        %v2713 = vpop.f32.mrf.mxu0
        %v2714 = vadd.f32 %v2679, %v2713
        %2715 = vmatmul.f32.gmra.mxu0 %v2635
        %v2716 = vpop.f32.mrf.mxu0
        %v2717 = vadd.f32 %v2679, %v2716
        %2718 = vmatmul.f32.gmra.mxu0 %v2636
        %v2719 = vpop.f32.mrf.mxu0
        %v2720 = vadd.f32 %v2679, %v2719
        %2721 = vmatmul.f32.gmra.mxu0 %v2637
        %v2722 = vpop.f32.mrf.mxu0
        %v2723 = vadd.f32 %v2679, %v2722
        %2724 = vmatmul.f32.gmra.mxu0 %v2638
        %v2725 = vpop.f32.mrf.mxu0
        %v2726 = vadd.f32 %v2679, %v2725
        %2727 = vmatmul.f32.gmra.mxu0 %v2639
        %v2728 = vpop.f32.mrf.mxu0
        %v2729 = vadd.f32 %v2679, %v2728
        %2730 = vmatmul.f32.gmra.mxu0 %v2640
        %v2731 = vpop.f32.mrf.mxu0
        %v2732 = vadd.f32 %v2679, %v2731
        %2733 = vmatmul.f32.gmra.mxu0 %v2641
        %v2734 = vpop.f32.mrf.mxu0
        %v2735 = vadd.f32 %v2679, %v2734
        %2736 = vmatmul.f32.gmra.mxu0 %v2642
        %v2737 = vpop.f32.mrf.mxu0
        %v2738 = vadd.f32 %v2679, %v2737
        %2739 = vmatmul.f32.gmra.mxu0 %v2643
        %v2740 = vpop.f32.mrf.mxu0
        %v2741 = vadd.f32 %v2679, %v2740
        %2742 = vmatmul.f32.gmra.mxu0 %v2644
        %v2743 = vpop.f32.mrf.mxu0
        %v2744 = vadd.f32 %v2679, %v2743
        %2745 = vmatmul.f32.gmra.mxu0 %v2645
        %v2746 = vpop.f32.mrf.mxu0
        %v2747 = vadd.f32 %v2679, %v2746
        %2748 = vmatmul.f32.gmra.mxu0 %v2646
        %v2749 = vpop.f32.mrf.mxu0
        %v2750 = vadd.f32 %v2679, %v2749
        %2751 = vmatmul.f32.gmra.mxu0 %v2647
        %v2752 = vpop.f32.mrf.mxu0
        %v2753 = vadd.f32 %v2679, %v2752
        %2754 = vmatmul.f32.gmra.mxu0 %v2648
        %v2755 = vpop.f32.mrf.mxu0
        %v2756 = vadd.f32 %v2679, %v2755
        %2757 = vmatmul.f32.gmra.mxu0 %v2649
        %v2758 = vpop.f32.mrf.mxu0
        %v2759 = vadd.f32 %v2679, %v2758
        %2760 = vmatmul.f32.gmra.mxu0 %v2650
        %v2761 = vpop.f32.mrf.mxu0
        %v2762 = vadd.f32 %v2679, %v2761
        %2763 = vmatmul.f32.gmra.mxu0 %v2651
        %v2764 = vpop.f32.mrf.mxu0
        %v2765 = vadd.f32 %v2679, %v2764
        %2766 = vmatmul.f32.gmra.mxu0 %v2652
        %v2767 = vpop.f32.mrf.mxu0
        %v2768 = vadd.f32 %v2679, %v2767
        %2769 = vmatmul.f32.gmra.mxu0 %v2653
        %v2770 = vpop.f32.mrf.mxu0
        %v2771 = vadd.f32 %v2679, %v2770
        %2772 = vmatmul.f32.gmra.mxu0 %v2654
        %v2773 = vpop.f32.mrf.mxu0
        %v2774 = vadd.f32 %v2679, %v2773
        %2775 = vmatmul.f32.gmra.mxu0 %v2655
        %v2776 = vpop.f32.mrf.mxu0
        %v2777 = vadd.f32 %v2679, %v2776
        %2778 = vmatmul.f32.gmra.mxu0 %v2656
        %v2779 = vpop.f32.mrf.mxu0
        %v2780 = vadd.f32 %v2679, %v2779
        %2781 = vmatmul.f32.gmra.mxu0 %v2657
        %v2782 = vpop.f32.mrf.mxu0
        %v2783 = vadd.f32 %v2679, %v2782
        %2784 = vmatmul.f32.gmra.mxu0 %v2658
        %v2785 = vpop.f32.mrf.mxu0
        %v2786 = vadd.f32 %v2679, %v2785
        %2787 = vmatmul.f32.gmra.mxu0 %v2659
        %v2788 = vpop.f32.mrf.mxu0
        %v2789 = vadd.f32 %v2679, %v2788
        %2790 = vmatmul.f32.gmra.mxu0 %v2660
        %v2791 = vpop.f32.mrf.mxu0
        %v2792 = vadd.f32 %v2679, %v2791
        %2793 = vdwg.mxu0
        %2794 = vst [vmem:[%s341] sm:$0xff] %v2699
        %2795 = vst [vmem:[%s341 + $0x8] sm:$0xff] %v2702
        %2796 = vst [vmem:[%s341 + $0x10] sm:$0xff] %v2705
        %2797 = vst [vmem:[%s341 + $0x18] sm:$0xff] %v2708
        %2798 = vst [vmem:[%s341 + $0x20] sm:$0xff] %v2711
        %2799 = vst [vmem:[%s341 + $0x28] sm:$0xff] %v2714
        %2800 = vst [vmem:[%s341 + $0x30] sm:$0xff] %v2717
        %2801 = vst [vmem:[%s341 + $0x38] sm:$0xff] %v2720
        %2802 = vst [vmem:[%s341 + $0x40] sm:$0xff] %v2723
        %2803 = vst [vmem:[%s341 + $0x48] sm:$0xff] %v2726
        %2804 = vst [vmem:[%s341 + $0x50] sm:$0xff] %v2729
        %2805 = vst [vmem:[%s341 + $0x58] sm:$0xff] %v2732
        %2806 = vst [vmem:[%s341 + $0x60] sm:$0xff] %v2735
        %2807 = vst [vmem:[%s341 + $0x68] sm:$0xff] %v2738
        %2808 = vst [vmem:[%s341 + $0x70] sm:$0xff] %v2741
        %2809 = vst [vmem:[%s341 + $0x78] sm:$0xff] %v2744
        %2810 = vst [vmem:[%s341 + $0x80] sm:$0xff] %v2747
        %2811 = vst [vmem:[%s341 + $0x88] sm:$0xff] %v2750
        %2812 = vst [vmem:[%s341 + $0x90] sm:$0xff] %v2753
        %2813 = vst [vmem:[%s341 + $0x98] sm:$0xff] %v2756
        %2814 = vst [vmem:[%s341 + $0xa0] sm:$0xff] %v2759
        %2815 = vst [vmem:[%s341 + $0xa8] sm:$0xff] %v2762
        %2816 = vst [vmem:[%s341 + $0xb0] sm:$0xff] %v2765
        %2817 = vst [vmem:[%s341 + $0xb8] sm:$0xff] %v2768
        %2818 = vst [vmem:[%s341 + $0xc0] sm:$0xff] %v2771
        %2819 = vst [vmem:[%s341 + $0xc8] sm:$0xff] %v2774
        %2820 = vst [vmem:[%s341 + $0xd0] sm:$0xff] %v2777
        %2821 = vst [vmem:[%s341 + $0xd8] sm:$0xff] %v2780
        %2822 = vst [vmem:[%s341 + $0xe0] sm:$0xff] %v2783
        %2823 = vst [vmem:[%s341 + $0xe8] sm:$0xff] %v2786
        %2824 = vst [vmem:[%s341 + $0xf0] sm:$0xff] %v2789
        %2825 = vst [vmem:[%s341 + $0xf8] sm:$0xff] %v2792
      $region48: #{cross_attention_3d.3} parent=39 // pred_fallthru
        _
      %s2826 = smul.u32 32, %s22
      %p2827 = scmp.lt.s32.totalorder %s21, 1
      %s2828 = scalar_select %p2827, %s21, 1
      %p2829 = scmp.lt.s32.totalorder %s2826, 63
      %s2830 = scalar_select %p2829, %s2826, 63
      %s2831 = smul.addr %s2828, 64
      %s2832 = sadd.s32 %s2830, %s2831
      %s2833 = smul.addr %s2832, 8
      %s2834 = scalar_lea.vmem %s5, %s2833
      // Predicated region
      $region49: #{cross_attention_3d.3} parent=39 // pred_check
        %p2835 = pneg %p181
      $region50: #{cross_attention_3d.3} parent=39 // pred_check_branch
        %2837 = sbr.rel (%p2835) target = $region52
      $region51: #{cross_attention_3d.3} parent=39 // pred_region
        %s2838 = smul.u32 32, %s22
      $region52: #{cross_attention_3d.3} parent=39 // pred_fallthru
        _
    $region40: #{cross_attention_3d.3} parent=5 // pred_fallthru
      _
    %p2839 = scmp.le.s32.totalorder 2, %s11
    // Predicated region
    $region53: #{cross_attention_3d.3} parent=5 // pred_check
      %p2840 = pneg %p2839
    $region54: #{cross_attention_3d.3} parent=5 // pred_check_branch
      %2842 = sbr.rel (%p2840) target = $region56
    $region55: #{cross_attention_3d.3} parent=5 // pred_region
      %s2843 = ssub.s32 %s11, 2
      // Predicated region
      $region57: #{cross_attention_3d.3} parent=55 // pred_check
        %p2844 = pneg %p187
      $region58: #{cross_attention_3d.3} parent=55 // pred_check_branch
        %2846 = sbr.rel (%p2844) target = $region60
      $region59: #{cross_attention_3d.3} parent=55 // pred_region
        %s2847 = smul.u32 32, %s25
        %p2848 = scmp.lt.s32.totalorder %s24, 1
        %s2849 = scalar_select %p2848, %s24, 1
        %p2850 = scmp.lt.s32.totalorder %s2847, 63
        %s2851 = scalar_select %p2850, %s2847, 63
        %s2852 = smul.addr %s2849, 64
        %s2853 = sadd.s32 %s2851, %s2852
        %s2854 = smul.addr %s2853, 8
        %s2855 = scalar_lea.vmem %s5, %s2854
      $region60: #{cross_attention_3d.3} parent=55 // pred_fallthru
        _
    $region56: #{cross_attention_3d.3} parent=5 // pred_fallthru
      _
  $region6: #{cross_attention_3d.3} parent=0 // loop_footer
    %s15 = sadd.s32 1, %s11
  $region7: #{cross_attention_3d.3} parent=0 // loop_footer_branch
    %10 = sbr.rel target = $region3
  $region8: #{cross_attention_3d.3} parent=0 // loop_exit
    _

</llo_original>
